<compile_context>
chip_gen: v6e
topology: v6e:2x2x1
jax: 0.10.0
libtpu: 0.0.40
codegen_flags: <defaults>
</compile_context>

<pallas_src>
import jax
import jax.numpy as jnp
from jax.experimental import pallas as pl
from jax.experimental.pallas import tpu as pltpu


def _make_kernel(seq_len: int, rows_per_step: int):
    """Per-grid-step kernel: gather + mean for R batch rows, static S and R."""
    S, R = seq_len, rows_per_step

    def kernel(idx_ref, table_ref, out_ref, buf_ref, sems):
        # idx_ref   : SMEM (B_pad, S) int32      (scalar prefetch)
        # table_ref : HBM  (V, D)                (memory_space=pl.ANY, manual DMA)
        # out_ref   : VMEM (R, D)                (output tile: R batch rows)
        # buf_ref   : VMEM (S*R, D) scratch      (gathered rows, s-major / r-minor)
        # sems      : DMA semaphores (S,)        (one per seq position, shared by R copies)
        g = pl.program_id(0)
        b0 = g * R

        # 1) All SMEM scalar index reads before any .wait() (keeps sst->sld forwarding).
        rows = [[idx_ref[b0 + r, s] for r in range(R)] for s in range(S)]

        # 2) Issue every gather DMA; keep the descriptors so waits don't rebuild them.
        copies = []
        for s in range(S):
            per_s = []
            for r in range(R):
                cp = pltpu.make_async_copy(
                    table_ref.at[pl.ds(rows[s][r], 1), :],
                    buf_ref.at[pl.ds(s * R + r, 1), :],
                    sems.at[s],
                )
                cp.start()
                per_s.append(cp)
            copies.append(per_s)

        # 3) Interleave waits with the reduction: accumulate position s while the
        #    DMAs for positions s+1.. are still in flight.
        acc = jnp.zeros((R, out_ref.shape[-1]), jnp.float32)
        for s in range(S):
            for cp in copies[s]:
                cp.wait()
            acc = acc + buf_ref[pl.ds(s * R, R), :].astype(jnp.float32)

        # Mean over the sequence axis (divide by S including padding tokens,
        # matching torch.mean with padding_idx=0 zero rows).
        out_ref[...] = (acc * (1.0 / S)).astype(out_ref.dtype)

    return kernel


def count_morgan_atom_embedding(x, table, *, rows_per_step: int = 8):
    """x: (B, S) int indices; table: (V, D) embedding weights. Returns (B, D) f32."""
    B, S = x.shape
    V, D = table.shape
    R = rows_per_step

    # Pad the batch to a multiple of R with index 0 (the all-zero padding row);
    # padded outputs are sliced off at the end.
    B_pad = ((B + R - 1) // R) * R
    x = x.astype(jnp.int32)
    if B_pad != B:
        x = jnp.pad(x, ((0, B_pad - B), (0, 0)))

    kernel = _make_kernel(S, R)

    grid_spec = pltpu.PrefetchScalarGridSpec(
        num_scalar_prefetch=1,                  # x -> SMEM, visible to kernel + index_maps
        grid=(B_pad // R,),
        in_specs=[
            pl.BlockSpec(memory_space=pl.ANY),  # embedding table stays in HBM
        ],
        out_specs=pl.BlockSpec((R, D), lambda g, idx_ref: (g, 0)),
        scratch_shapes=[
            pltpu.VMEM((S * R, D), table.dtype),
            pltpu.SemaphoreType.DMA((S,)),
        ],
    )

    out = pl.pallas_call(
        kernel,
        out_shape=jax.ShapeDtypeStruct((B_pad, D), jnp.float32),
        grid_spec=grid_spec,
        compiler_params=pltpu.CompilerParams(
            dimension_semantics=("parallel",),   # batch rows independent -> v7x 2-TC split
        ),
    )(x, table)

    return out[:B]


if __name__ == "__main__":
    # Small, deterministic setup consistent with the module's __init__/forward.
    embed_dim = 128        # self.embed_dim
    atom_count = 500       # synthetic small vocab (real default is 13279*72)
    vocab = atom_count + 1 # nn.Embedding(atom_count + 1, embed_dim, padding_idx=0)

    batch, seq = 12, 8     # batch deliberately not a multiple of 8 to exercise padding

    key = jax.random.PRNGKey(0)
    k_w, k_x = jax.random.split(key)

    # nn.Embedding init: N(0, 1); padding_idx=0 -> row 0 zeroed.
    table = jax.random.normal(k_w, (vocab, embed_dim), dtype=jnp.float32)
    table = table.at[0].set(0.0)

    # Token indices in [0, atom_count]; force some padding (index 0) entries.
    x = jax.random.randint(k_x, (batch, seq), minval=0, maxval=vocab, dtype=jnp.int32)
    x = x.at[0, 0].set(0)
    x = x.at[1, 3].set(0)

    out = count_morgan_atom_embedding(x, table)
    out = jax.block_until_ready(out)

    # Pure-JAX reference: embedding lookup then mean over dim=1.
    ref = jnp.mean(table[x], axis=1)
    assert out.shape == (batch, embed_dim)
    assert jnp.allclose(out, ref, atol=1e-5, rtol=1e-5), "mismatch vs reference"

    print("KERNEL_OK")
</pallas_src>

<mosaic_0001>
module attributes {stable_mosaic.version = 11 : i64} {
  func.func @kernel(%arg0: i32, %arg1: memref<16x8xi32, #tpu.memory_space<smem>>, %arg2: memref<501x128xf32, #tpu.memory_space<any>>, %arg3: memref<8x128xf32, #tpu.memory_space<vmem>>, %arg4: memref<64x128xf32, #tpu.memory_space<vmem>>, %arg5: memref<8x!tpu.dma_semaphore, #tpu.memory_space<semaphore_mem>>) attributes {dimension_semantics = [#tpu.dimension_semantics<parallel>], iteration_bounds = array<i64: 2>, scalar_prefetch = 1 : i64, scratch_operands = 2 : i64, tpu.core_type = #tpu.core_type<tc>, window_params = [{}, {transform_indices = @transform_1, window_bounds = array<i64: 8, 128>}]} {
    %c8_i32 = arith.constant 8 : i32
    %0 = arith.muli %arg0, %c8_i32 : i32
    %c0_i32 = arith.constant 0 : i32
    %1 = arith.addi %0, %c0_i32 : i32
    %2 = arith.index_cast %1 : i32 to index
    %c0 = arith.constant 0 : index
    %3 = memref.load %arg1[%2, %c0] : memref<16x8xi32, #tpu.memory_space<smem>>
    %c1_i32 = arith.constant 1 : i32
    %4 = arith.addi %0, %c1_i32 : i32
    %5 = arith.index_cast %4 : i32 to index
    %c0_0 = arith.constant 0 : index
    %6 = memref.load %arg1[%5, %c0_0] : memref<16x8xi32, #tpu.memory_space<smem>>
    %c2_i32 = arith.constant 2 : i32
    %7 = arith.addi %0, %c2_i32 : i32
    %8 = arith.index_cast %7 : i32 to index
    %c0_1 = arith.constant 0 : index
    %9 = memref.load %arg1[%8, %c0_1] : memref<16x8xi32, #tpu.memory_space<smem>>
    %c3_i32 = arith.constant 3 : i32
    %10 = arith.addi %0, %c3_i32 : i32
    %11 = arith.index_cast %10 : i32 to index
    %c0_2 = arith.constant 0 : index
    %12 = memref.load %arg1[%11, %c0_2] : memref<16x8xi32, #tpu.memory_space<smem>>
    %c4_i32 = arith.constant 4 : i32
    %13 = arith.addi %0, %c4_i32 : i32
    %14 = arith.index_cast %13 : i32 to index
    %c0_3 = arith.constant 0 : index
    %15 = memref.load %arg1[%14, %c0_3] : memref<16x8xi32, #tpu.memory_space<smem>>
    %c5_i32 = arith.constant 5 : i32
    %16 = arith.addi %0, %c5_i32 : i32
    %17 = arith.index_cast %16 : i32 to index
    %c0_4 = arith.constant 0 : index
    %18 = memref.load %arg1[%17, %c0_4] : memref<16x8xi32, #tpu.memory_space<smem>>
    %c6_i32 = arith.constant 6 : i32
    %19 = arith.addi %0, %c6_i32 : i32
    %20 = arith.index_cast %19 : i32 to index
    %c0_5 = arith.constant 0 : index
    %21 = memref.load %arg1[%20, %c0_5] : memref<16x8xi32, #tpu.memory_space<smem>>
    %c7_i32 = arith.constant 7 : i32
    %22 = arith.addi %0, %c7_i32 : i32
    %23 = arith.index_cast %22 : i32 to index
    %c0_6 = arith.constant 0 : index
    %24 = memref.load %arg1[%23, %c0_6] : memref<16x8xi32, #tpu.memory_space<smem>>
    %c0_i32_7 = arith.constant 0 : i32
    %25 = arith.addi %0, %c0_i32_7 : i32
    %26 = arith.index_cast %25 : i32 to index
    %c1 = arith.constant 1 : index
    %27 = memref.load %arg1[%26, %c1] : memref<16x8xi32, #tpu.memory_space<smem>>
    %c1_i32_8 = arith.constant 1 : i32
    %28 = arith.addi %0, %c1_i32_8 : i32
    %29 = arith.index_cast %28 : i32 to index
    %c1_9 = arith.constant 1 : index
    %30 = memref.load %arg1[%29, %c1_9] : memref<16x8xi32, #tpu.memory_space<smem>>
    %c2_i32_10 = arith.constant 2 : i32
    %31 = arith.addi %0, %c2_i32_10 : i32
    %32 = arith.index_cast %31 : i32 to index
    %c1_11 = arith.constant 1 : index
    %33 = memref.load %arg1[%32, %c1_11] : memref<16x8xi32, #tpu.memory_space<smem>>
    %c3_i32_12 = arith.constant 3 : i32
    %34 = arith.addi %0, %c3_i32_12 : i32
    %35 = arith.index_cast %34 : i32 to index
    %c1_13 = arith.constant 1 : index
    %36 = memref.load %arg1[%35, %c1_13] : memref<16x8xi32, #tpu.memory_space<smem>>
    %c4_i32_14 = arith.constant 4 : i32
    %37 = arith.addi %0, %c4_i32_14 : i32
    %38 = arith.index_cast %37 : i32 to index
    %c1_15 = arith.constant 1 : index
    %39 = memref.load %arg1[%38, %c1_15] : memref<16x8xi32, #tpu.memory_space<smem>>
    %c5_i32_16 = arith.constant 5 : i32
    %40 = arith.addi %0, %c5_i32_16 : i32
    %41 = arith.index_cast %40 : i32 to index
    %c1_17 = arith.constant 1 : index
    %42 = memref.load %arg1[%41, %c1_17] : memref<16x8xi32, #tpu.memory_space<smem>>
    %c6_i32_18 = arith.constant 6 : i32
    %43 = arith.addi %0, %c6_i32_18 : i32
    %44 = arith.index_cast %43 : i32 to index
    %c1_19 = arith.constant 1 : index
    %45 = memref.load %arg1[%44, %c1_19] : memref<16x8xi32, #tpu.memory_space<smem>>
    %c7_i32_20 = arith.constant 7 : i32
    %46 = arith.addi %0, %c7_i32_20 : i32
    %47 = arith.index_cast %46 : i32 to index
    %c1_21 = arith.constant 1 : index
    %48 = memref.load %arg1[%47, %c1_21] : memref<16x8xi32, #tpu.memory_space<smem>>
    %c0_i32_22 = arith.constant 0 : i32
    %49 = arith.addi %0, %c0_i32_22 : i32
    %50 = arith.index_cast %49 : i32 to index
    %c2 = arith.constant 2 : index
    %51 = memref.load %arg1[%50, %c2] : memref<16x8xi32, #tpu.memory_space<smem>>
    %c1_i32_23 = arith.constant 1 : i32
    %52 = arith.addi %0, %c1_i32_23 : i32
    %53 = arith.index_cast %52 : i32 to index
    %c2_24 = arith.constant 2 : index
    %54 = memref.load %arg1[%53, %c2_24] : memref<16x8xi32, #tpu.memory_space<smem>>
    %c2_i32_25 = arith.constant 2 : i32
    %55 = arith.addi %0, %c2_i32_25 : i32
    %56 = arith.index_cast %55 : i32 to index
    %c2_26 = arith.constant 2 : index
    %57 = memref.load %arg1[%56, %c2_26] : memref<16x8xi32, #tpu.memory_space<smem>>
    %c3_i32_27 = arith.constant 3 : i32
    %58 = arith.addi %0, %c3_i32_27 : i32
    %59 = arith.index_cast %58 : i32 to index
    %c2_28 = arith.constant 2 : index
    %60 = memref.load %arg1[%59, %c2_28] : memref<16x8xi32, #tpu.memory_space<smem>>
    %c4_i32_29 = arith.constant 4 : i32
    %61 = arith.addi %0, %c4_i32_29 : i32
    %62 = arith.index_cast %61 : i32 to index
    %c2_30 = arith.constant 2 : index
    %63 = memref.load %arg1[%62, %c2_30] : memref<16x8xi32, #tpu.memory_space<smem>>
    %c5_i32_31 = arith.constant 5 : i32
    %64 = arith.addi %0, %c5_i32_31 : i32
    %65 = arith.index_cast %64 : i32 to index
    %c2_32 = arith.constant 2 : index
    %66 = memref.load %arg1[%65, %c2_32] : memref<16x8xi32, #tpu.memory_space<smem>>
    %c6_i32_33 = arith.constant 6 : i32
    %67 = arith.addi %0, %c6_i32_33 : i32
    %68 = arith.index_cast %67 : i32 to index
    %c2_34 = arith.constant 2 : index
    %69 = memref.load %arg1[%68, %c2_34] : memref<16x8xi32, #tpu.memory_space<smem>>
    %c7_i32_35 = arith.constant 7 : i32
    %70 = arith.addi %0, %c7_i32_35 : i32
    %71 = arith.index_cast %70 : i32 to index
    %c2_36 = arith.constant 2 : index
    %72 = memref.load %arg1[%71, %c2_36] : memref<16x8xi32, #tpu.memory_space<smem>>
    %c0_i32_37 = arith.constant 0 : i32
    %73 = arith.addi %0, %c0_i32_37 : i32
    %74 = arith.index_cast %73 : i32 to index
    %c3 = arith.constant 3 : index
    %75 = memref.load %arg1[%74, %c3] : memref<16x8xi32, #tpu.memory_space<smem>>
    %c1_i32_38 = arith.constant 1 : i32
    %76 = arith.addi %0, %c1_i32_38 : i32
    %77 = arith.index_cast %76 : i32 to index
    %c3_39 = arith.constant 3 : index
    %78 = memref.load %arg1[%77, %c3_39] : memref<16x8xi32, #tpu.memory_space<smem>>
    %c2_i32_40 = arith.constant 2 : i32
    %79 = arith.addi %0, %c2_i32_40 : i32
    %80 = arith.index_cast %79 : i32 to index
    %c3_41 = arith.constant 3 : index
    %81 = memref.load %arg1[%80, %c3_41] : memref<16x8xi32, #tpu.memory_space<smem>>
    %c3_i32_42 = arith.constant 3 : i32
    %82 = arith.addi %0, %c3_i32_42 : i32
    %83 = arith.index_cast %82 : i32 to index
    %c3_43 = arith.constant 3 : index
    %84 = memref.load %arg1[%83, %c3_43] : memref<16x8xi32, #tpu.memory_space<smem>>
    %c4_i32_44 = arith.constant 4 : i32
    %85 = arith.addi %0, %c4_i32_44 : i32
    %86 = arith.index_cast %85 : i32 to index
    %c3_45 = arith.constant 3 : index
    %87 = memref.load %arg1[%86, %c3_45] : memref<16x8xi32, #tpu.memory_space<smem>>
    %c5_i32_46 = arith.constant 5 : i32
    %88 = arith.addi %0, %c5_i32_46 : i32
    %89 = arith.index_cast %88 : i32 to index
    %c3_47 = arith.constant 3 : index
    %90 = memref.load %arg1[%89, %c3_47] : memref<16x8xi32, #tpu.memory_space<smem>>
    %c6_i32_48 = arith.constant 6 : i32
    %91 = arith.addi %0, %c6_i32_48 : i32
    %92 = arith.index_cast %91 : i32 to index
    %c3_49 = arith.constant 3 : index
    %93 = memref.load %arg1[%92, %c3_49] : memref<16x8xi32, #tpu.memory_space<smem>>
    %c7_i32_50 = arith.constant 7 : i32
    %94 = arith.addi %0, %c7_i32_50 : i32
    %95 = arith.index_cast %94 : i32 to index
    %c3_51 = arith.constant 3 : index
    %96 = memref.load %arg1[%95, %c3_51] : memref<16x8xi32, #tpu.memory_space<smem>>
    %c0_i32_52 = arith.constant 0 : i32
    %97 = arith.addi %0, %c0_i32_52 : i32
    %98 = arith.index_cast %97 : i32 to index
    %c4 = arith.constant 4 : index
    %99 = memref.load %arg1[%98, %c4] : memref<16x8xi32, #tpu.memory_space<smem>>
    %c1_i32_53 = arith.constant 1 : i32
    %100 = arith.addi %0, %c1_i32_53 : i32
    %101 = arith.index_cast %100 : i32 to index
    %c4_54 = arith.constant 4 : index
    %102 = memref.load %arg1[%101, %c4_54] : memref<16x8xi32, #tpu.memory_space<smem>>
    %c2_i32_55 = arith.constant 2 : i32
    %103 = arith.addi %0, %c2_i32_55 : i32
    %104 = arith.index_cast %103 : i32 to index
    %c4_56 = arith.constant 4 : index
    %105 = memref.load %arg1[%104, %c4_56] : memref<16x8xi32, #tpu.memory_space<smem>>
    %c3_i32_57 = arith.constant 3 : i32
    %106 = arith.addi %0, %c3_i32_57 : i32
    %107 = arith.index_cast %106 : i32 to index
    %c4_58 = arith.constant 4 : index
    %108 = memref.load %arg1[%107, %c4_58] : memref<16x8xi32, #tpu.memory_space<smem>>
    %c4_i32_59 = arith.constant 4 : i32
    %109 = arith.addi %0, %c4_i32_59 : i32
    %110 = arith.index_cast %109 : i32 to index
    %c4_60 = arith.constant 4 : index
    %111 = memref.load %arg1[%110, %c4_60] : memref<16x8xi32, #tpu.memory_space<smem>>
    %c5_i32_61 = arith.constant 5 : i32
    %112 = arith.addi %0, %c5_i32_61 : i32
    %113 = arith.index_cast %112 : i32 to index
    %c4_62 = arith.constant 4 : index
    %114 = memref.load %arg1[%113, %c4_62] : memref<16x8xi32, #tpu.memory_space<smem>>
    %c6_i32_63 = arith.constant 6 : i32
    %115 = arith.addi %0, %c6_i32_63 : i32
    %116 = arith.index_cast %115 : i32 to index
    %c4_64 = arith.constant 4 : index
    %117 = memref.load %arg1[%116, %c4_64] : memref<16x8xi32, #tpu.memory_space<smem>>
    %c7_i32_65 = arith.constant 7 : i32
    %118 = arith.addi %0, %c7_i32_65 : i32
    %119 = arith.index_cast %118 : i32 to index
    %c4_66 = arith.constant 4 : index
    %120 = memref.load %arg1[%119, %c4_66] : memref<16x8xi32, #tpu.memory_space<smem>>
    %c0_i32_67 = arith.constant 0 : i32
    %121 = arith.addi %0, %c0_i32_67 : i32
    %122 = arith.index_cast %121 : i32 to index
    %c5 = arith.constant 5 : index
    %123 = memref.load %arg1[%122, %c5] : memref<16x8xi32, #tpu.memory_space<smem>>
    %c1_i32_68 = arith.constant 1 : i32
    %124 = arith.addi %0, %c1_i32_68 : i32
    %125 = arith.index_cast %124 : i32 to index
    %c5_69 = arith.constant 5 : index
    %126 = memref.load %arg1[%125, %c5_69] : memref<16x8xi32, #tpu.memory_space<smem>>
    %c2_i32_70 = arith.constant 2 : i32
    %127 = arith.addi %0, %c2_i32_70 : i32
    %128 = arith.index_cast %127 : i32 to index
    %c5_71 = arith.constant 5 : index
    %129 = memref.load %arg1[%128, %c5_71] : memref<16x8xi32, #tpu.memory_space<smem>>
    %c3_i32_72 = arith.constant 3 : i32
    %130 = arith.addi %0, %c3_i32_72 : i32
    %131 = arith.index_cast %130 : i32 to index
    %c5_73 = arith.constant 5 : index
    %132 = memref.load %arg1[%131, %c5_73] : memref<16x8xi32, #tpu.memory_space<smem>>
    %c4_i32_74 = arith.constant 4 : i32
    %133 = arith.addi %0, %c4_i32_74 : i32
    %134 = arith.index_cast %133 : i32 to index
    %c5_75 = arith.constant 5 : index
    %135 = memref.load %arg1[%134, %c5_75] : memref<16x8xi32, #tpu.memory_space<smem>>
    %c5_i32_76 = arith.constant 5 : i32
    %136 = arith.addi %0, %c5_i32_76 : i32
    %137 = arith.index_cast %136 : i32 to index
    %c5_77 = arith.constant 5 : index
    %138 = memref.load %arg1[%137, %c5_77] : memref<16x8xi32, #tpu.memory_space<smem>>
    %c6_i32_78 = arith.constant 6 : i32
    %139 = arith.addi %0, %c6_i32_78 : i32
    %140 = arith.index_cast %139 : i32 to index
    %c5_79 = arith.constant 5 : index
    %141 = memref.load %arg1[%140, %c5_79] : memref<16x8xi32, #tpu.memory_space<smem>>
    %c7_i32_80 = arith.constant 7 : i32
    %142 = arith.addi %0, %c7_i32_80 : i32
    %143 = arith.index_cast %142 : i32 to index
    %c5_81 = arith.constant 5 : index
    %144 = memref.load %arg1[%143, %c5_81] : memref<16x8xi32, #tpu.memory_space<smem>>
    %c0_i32_82 = arith.constant 0 : i32
    %145 = arith.addi %0, %c0_i32_82 : i32
    %146 = arith.index_cast %145 : i32 to index
    %c6 = arith.constant 6 : index
    %147 = memref.load %arg1[%146, %c6] : memref<16x8xi32, #tpu.memory_space<smem>>
    %c1_i32_83 = arith.constant 1 : i32
    %148 = arith.addi %0, %c1_i32_83 : i32
    %149 = arith.index_cast %148 : i32 to index
    %c6_84 = arith.constant 6 : index
    %150 = memref.load %arg1[%149, %c6_84] : memref<16x8xi32, #tpu.memory_space<smem>>
    %c2_i32_85 = arith.constant 2 : i32
    %151 = arith.addi %0, %c2_i32_85 : i32
    %152 = arith.index_cast %151 : i32 to index
    %c6_86 = arith.constant 6 : index
    %153 = memref.load %arg1[%152, %c6_86] : memref<16x8xi32, #tpu.memory_space<smem>>
    %c3_i32_87 = arith.constant 3 : i32
    %154 = arith.addi %0, %c3_i32_87 : i32
    %155 = arith.index_cast %154 : i32 to index
    %c6_88 = arith.constant 6 : index
    %156 = memref.load %arg1[%155, %c6_88] : memref<16x8xi32, #tpu.memory_space<smem>>
    %c4_i32_89 = arith.constant 4 : i32
    %157 = arith.addi %0, %c4_i32_89 : i32
    %158 = arith.index_cast %157 : i32 to index
    %c6_90 = arith.constant 6 : index
    %159 = memref.load %arg1[%158, %c6_90] : memref<16x8xi32, #tpu.memory_space<smem>>
    %c5_i32_91 = arith.constant 5 : i32
    %160 = arith.addi %0, %c5_i32_91 : i32
    %161 = arith.index_cast %160 : i32 to index
    %c6_92 = arith.constant 6 : index
    %162 = memref.load %arg1[%161, %c6_92] : memref<16x8xi32, #tpu.memory_space<smem>>
    %c6_i32_93 = arith.constant 6 : i32
    %163 = arith.addi %0, %c6_i32_93 : i32
    %164 = arith.index_cast %163 : i32 to index
    %c6_94 = arith.constant 6 : index
    %165 = memref.load %arg1[%164, %c6_94] : memref<16x8xi32, #tpu.memory_space<smem>>
    %c7_i32_95 = arith.constant 7 : i32
    %166 = arith.addi %0, %c7_i32_95 : i32
    %167 = arith.index_cast %166 : i32 to index
    %c6_96 = arith.constant 6 : index
    %168 = memref.load %arg1[%167, %c6_96] : memref<16x8xi32, #tpu.memory_space<smem>>
    %c0_i32_97 = arith.constant 0 : i32
    %169 = arith.addi %0, %c0_i32_97 : i32
    %170 = arith.index_cast %169 : i32 to index
    %c7 = arith.constant 7 : index
    %171 = memref.load %arg1[%170, %c7] : memref<16x8xi32, #tpu.memory_space<smem>>
    %c1_i32_98 = arith.constant 1 : i32
    %172 = arith.addi %0, %c1_i32_98 : i32
    %173 = arith.index_cast %172 : i32 to index
    %c7_99 = arith.constant 7 : index
    %174 = memref.load %arg1[%173, %c7_99] : memref<16x8xi32, #tpu.memory_space<smem>>
    %c2_i32_100 = arith.constant 2 : i32
    %175 = arith.addi %0, %c2_i32_100 : i32
    %176 = arith.index_cast %175 : i32 to index
    %c7_101 = arith.constant 7 : index
    %177 = memref.load %arg1[%176, %c7_101] : memref<16x8xi32, #tpu.memory_space<smem>>
    %c3_i32_102 = arith.constant 3 : i32
    %178 = arith.addi %0, %c3_i32_102 : i32
    %179 = arith.index_cast %178 : i32 to index
    %c7_103 = arith.constant 7 : index
    %180 = memref.load %arg1[%179, %c7_103] : memref<16x8xi32, #tpu.memory_space<smem>>
    %c4_i32_104 = arith.constant 4 : i32
    %181 = arith.addi %0, %c4_i32_104 : i32
    %182 = arith.index_cast %181 : i32 to index
    %c7_105 = arith.constant 7 : index
    %183 = memref.load %arg1[%182, %c7_105] : memref<16x8xi32, #tpu.memory_space<smem>>
    %c5_i32_106 = arith.constant 5 : i32
    %184 = arith.addi %0, %c5_i32_106 : i32
    %185 = arith.index_cast %184 : i32 to index
    %c7_107 = arith.constant 7 : index
    %186 = memref.load %arg1[%185, %c7_107] : memref<16x8xi32, #tpu.memory_space<smem>>
    %c6_i32_108 = arith.constant 6 : i32
    %187 = arith.addi %0, %c6_i32_108 : i32
    %188 = arith.index_cast %187 : i32 to index
    %c7_109 = arith.constant 7 : index
    %189 = memref.load %arg1[%188, %c7_109] : memref<16x8xi32, #tpu.memory_space<smem>>
    %c7_i32_110 = arith.constant 7 : i32
    %190 = arith.addi %0, %c7_i32_110 : i32
    %191 = arith.index_cast %190 : i32 to index
    %c7_111 = arith.constant 7 : index
    %192 = memref.load %arg1[%191, %c7_111] : memref<16x8xi32, #tpu.memory_space<smem>>
    %c0_i32_112 = arith.constant 0 : i32
    %c0_i32_113 = arith.constant 0 : i32
    %193 = tpu.memref_slice %arg2[%3, %c0_i32_113] : memref<501x128xf32, #tpu.memory_space<any>> -> memref<1x128xf32, #tpu.memory_space<any>>
    %c0_i32_114 = arith.constant 0 : i32
    %c0_i32_115 = arith.constant 0 : i32
    %194 = tpu.memref_slice %arg4[%c0_i32_114, %c0_i32_115] : memref<64x128xf32, #tpu.memory_space<vmem>> -> memref<1x128xf32, #tpu.memory_space<vmem>>
    %195 = tpu.memref_slice %arg5[%c0_i32_112] : memref<8x!tpu.dma_semaphore, #tpu.memory_space<semaphore_mem>> -> memref<1x!tpu.dma_semaphore, #tpu.memory_space<semaphore_mem>>
    %196 = tpu.memref_squeeze %195 : memref<1x!tpu.dma_semaphore, #tpu.memory_space<semaphore_mem>> -> memref<!tpu.dma_semaphore, #tpu.memory_space<semaphore_mem>>
    tpu.enqueue_dma source(%193 : memref<1x128xf32, #tpu.memory_space<any>>) target(%194 : memref<1x128xf32, #tpu.memory_space<vmem>>) target_semaphore(%196 : memref<!tpu.dma_semaphore, #tpu.memory_space<semaphore_mem>>)
    %c0_i32_116 = arith.constant 0 : i32
    %c0_i32_117 = arith.constant 0 : i32
    %197 = tpu.memref_slice %arg2[%6, %c0_i32_117] : memref<501x128xf32, #tpu.memory_space<any>> -> memref<1x128xf32, #tpu.memory_space<any>>
    %c1_i32_118 = arith.constant 1 : i32
    %c0_i32_119 = arith.constant 0 : i32
    %198 = tpu.memref_slice %arg4[%c1_i32_118, %c0_i32_119] : memref<64x128xf32, #tpu.memory_space<vmem>> -> memref<1x128xf32, #tpu.memory_space<vmem>>
    %199 = tpu.memref_slice %arg5[%c0_i32_116] : memref<8x!tpu.dma_semaphore, #tpu.memory_space<semaphore_mem>> -> memref<1x!tpu.dma_semaphore, #tpu.memory_space<semaphore_mem>>
    %200 = tpu.memref_squeeze %199 : memref<1x!tpu.dma_semaphore, #tpu.memory_space<semaphore_mem>> -> memref<!tpu.dma_semaphore, #tpu.memory_space<semaphore_mem>>
    tpu.enqueue_dma source(%197 : memref<1x128xf32, #tpu.memory_space<any>>) target(%198 : memref<1x128xf32, #tpu.memory_space<vmem>>) target_semaphore(%200 : memref<!tpu.dma_semaphore, #tpu.memory_space<semaphore_mem>>)
    %c0_i32_120 = arith.constant 0 : i32
    %c0_i32_121 = arith.constant 0 : i32
    %201 = tpu.memref_slice %arg2[%9, %c0_i32_121] : memref<501x128xf32, #tpu.memory_space<any>> -> memref<1x128xf32, #tpu.memory_space<any>>
    %c2_i32_122 = arith.constant 2 : i32
    %c0_i32_123 = arith.constant 0 : i32
    %202 = tpu.memref_slice %arg4[%c2_i32_122, %c0_i32_123] : memref<64x128xf32, #tpu.memory_space<vmem>> -> memref<1x128xf32, #tpu.memory_space<vmem>>
    %203 = tpu.memref_slice %arg5[%c0_i32_120] : memref<8x!tpu.dma_semaphore, #tpu.memory_space<semaphore_mem>> -> memref<1x!tpu.dma_semaphore, #tpu.memory_space<semaphore_mem>>
    %204 = tpu.memref_squeeze %203 : memref<1x!tpu.dma_semaphore, #tpu.memory_space<semaphore_mem>> -> memref<!tpu.dma_semaphore, #tpu.memory_space<semaphore_mem>>
    tpu.enqueue_dma source(%201 : memref<1x128xf32, #tpu.memory_space<any>>) target(%202 : memref<1x128xf32, #tpu.memory_space<vmem>>) target_semaphore(%204 : memref<!tpu.dma_semaphore, #tpu.memory_space<semaphore_mem>>)
    %c0_i32_124 = arith.constant 0 : i32
    %c0_i32_125 = arith.constant 0 : i32
    %205 = tpu.memref_slice %arg2[%12, %c0_i32_125] : memref<501x128xf32, #tpu.memory_space<any>> -> memref<1x128xf32, #tpu.memory_space<any>>
    %c3_i32_126 = arith.constant 3 : i32
    %c0_i32_127 = arith.constant 0 : i32
    %206 = tpu.memref_slice %arg4[%c3_i32_126, %c0_i32_127] : memref<64x128xf32, #tpu.memory_space<vmem>> -> memref<1x128xf32, #tpu.memory_space<vmem>>
    %207 = tpu.memref_slice %arg5[%c0_i32_124] : memref<8x!tpu.dma_semaphore, #tpu.memory_space<semaphore_mem>> -> memref<1x!tpu.dma_semaphore, #tpu.memory_space<semaphore_mem>>
    %208 = tpu.memref_squeeze %207 : memref<1x!tpu.dma_semaphore, #tpu.memory_space<semaphore_mem>> -> memref<!tpu.dma_semaphore, #tpu.memory_space<semaphore_mem>>
    tpu.enqueue_dma source(%205 : memref<1x128xf32, #tpu.memory_space<any>>) target(%206 : memref<1x128xf32, #tpu.memory_space<vmem>>) target_semaphore(%208 : memref<!tpu.dma_semaphore, #tpu.memory_space<semaphore_mem>>)
    %c0_i32_128 = arith.constant 0 : i32
    %c0_i32_129 = arith.constant 0 : i32
    %209 = tpu.memref_slice %arg2[%15, %c0_i32_129] : memref<501x128xf32, #tpu.memory_space<any>> -> memref<1x128xf32, #tpu.memory_space<any>>
    %c4_i32_130 = arith.constant 4 : i32
    %c0_i32_131 = arith.constant 0 : i32
    %210 = tpu.memref_slice %arg4[%c4_i32_130, %c0_i32_131] : memref<64x128xf32, #tpu.memory_space<vmem>> -> memref<1x128xf32, #tpu.memory_space<vmem>>
    %211 = tpu.memref_slice %arg5[%c0_i32_128] : memref<8x!tpu.dma_semaphore, #tpu.memory_space<semaphore_mem>> -> memref<1x!tpu.dma_semaphore, #tpu.memory_space<semaphore_mem>>
    %212 = tpu.memref_squeeze %211 : memref<1x!tpu.dma_semaphore, #tpu.memory_space<semaphore_mem>> -> memref<!tpu.dma_semaphore, #tpu.memory_space<semaphore_mem>>
    tpu.enqueue_dma source(%209 : memref<1x128xf32, #tpu.memory_space<any>>) target(%210 : memref<1x128xf32, #tpu.memory_space<vmem>>) target_semaphore(%212 : memref<!tpu.dma_semaphore, #tpu.memory_space<semaphore_mem>>)
    %c0_i32_132 = arith.constant 0 : i32
    %c0_i32_133 = arith.constant 0 : i32
    %213 = tpu.memref_slice %arg2[%18, %c0_i32_133] : memref<501x128xf32, #tpu.memory_space<any>> -> memref<1x128xf32, #tpu.memory_space<any>>
    %c5_i32_134 = arith.constant 5 : i32
    %c0_i32_135 = arith.constant 0 : i32
    %214 = tpu.memref_slice %arg4[%c5_i32_134, %c0_i32_135] : memref<64x128xf32, #tpu.memory_space<vmem>> -> memref<1x128xf32, #tpu.memory_space<vmem>>
    %215 = tpu.memref_slice %arg5[%c0_i32_132] : memref<8x!tpu.dma_semaphore, #tpu.memory_space<semaphore_mem>> -> memref<1x!tpu.dma_semaphore, #tpu.memory_space<semaphore_mem>>
    %216 = tpu.memref_squeeze %215 : memref<1x!tpu.dma_semaphore, #tpu.memory_space<semaphore_mem>> -> memref<!tpu.dma_semaphore, #tpu.memory_space<semaphore_mem>>
    tpu.enqueue_dma source(%213 : memref<1x128xf32, #tpu.memory_space<any>>) target(%214 : memref<1x128xf32, #tpu.memory_space<vmem>>) target_semaphore(%216 : memref<!tpu.dma_semaphore, #tpu.memory_space<semaphore_mem>>)
    %c0_i32_136 = arith.constant 0 : i32
    %c0_i32_137 = arith.constant 0 : i32
    %217 = tpu.memref_slice %arg2[%21, %c0_i32_137] : memref<501x128xf32, #tpu.memory_space<any>> -> memref<1x128xf32, #tpu.memory_space<any>>
    %c6_i32_138 = arith.constant 6 : i32
    %c0_i32_139 = arith.constant 0 : i32
    %218 = tpu.memref_slice %arg4[%c6_i32_138, %c0_i32_139] : memref<64x128xf32, #tpu.memory_space<vmem>> -> memref<1x128xf32, #tpu.memory_space<vmem>>
    %219 = tpu.memref_slice %arg5[%c0_i32_136] : memref<8x!tpu.dma_semaphore, #tpu.memory_space<semaphore_mem>> -> memref<1x!tpu.dma_semaphore, #tpu.memory_space<semaphore_mem>>
    %220 = tpu.memref_squeeze %219 : memref<1x!tpu.dma_semaphore, #tpu.memory_space<semaphore_mem>> -> memref<!tpu.dma_semaphore, #tpu.memory_space<semaphore_mem>>
    tpu.enqueue_dma source(%217 : memref<1x128xf32, #tpu.memory_space<any>>) target(%218 : memref<1x128xf32, #tpu.memory_space<vmem>>) target_semaphore(%220 : memref<!tpu.dma_semaphore, #tpu.memory_space<semaphore_mem>>)
    %c0_i32_140 = arith.constant 0 : i32
    %c0_i32_141 = arith.constant 0 : i32
    %221 = tpu.memref_slice %arg2[%24, %c0_i32_141] : memref<501x128xf32, #tpu.memory_space<any>> -> memref<1x128xf32, #tpu.memory_space<any>>
    %c7_i32_142 = arith.constant 7 : i32
    %c0_i32_143 = arith.constant 0 : i32
    %222 = tpu.memref_slice %arg4[%c7_i32_142, %c0_i32_143] : memref<64x128xf32, #tpu.memory_space<vmem>> -> memref<1x128xf32, #tpu.memory_space<vmem>>
    %223 = tpu.memref_slice %arg5[%c0_i32_140] : memref<8x!tpu.dma_semaphore, #tpu.memory_space<semaphore_mem>> -> memref<1x!tpu.dma_semaphore, #tpu.memory_space<semaphore_mem>>
    %224 = tpu.memref_squeeze %223 : memref<1x!tpu.dma_semaphore, #tpu.memory_space<semaphore_mem>> -> memref<!tpu.dma_semaphore, #tpu.memory_space<semaphore_mem>>
    tpu.enqueue_dma source(%221 : memref<1x128xf32, #tpu.memory_space<any>>) target(%222 : memref<1x128xf32, #tpu.memory_space<vmem>>) target_semaphore(%224 : memref<!tpu.dma_semaphore, #tpu.memory_space<semaphore_mem>>)
    %c1_i32_144 = arith.constant 1 : i32
    %c0_i32_145 = arith.constant 0 : i32
    %225 = tpu.memref_slice %arg2[%27, %c0_i32_145] : memref<501x128xf32, #tpu.memory_space<any>> -> memref<1x128xf32, #tpu.memory_space<any>>
    %c8_i32_146 = arith.constant 8 : i32
    %c0_i32_147 = arith.constant 0 : i32
    %226 = tpu.memref_slice %arg4[%c8_i32_146, %c0_i32_147] : memref<64x128xf32, #tpu.memory_space<vmem>> -> memref<1x128xf32, #tpu.memory_space<vmem>>
    %227 = tpu.memref_slice %arg5[%c1_i32_144] : memref<8x!tpu.dma_semaphore, #tpu.memory_space<semaphore_mem>> -> memref<1x!tpu.dma_semaphore, #tpu.memory_space<semaphore_mem>>
    %228 = tpu.memref_squeeze %227 : memref<1x!tpu.dma_semaphore, #tpu.memory_space<semaphore_mem>> -> memref<!tpu.dma_semaphore, #tpu.memory_space<semaphore_mem>>
    tpu.enqueue_dma source(%225 : memref<1x128xf32, #tpu.memory_space<any>>) target(%226 : memref<1x128xf32, #tpu.memory_space<vmem>>) target_semaphore(%228 : memref<!tpu.dma_semaphore, #tpu.memory_space<semaphore_mem>>)
    %c1_i32_148 = arith.constant 1 : i32
    %c0_i32_149 = arith.constant 0 : i32
    %229 = tpu.memref_slice %arg2[%30, %c0_i32_149] : memref<501x128xf32, #tpu.memory_space<any>> -> memref<1x128xf32, #tpu.memory_space<any>>
    %c9_i32 = arith.constant 9 : i32
    %c0_i32_150 = arith.constant 0 : i32
    %230 = tpu.memref_slice %arg4[%c9_i32, %c0_i32_150] : memref<64x128xf32, #tpu.memory_space<vmem>> -> memref<1x128xf32, #tpu.memory_space<vmem>>
    %231 = tpu.memref_slice %arg5[%c1_i32_148] : memref<8x!tpu.dma_semaphore, #tpu.memory_space<semaphore_mem>> -> memref<1x!tpu.dma_semaphore, #tpu.memory_space<semaphore_mem>>
    %232 = tpu.memref_squeeze %231 : memref<1x!tpu.dma_semaphore, #tpu.memory_space<semaphore_mem>> -> memref<!tpu.dma_semaphore, #tpu.memory_space<semaphore_mem>>
    tpu.enqueue_dma source(%229 : memref<1x128xf32, #tpu.memory_space<any>>) target(%230 : memref<1x128xf32, #tpu.memory_space<vmem>>) target_semaphore(%232 : memref<!tpu.dma_semaphore, #tpu.memory_space<semaphore_mem>>)
    %c1_i32_151 = arith.constant 1 : i32
    %c0_i32_152 = arith.constant 0 : i32
    %233 = tpu.memref_slice %arg2[%33, %c0_i32_152] : memref<501x128xf32, #tpu.memory_space<any>> -> memref<1x128xf32, #tpu.memory_space<any>>
    %c10_i32 = arith.constant 10 : i32
    %c0_i32_153 = arith.constant 0 : i32
    %234 = tpu.memref_slice %arg4[%c10_i32, %c0_i32_153] : memref<64x128xf32, #tpu.memory_space<vmem>> -> memref<1x128xf32, #tpu.memory_space<vmem>>
    %235 = tpu.memref_slice %arg5[%c1_i32_151] : memref<8x!tpu.dma_semaphore, #tpu.memory_space<semaphore_mem>> -> memref<1x!tpu.dma_semaphore, #tpu.memory_space<semaphore_mem>>
    %236 = tpu.memref_squeeze %235 : memref<1x!tpu.dma_semaphore, #tpu.memory_space<semaphore_mem>> -> memref<!tpu.dma_semaphore, #tpu.memory_space<semaphore_mem>>
    tpu.enqueue_dma source(%233 : memref<1x128xf32, #tpu.memory_space<any>>) target(%234 : memref<1x128xf32, #tpu.memory_space<vmem>>) target_semaphore(%236 : memref<!tpu.dma_semaphore, #tpu.memory_space<semaphore_mem>>)
    %c1_i32_154 = arith.constant 1 : i32
    %c0_i32_155 = arith.constant 0 : i32
    %237 = tpu.memref_slice %arg2[%36, %c0_i32_155] : memref<501x128xf32, #tpu.memory_space<any>> -> memref<1x128xf32, #tpu.memory_space<any>>
    %c11_i32 = arith.constant 11 : i32
    %c0_i32_156 = arith.constant 0 : i32
    %238 = tpu.memref_slice %arg4[%c11_i32, %c0_i32_156] : memref<64x128xf32, #tpu.memory_space<vmem>> -> memref<1x128xf32, #tpu.memory_space<vmem>>
    %239 = tpu.memref_slice %arg5[%c1_i32_154] : memref<8x!tpu.dma_semaphore, #tpu.memory_space<semaphore_mem>> -> memref<1x!tpu.dma_semaphore, #tpu.memory_space<semaphore_mem>>
    %240 = tpu.memref_squeeze %239 : memref<1x!tpu.dma_semaphore, #tpu.memory_space<semaphore_mem>> -> memref<!tpu.dma_semaphore, #tpu.memory_space<semaphore_mem>>
    tpu.enqueue_dma source(%237 : memref<1x128xf32, #tpu.memory_space<any>>) target(%238 : memref<1x128xf32, #tpu.memory_space<vmem>>) target_semaphore(%240 : memref<!tpu.dma_semaphore, #tpu.memory_space<semaphore_mem>>)
    %c1_i32_157 = arith.constant 1 : i32
    %c0_i32_158 = arith.constant 0 : i32
    %241 = tpu.memref_slice %arg2[%39, %c0_i32_158] : memref<501x128xf32, #tpu.memory_space<any>> -> memref<1x128xf32, #tpu.memory_space<any>>
    %c12_i32 = arith.constant 12 : i32
    %c0_i32_159 = arith.constant 0 : i32
    %242 = tpu.memref_slice %arg4[%c12_i32, %c0_i32_159] : memref<64x128xf32, #tpu.memory_space<vmem>> -> memref<1x128xf32, #tpu.memory_space<vmem>>
    %243 = tpu.memref_slice %arg5[%c1_i32_157] : memref<8x!tpu.dma_semaphore, #tpu.memory_space<semaphore_mem>> -> memref<1x!tpu.dma_semaphore, #tpu.memory_space<semaphore_mem>>
    %244 = tpu.memref_squeeze %243 : memref<1x!tpu.dma_semaphore, #tpu.memory_space<semaphore_mem>> -> memref<!tpu.dma_semaphore, #tpu.memory_space<semaphore_mem>>
    tpu.enqueue_dma source(%241 : memref<1x128xf32, #tpu.memory_space<any>>) target(%242 : memref<1x128xf32, #tpu.memory_space<vmem>>) target_semaphore(%244 : memref<!tpu.dma_semaphore, #tpu.memory_space<semaphore_mem>>)
    %c1_i32_160 = arith.constant 1 : i32
    %c0_i32_161 = arith.constant 0 : i32
    %245 = tpu.memref_slice %arg2[%42, %c0_i32_161] : memref<501x128xf32, #tpu.memory_space<any>> -> memref<1x128xf32, #tpu.memory_space<any>>
    %c13_i32 = arith.constant 13 : i32
    %c0_i32_162 = arith.constant 0 : i32
    %246 = tpu.memref_slice %arg4[%c13_i32, %c0_i32_162] : memref<64x128xf32, #tpu.memory_space<vmem>> -> memref<1x128xf32, #tpu.memory_space<vmem>>
    %247 = tpu.memref_slice %arg5[%c1_i32_160] : memref<8x!tpu.dma_semaphore, #tpu.memory_space<semaphore_mem>> -> memref<1x!tpu.dma_semaphore, #tpu.memory_space<semaphore_mem>>
    %248 = tpu.memref_squeeze %247 : memref<1x!tpu.dma_semaphore, #tpu.memory_space<semaphore_mem>> -> memref<!tpu.dma_semaphore, #tpu.memory_space<semaphore_mem>>
    tpu.enqueue_dma source(%245 : memref<1x128xf32, #tpu.memory_space<any>>) target(%246 : memref<1x128xf32, #tpu.memory_space<vmem>>) target_semaphore(%248 : memref<!tpu.dma_semaphore, #tpu.memory_space<semaphore_mem>>)
    %c1_i32_163 = arith.constant 1 : i32
    %c0_i32_164 = arith.constant 0 : i32
    %249 = tpu.memref_slice %arg2[%45, %c0_i32_164] : memref<501x128xf32, #tpu.memory_space<any>> -> memref<1x128xf32, #tpu.memory_space<any>>
    %c14_i32 = arith.constant 14 : i32
    %c0_i32_165 = arith.constant 0 : i32
    %250 = tpu.memref_slice %arg4[%c14_i32, %c0_i32_165] : memref<64x128xf32, #tpu.memory_space<vmem>> -> memref<1x128xf32, #tpu.memory_space<vmem>>
    %251 = tpu.memref_slice %arg5[%c1_i32_163] : memref<8x!tpu.dma_semaphore, #tpu.memory_space<semaphore_mem>> -> memref<1x!tpu.dma_semaphore, #tpu.memory_space<semaphore_mem>>
    %252 = tpu.memref_squeeze %251 : memref<1x!tpu.dma_semaphore, #tpu.memory_space<semaphore_mem>> -> memref<!tpu.dma_semaphore, #tpu.memory_space<semaphore_mem>>
    tpu.enqueue_dma source(%249 : memref<1x128xf32, #tpu.memory_space<any>>) target(%250 : memref<1x128xf32, #tpu.memory_space<vmem>>) target_semaphore(%252 : memref<!tpu.dma_semaphore, #tpu.memory_space<semaphore_mem>>)
    %c1_i32_166 = arith.constant 1 : i32
    %c0_i32_167 = arith.constant 0 : i32
    %253 = tpu.memref_slice %arg2[%48, %c0_i32_167] : memref<501x128xf32, #tpu.memory_space<any>> -> memref<1x128xf32, #tpu.memory_space<any>>
    %c15_i32 = arith.constant 15 : i32
    %c0_i32_168 = arith.constant 0 : i32
    %254 = tpu.memref_slice %arg4[%c15_i32, %c0_i32_168] : memref<64x128xf32, #tpu.memory_space<vmem>> -> memref<1x128xf32, #tpu.memory_space<vmem>>
    %255 = tpu.memref_slice %arg5[%c1_i32_166] : memref<8x!tpu.dma_semaphore, #tpu.memory_space<semaphore_mem>> -> memref<1x!tpu.dma_semaphore, #tpu.memory_space<semaphore_mem>>
    %256 = tpu.memref_squeeze %255 : memref<1x!tpu.dma_semaphore, #tpu.memory_space<semaphore_mem>> -> memref<!tpu.dma_semaphore, #tpu.memory_space<semaphore_mem>>
    tpu.enqueue_dma source(%253 : memref<1x128xf32, #tpu.memory_space<any>>) target(%254 : memref<1x128xf32, #tpu.memory_space<vmem>>) target_semaphore(%256 : memref<!tpu.dma_semaphore, #tpu.memory_space<semaphore_mem>>)
    %c2_i32_169 = arith.constant 2 : i32
    %c0_i32_170 = arith.constant 0 : i32
    %257 = tpu.memref_slice %arg2[%51, %c0_i32_170] : memref<501x128xf32, #tpu.memory_space<any>> -> memref<1x128xf32, #tpu.memory_space<any>>
    %c16_i32 = arith.constant 16 : i32
    %c0_i32_171 = arith.constant 0 : i32
    %258 = tpu.memref_slice %arg4[%c16_i32, %c0_i32_171] : memref<64x128xf32, #tpu.memory_space<vmem>> -> memref<1x128xf32, #tpu.memory_space<vmem>>
    %259 = tpu.memref_slice %arg5[%c2_i32_169] : memref<8x!tpu.dma_semaphore, #tpu.memory_space<semaphore_mem>> -> memref<1x!tpu.dma_semaphore, #tpu.memory_space<semaphore_mem>>
    %260 = tpu.memref_squeeze %259 : memref<1x!tpu.dma_semaphore, #tpu.memory_space<semaphore_mem>> -> memref<!tpu.dma_semaphore, #tpu.memory_space<semaphore_mem>>
    tpu.enqueue_dma source(%257 : memref<1x128xf32, #tpu.memory_space<any>>) target(%258 : memref<1x128xf32, #tpu.memory_space<vmem>>) target_semaphore(%260 : memref<!tpu.dma_semaphore, #tpu.memory_space<semaphore_mem>>)
    %c2_i32_172 = arith.constant 2 : i32
    %c0_i32_173 = arith.constant 0 : i32
    %261 = tpu.memref_slice %arg2[%54, %c0_i32_173] : memref<501x128xf32, #tpu.memory_space<any>> -> memref<1x128xf32, #tpu.memory_space<any>>
    %c17_i32 = arith.constant 17 : i32
    %c0_i32_174 = arith.constant 0 : i32
    %262 = tpu.memref_slice %arg4[%c17_i32, %c0_i32_174] : memref<64x128xf32, #tpu.memory_space<vmem>> -> memref<1x128xf32, #tpu.memory_space<vmem>>
    %263 = tpu.memref_slice %arg5[%c2_i32_172] : memref<8x!tpu.dma_semaphore, #tpu.memory_space<semaphore_mem>> -> memref<1x!tpu.dma_semaphore, #tpu.memory_space<semaphore_mem>>
    %264 = tpu.memref_squeeze %263 : memref<1x!tpu.dma_semaphore, #tpu.memory_space<semaphore_mem>> -> memref<!tpu.dma_semaphore, #tpu.memory_space<semaphore_mem>>
    tpu.enqueue_dma source(%261 : memref<1x128xf32, #tpu.memory_space<any>>) target(%262 : memref<1x128xf32, #tpu.memory_space<vmem>>) target_semaphore(%264 : memref<!tpu.dma_semaphore, #tpu.memory_space<semaphore_mem>>)
    %c2_i32_175 = arith.constant 2 : i32
    %c0_i32_176 = arith.constant 0 : i32
    %265 = tpu.memref_slice %arg2[%57, %c0_i32_176] : memref<501x128xf32, #tpu.memory_space<any>> -> memref<1x128xf32, #tpu.memory_space<any>>
    %c18_i32 = arith.constant 18 : i32
    %c0_i32_177 = arith.constant 0 : i32
    %266 = tpu.memref_slice %arg4[%c18_i32, %c0_i32_177] : memref<64x128xf32, #tpu.memory_space<vmem>> -> memref<1x128xf32, #tpu.memory_space<vmem>>
    %267 = tpu.memref_slice %arg5[%c2_i32_175] : memref<8x!tpu.dma_semaphore, #tpu.memory_space<semaphore_mem>> -> memref<1x!tpu.dma_semaphore, #tpu.memory_space<semaphore_mem>>
    %268 = tpu.memref_squeeze %267 : memref<1x!tpu.dma_semaphore, #tpu.memory_space<semaphore_mem>> -> memref<!tpu.dma_semaphore, #tpu.memory_space<semaphore_mem>>
    tpu.enqueue_dma source(%265 : memref<1x128xf32, #tpu.memory_space<any>>) target(%266 : memref<1x128xf32, #tpu.memory_space<vmem>>) target_semaphore(%268 : memref<!tpu.dma_semaphore, #tpu.memory_space<semaphore_mem>>)
    %c2_i32_178 = arith.constant 2 : i32
    %c0_i32_179 = arith.constant 0 : i32
    %269 = tpu.memref_slice %arg2[%60, %c0_i32_179] : memref<501x128xf32, #tpu.memory_space<any>> -> memref<1x128xf32, #tpu.memory_space<any>>
    %c19_i32 = arith.constant 19 : i32
    %c0_i32_180 = arith.constant 0 : i32
    %270 = tpu.memref_slice %arg4[%c19_i32, %c0_i32_180] : memref<64x128xf32, #tpu.memory_space<vmem>> -> memref<1x128xf32, #tpu.memory_space<vmem>>
    %271 = tpu.memref_slice %arg5[%c2_i32_178] : memref<8x!tpu.dma_semaphore, #tpu.memory_space<semaphore_mem>> -> memref<1x!tpu.dma_semaphore, #tpu.memory_space<semaphore_mem>>
    %272 = tpu.memref_squeeze %271 : memref<1x!tpu.dma_semaphore, #tpu.memory_space<semaphore_mem>> -> memref<!tpu.dma_semaphore, #tpu.memory_space<semaphore_mem>>
    tpu.enqueue_dma source(%269 : memref<1x128xf32, #tpu.memory_space<any>>) target(%270 : memref<1x128xf32, #tpu.memory_space<vmem>>) target_semaphore(%272 : memref<!tpu.dma_semaphore, #tpu.memory_space<semaphore_mem>>)
    %c2_i32_181 = arith.constant 2 : i32
    %c0_i32_182 = arith.constant 0 : i32
    %273 = tpu.memref_slice %arg2[%63, %c0_i32_182] : memref<501x128xf32, #tpu.memory_space<any>> -> memref<1x128xf32, #tpu.memory_space<any>>
    %c20_i32 = arith.constant 20 : i32
    %c0_i32_183 = arith.constant 0 : i32
    %274 = tpu.memref_slice %arg4[%c20_i32, %c0_i32_183] : memref<64x128xf32, #tpu.memory_space<vmem>> -> memref<1x128xf32, #tpu.memory_space<vmem>>
    %275 = tpu.memref_slice %arg5[%c2_i32_181] : memref<8x!tpu.dma_semaphore, #tpu.memory_space<semaphore_mem>> -> memref<1x!tpu.dma_semaphore, #tpu.memory_space<semaphore_mem>>
    %276 = tpu.memref_squeeze %275 : memref<1x!tpu.dma_semaphore, #tpu.memory_space<semaphore_mem>> -> memref<!tpu.dma_semaphore, #tpu.memory_space<semaphore_mem>>
    tpu.enqueue_dma source(%273 : memref<1x128xf32, #tpu.memory_space<any>>) target(%274 : memref<1x128xf32, #tpu.memory_space<vmem>>) target_semaphore(%276 : memref<!tpu.dma_semaphore, #tpu.memory_space<semaphore_mem>>)
    %c2_i32_184 = arith.constant 2 : i32
    %c0_i32_185 = arith.constant 0 : i32
    %277 = tpu.memref_slice %arg2[%66, %c0_i32_185] : memref<501x128xf32, #tpu.memory_space<any>> -> memref<1x128xf32, #tpu.memory_space<any>>
    %c21_i32 = arith.constant 21 : i32
    %c0_i32_186 = arith.constant 0 : i32
    %278 = tpu.memref_slice %arg4[%c21_i32, %c0_i32_186] : memref<64x128xf32, #tpu.memory_space<vmem>> -> memref<1x128xf32, #tpu.memory_space<vmem>>
    %279 = tpu.memref_slice %arg5[%c2_i32_184] : memref<8x!tpu.dma_semaphore, #tpu.memory_space<semaphore_mem>> -> memref<1x!tpu.dma_semaphore, #tpu.memory_space<semaphore_mem>>
    %280 = tpu.memref_squeeze %279 : memref<1x!tpu.dma_semaphore, #tpu.memory_space<semaphore_mem>> -> memref<!tpu.dma_semaphore, #tpu.memory_space<semaphore_mem>>
    tpu.enqueue_dma source(%277 : memref<1x128xf32, #tpu.memory_space<any>>) target(%278 : memref<1x128xf32, #tpu.memory_space<vmem>>) target_semaphore(%280 : memref<!tpu.dma_semaphore, #tpu.memory_space<semaphore_mem>>)
    %c2_i32_187 = arith.constant 2 : i32
    %c0_i32_188 = arith.constant 0 : i32
    %281 = tpu.memref_slice %arg2[%69, %c0_i32_188] : memref<501x128xf32, #tpu.memory_space<any>> -> memref<1x128xf32, #tpu.memory_space<any>>
    %c22_i32 = arith.constant 22 : i32
    %c0_i32_189 = arith.constant 0 : i32
    %282 = tpu.memref_slice %arg4[%c22_i32, %c0_i32_189] : memref<64x128xf32, #tpu.memory_space<vmem>> -> memref<1x128xf32, #tpu.memory_space<vmem>>
    %283 = tpu.memref_slice %arg5[%c2_i32_187] : memref<8x!tpu.dma_semaphore, #tpu.memory_space<semaphore_mem>> -> memref<1x!tpu.dma_semaphore, #tpu.memory_space<semaphore_mem>>
    %284 = tpu.memref_squeeze %283 : memref<1x!tpu.dma_semaphore, #tpu.memory_space<semaphore_mem>> -> memref<!tpu.dma_semaphore, #tpu.memory_space<semaphore_mem>>
    tpu.enqueue_dma source(%281 : memref<1x128xf32, #tpu.memory_space<any>>) target(%282 : memref<1x128xf32, #tpu.memory_space<vmem>>) target_semaphore(%284 : memref<!tpu.dma_semaphore, #tpu.memory_space<semaphore_mem>>)
    %c2_i32_190 = arith.constant 2 : i32
    %c0_i32_191 = arith.constant 0 : i32
    %285 = tpu.memref_slice %arg2[%72, %c0_i32_191] : memref<501x128xf32, #tpu.memory_space<any>> -> memref<1x128xf32, #tpu.memory_space<any>>
    %c23_i32 = arith.constant 23 : i32
    %c0_i32_192 = arith.constant 0 : i32
    %286 = tpu.memref_slice %arg4[%c23_i32, %c0_i32_192] : memref<64x128xf32, #tpu.memory_space<vmem>> -> memref<1x128xf32, #tpu.memory_space<vmem>>
    %287 = tpu.memref_slice %arg5[%c2_i32_190] : memref<8x!tpu.dma_semaphore, #tpu.memory_space<semaphore_mem>> -> memref<1x!tpu.dma_semaphore, #tpu.memory_space<semaphore_mem>>
    %288 = tpu.memref_squeeze %287 : memref<1x!tpu.dma_semaphore, #tpu.memory_space<semaphore_mem>> -> memref<!tpu.dma_semaphore, #tpu.memory_space<semaphore_mem>>
    tpu.enqueue_dma source(%285 : memref<1x128xf32, #tpu.memory_space<any>>) target(%286 : memref<1x128xf32, #tpu.memory_space<vmem>>) target_semaphore(%288 : memref<!tpu.dma_semaphore, #tpu.memory_space<semaphore_mem>>)
    %c3_i32_193 = arith.constant 3 : i32
    %c0_i32_194 = arith.constant 0 : i32
    %289 = tpu.memref_slice %arg2[%75, %c0_i32_194] : memref<501x128xf32, #tpu.memory_space<any>> -> memref<1x128xf32, #tpu.memory_space<any>>
    %c24_i32 = arith.constant 24 : i32
    %c0_i32_195 = arith.constant 0 : i32
    %290 = tpu.memref_slice %arg4[%c24_i32, %c0_i32_195] : memref<64x128xf32, #tpu.memory_space<vmem>> -> memref<1x128xf32, #tpu.memory_space<vmem>>
    %291 = tpu.memref_slice %arg5[%c3_i32_193] : memref<8x!tpu.dma_semaphore, #tpu.memory_space<semaphore_mem>> -> memref<1x!tpu.dma_semaphore, #tpu.memory_space<semaphore_mem>>
    %292 = tpu.memref_squeeze %291 : memref<1x!tpu.dma_semaphore, #tpu.memory_space<semaphore_mem>> -> memref<!tpu.dma_semaphore, #tpu.memory_space<semaphore_mem>>
    tpu.enqueue_dma source(%289 : memref<1x128xf32, #tpu.memory_space<any>>) target(%290 : memref<1x128xf32, #tpu.memory_space<vmem>>) target_semaphore(%292 : memref<!tpu.dma_semaphore, #tpu.memory_space<semaphore_mem>>)
    %c3_i32_196 = arith.constant 3 : i32
    %c0_i32_197 = arith.constant 0 : i32
    %293 = tpu.memref_slice %arg2[%78, %c0_i32_197] : memref<501x128xf32, #tpu.memory_space<any>> -> memref<1x128xf32, #tpu.memory_space<any>>
    %c25_i32 = arith.constant 25 : i32
    %c0_i32_198 = arith.constant 0 : i32
    %294 = tpu.memref_slice %arg4[%c25_i32, %c0_i32_198] : memref<64x128xf32, #tpu.memory_space<vmem>> -> memref<1x128xf32, #tpu.memory_space<vmem>>
    %295 = tpu.memref_slice %arg5[%c3_i32_196] : memref<8x!tpu.dma_semaphore, #tpu.memory_space<semaphore_mem>> -> memref<1x!tpu.dma_semaphore, #tpu.memory_space<semaphore_mem>>
    %296 = tpu.memref_squeeze %295 : memref<1x!tpu.dma_semaphore, #tpu.memory_space<semaphore_mem>> -> memref<!tpu.dma_semaphore, #tpu.memory_space<semaphore_mem>>
    tpu.enqueue_dma source(%293 : memref<1x128xf32, #tpu.memory_space<any>>) target(%294 : memref<1x128xf32, #tpu.memory_space<vmem>>) target_semaphore(%296 : memref<!tpu.dma_semaphore, #tpu.memory_space<semaphore_mem>>)
    %c3_i32_199 = arith.constant 3 : i32
    %c0_i32_200 = arith.constant 0 : i32
    %297 = tpu.memref_slice %arg2[%81, %c0_i32_200] : memref<501x128xf32, #tpu.memory_space<any>> -> memref<1x128xf32, #tpu.memory_space<any>>
    %c26_i32 = arith.constant 26 : i32
    %c0_i32_201 = arith.constant 0 : i32
    %298 = tpu.memref_slice %arg4[%c26_i32, %c0_i32_201] : memref<64x128xf32, #tpu.memory_space<vmem>> -> memref<1x128xf32, #tpu.memory_space<vmem>>
    %299 = tpu.memref_slice %arg5[%c3_i32_199] : memref<8x!tpu.dma_semaphore, #tpu.memory_space<semaphore_mem>> -> memref<1x!tpu.dma_semaphore, #tpu.memory_space<semaphore_mem>>
    %300 = tpu.memref_squeeze %299 : memref<1x!tpu.dma_semaphore, #tpu.memory_space<semaphore_mem>> -> memref<!tpu.dma_semaphore, #tpu.memory_space<semaphore_mem>>
    tpu.enqueue_dma source(%297 : memref<1x128xf32, #tpu.memory_space<any>>) target(%298 : memref<1x128xf32, #tpu.memory_space<vmem>>) target_semaphore(%300 : memref<!tpu.dma_semaphore, #tpu.memory_space<semaphore_mem>>)
    %c3_i32_202 = arith.constant 3 : i32
    %c0_i32_203 = arith.constant 0 : i32
    %301 = tpu.memref_slice %arg2[%84, %c0_i32_203] : memref<501x128xf32, #tpu.memory_space<any>> -> memref<1x128xf32, #tpu.memory_space<any>>
    %c27_i32 = arith.constant 27 : i32
    %c0_i32_204 = arith.constant 0 : i32
    %302 = tpu.memref_slice %arg4[%c27_i32, %c0_i32_204] : memref<64x128xf32, #tpu.memory_space<vmem>> -> memref<1x128xf32, #tpu.memory_space<vmem>>
    %303 = tpu.memref_slice %arg5[%c3_i32_202] : memref<8x!tpu.dma_semaphore, #tpu.memory_space<semaphore_mem>> -> memref<1x!tpu.dma_semaphore, #tpu.memory_space<semaphore_mem>>
    %304 = tpu.memref_squeeze %303 : memref<1x!tpu.dma_semaphore, #tpu.memory_space<semaphore_mem>> -> memref<!tpu.dma_semaphore, #tpu.memory_space<semaphore_mem>>
    tpu.enqueue_dma source(%301 : memref<1x128xf32, #tpu.memory_space<any>>) target(%302 : memref<1x128xf32, #tpu.memory_space<vmem>>) target_semaphore(%304 : memref<!tpu.dma_semaphore, #tpu.memory_space<semaphore_mem>>)
    %c3_i32_205 = arith.constant 3 : i32
    %c0_i32_206 = arith.constant 0 : i32
    %305 = tpu.memref_slice %arg2[%87, %c0_i32_206] : memref<501x128xf32, #tpu.memory_space<any>> -> memref<1x128xf32, #tpu.memory_space<any>>
    %c28_i32 = arith.constant 28 : i32
    %c0_i32_207 = arith.constant 0 : i32
    %306 = tpu.memref_slice %arg4[%c28_i32, %c0_i32_207] : memref<64x128xf32, #tpu.memory_space<vmem>> -> memref<1x128xf32, #tpu.memory_space<vmem>>
    %307 = tpu.memref_slice %arg5[%c3_i32_205] : memref<8x!tpu.dma_semaphore, #tpu.memory_space<semaphore_mem>> -> memref<1x!tpu.dma_semaphore, #tpu.memory_space<semaphore_mem>>
    %308 = tpu.memref_squeeze %307 : memref<1x!tpu.dma_semaphore, #tpu.memory_space<semaphore_mem>> -> memref<!tpu.dma_semaphore, #tpu.memory_space<semaphore_mem>>
    tpu.enqueue_dma source(%305 : memref<1x128xf32, #tpu.memory_space<any>>) target(%306 : memref<1x128xf32, #tpu.memory_space<vmem>>) target_semaphore(%308 : memref<!tpu.dma_semaphore, #tpu.memory_space<semaphore_mem>>)
    %c3_i32_208 = arith.constant 3 : i32
    %c0_i32_209 = arith.constant 0 : i32
    %309 = tpu.memref_slice %arg2[%90, %c0_i32_209] : memref<501x128xf32, #tpu.memory_space<any>> -> memref<1x128xf32, #tpu.memory_space<any>>
    %c29_i32 = arith.constant 29 : i32
    %c0_i32_210 = arith.constant 0 : i32
    %310 = tpu.memref_slice %arg4[%c29_i32, %c0_i32_210] : memref<64x128xf32, #tpu.memory_space<vmem>> -> memref<1x128xf32, #tpu.memory_space<vmem>>
    %311 = tpu.memref_slice %arg5[%c3_i32_208] : memref<8x!tpu.dma_semaphore, #tpu.memory_space<semaphore_mem>> -> memref<1x!tpu.dma_semaphore, #tpu.memory_space<semaphore_mem>>
    %312 = tpu.memref_squeeze %311 : memref<1x!tpu.dma_semaphore, #tpu.memory_space<semaphore_mem>> -> memref<!tpu.dma_semaphore, #tpu.memory_space<semaphore_mem>>
    tpu.enqueue_dma source(%309 : memref<1x128xf32, #tpu.memory_space<any>>) target(%310 : memref<1x128xf32, #tpu.memory_space<vmem>>) target_semaphore(%312 : memref<!tpu.dma_semaphore, #tpu.memory_space<semaphore_mem>>)
    %c3_i32_211 = arith.constant 3 : i32
    %c0_i32_212 = arith.constant 0 : i32
    %313 = tpu.memref_slice %arg2[%93, %c0_i32_212] : memref<501x128xf32, #tpu.memory_space<any>> -> memref<1x128xf32, #tpu.memory_space<any>>
    %c30_i32 = arith.constant 30 : i32
    %c0_i32_213 = arith.constant 0 : i32
    %314 = tpu.memref_slice %arg4[%c30_i32, %c0_i32_213] : memref<64x128xf32, #tpu.memory_space<vmem>> -> memref<1x128xf32, #tpu.memory_space<vmem>>
    %315 = tpu.memref_slice %arg5[%c3_i32_211] : memref<8x!tpu.dma_semaphore, #tpu.memory_space<semaphore_mem>> -> memref<1x!tpu.dma_semaphore, #tpu.memory_space<semaphore_mem>>
    %316 = tpu.memref_squeeze %315 : memref<1x!tpu.dma_semaphore, #tpu.memory_space<semaphore_mem>> -> memref<!tpu.dma_semaphore, #tpu.memory_space<semaphore_mem>>
    tpu.enqueue_dma source(%313 : memref<1x128xf32, #tpu.memory_space<any>>) target(%314 : memref<1x128xf32, #tpu.memory_space<vmem>>) target_semaphore(%316 : memref<!tpu.dma_semaphore, #tpu.memory_space<semaphore_mem>>)
    %c3_i32_214 = arith.constant 3 : i32
    %c0_i32_215 = arith.constant 0 : i32
    %317 = tpu.memref_slice %arg2[%96, %c0_i32_215] : memref<501x128xf32, #tpu.memory_space<any>> -> memref<1x128xf32, #tpu.memory_space<any>>
    %c31_i32 = arith.constant 31 : i32
    %c0_i32_216 = arith.constant 0 : i32
    %318 = tpu.memref_slice %arg4[%c31_i32, %c0_i32_216] : memref<64x128xf32, #tpu.memory_space<vmem>> -> memref<1x128xf32, #tpu.memory_space<vmem>>
    %319 = tpu.memref_slice %arg5[%c3_i32_214] : memref<8x!tpu.dma_semaphore, #tpu.memory_space<semaphore_mem>> -> memref<1x!tpu.dma_semaphore, #tpu.memory_space<semaphore_mem>>
    %320 = tpu.memref_squeeze %319 : memref<1x!tpu.dma_semaphore, #tpu.memory_space<semaphore_mem>> -> memref<!tpu.dma_semaphore, #tpu.memory_space<semaphore_mem>>
    tpu.enqueue_dma source(%317 : memref<1x128xf32, #tpu.memory_space<any>>) target(%318 : memref<1x128xf32, #tpu.memory_space<vmem>>) target_semaphore(%320 : memref<!tpu.dma_semaphore, #tpu.memory_space<semaphore_mem>>)
    %c4_i32_217 = arith.constant 4 : i32
    %c0_i32_218 = arith.constant 0 : i32
    %321 = tpu.memref_slice %arg2[%99, %c0_i32_218] : memref<501x128xf32, #tpu.memory_space<any>> -> memref<1x128xf32, #tpu.memory_space<any>>
    %c32_i32 = arith.constant 32 : i32
    %c0_i32_219 = arith.constant 0 : i32
    %322 = tpu.memref_slice %arg4[%c32_i32, %c0_i32_219] : memref<64x128xf32, #tpu.memory_space<vmem>> -> memref<1x128xf32, #tpu.memory_space<vmem>>
    %323 = tpu.memref_slice %arg5[%c4_i32_217] : memref<8x!tpu.dma_semaphore, #tpu.memory_space<semaphore_mem>> -> memref<1x!tpu.dma_semaphore, #tpu.memory_space<semaphore_mem>>
    %324 = tpu.memref_squeeze %323 : memref<1x!tpu.dma_semaphore, #tpu.memory_space<semaphore_mem>> -> memref<!tpu.dma_semaphore, #tpu.memory_space<semaphore_mem>>
    tpu.enqueue_dma source(%321 : memref<1x128xf32, #tpu.memory_space<any>>) target(%322 : memref<1x128xf32, #tpu.memory_space<vmem>>) target_semaphore(%324 : memref<!tpu.dma_semaphore, #tpu.memory_space<semaphore_mem>>)
    %c4_i32_220 = arith.constant 4 : i32
    %c0_i32_221 = arith.constant 0 : i32
    %325 = tpu.memref_slice %arg2[%102, %c0_i32_221] : memref<501x128xf32, #tpu.memory_space<any>> -> memref<1x128xf32, #tpu.memory_space<any>>
    %c33_i32 = arith.constant 33 : i32
    %c0_i32_222 = arith.constant 0 : i32
    %326 = tpu.memref_slice %arg4[%c33_i32, %c0_i32_222] : memref<64x128xf32, #tpu.memory_space<vmem>> -> memref<1x128xf32, #tpu.memory_space<vmem>>
    %327 = tpu.memref_slice %arg5[%c4_i32_220] : memref<8x!tpu.dma_semaphore, #tpu.memory_space<semaphore_mem>> -> memref<1x!tpu.dma_semaphore, #tpu.memory_space<semaphore_mem>>
    %328 = tpu.memref_squeeze %327 : memref<1x!tpu.dma_semaphore, #tpu.memory_space<semaphore_mem>> -> memref<!tpu.dma_semaphore, #tpu.memory_space<semaphore_mem>>
    tpu.enqueue_dma source(%325 : memref<1x128xf32, #tpu.memory_space<any>>) target(%326 : memref<1x128xf32, #tpu.memory_space<vmem>>) target_semaphore(%328 : memref<!tpu.dma_semaphore, #tpu.memory_space<semaphore_mem>>)
    %c4_i32_223 = arith.constant 4 : i32
    %c0_i32_224 = arith.constant 0 : i32
    %329 = tpu.memref_slice %arg2[%105, %c0_i32_224] : memref<501x128xf32, #tpu.memory_space<any>> -> memref<1x128xf32, #tpu.memory_space<any>>
    %c34_i32 = arith.constant 34 : i32
    %c0_i32_225 = arith.constant 0 : i32
    %330 = tpu.memref_slice %arg4[%c34_i32, %c0_i32_225] : memref<64x128xf32, #tpu.memory_space<vmem>> -> memref<1x128xf32, #tpu.memory_space<vmem>>
    %331 = tpu.memref_slice %arg5[%c4_i32_223] : memref<8x!tpu.dma_semaphore, #tpu.memory_space<semaphore_mem>> -> memref<1x!tpu.dma_semaphore, #tpu.memory_space<semaphore_mem>>
    %332 = tpu.memref_squeeze %331 : memref<1x!tpu.dma_semaphore, #tpu.memory_space<semaphore_mem>> -> memref<!tpu.dma_semaphore, #tpu.memory_space<semaphore_mem>>
    tpu.enqueue_dma source(%329 : memref<1x128xf32, #tpu.memory_space<any>>) target(%330 : memref<1x128xf32, #tpu.memory_space<vmem>>) target_semaphore(%332 : memref<!tpu.dma_semaphore, #tpu.memory_space<semaphore_mem>>)
    %c4_i32_226 = arith.constant 4 : i32
    %c0_i32_227 = arith.constant 0 : i32
    %333 = tpu.memref_slice %arg2[%108, %c0_i32_227] : memref<501x128xf32, #tpu.memory_space<any>> -> memref<1x128xf32, #tpu.memory_space<any>>
    %c35_i32 = arith.constant 35 : i32
    %c0_i32_228 = arith.constant 0 : i32
    %334 = tpu.memref_slice %arg4[%c35_i32, %c0_i32_228] : memref<64x128xf32, #tpu.memory_space<vmem>> -> memref<1x128xf32, #tpu.memory_space<vmem>>
    %335 = tpu.memref_slice %arg5[%c4_i32_226] : memref<8x!tpu.dma_semaphore, #tpu.memory_space<semaphore_mem>> -> memref<1x!tpu.dma_semaphore, #tpu.memory_space<semaphore_mem>>
    %336 = tpu.memref_squeeze %335 : memref<1x!tpu.dma_semaphore, #tpu.memory_space<semaphore_mem>> -> memref<!tpu.dma_semaphore, #tpu.memory_space<semaphore_mem>>
    tpu.enqueue_dma source(%333 : memref<1x128xf32, #tpu.memory_space<any>>) target(%334 : memref<1x128xf32, #tpu.memory_space<vmem>>) target_semaphore(%336 : memref<!tpu.dma_semaphore, #tpu.memory_space<semaphore_mem>>)
    %c4_i32_229 = arith.constant 4 : i32
    %c0_i32_230 = arith.constant 0 : i32
    %337 = tpu.memref_slice %arg2[%111, %c0_i32_230] : memref<501x128xf32, #tpu.memory_space<any>> -> memref<1x128xf32, #tpu.memory_space<any>>
    %c36_i32 = arith.constant 36 : i32
    %c0_i32_231 = arith.constant 0 : i32
    %338 = tpu.memref_slice %arg4[%c36_i32, %c0_i32_231] : memref<64x128xf32, #tpu.memory_space<vmem>> -> memref<1x128xf32, #tpu.memory_space<vmem>>
    %339 = tpu.memref_slice %arg5[%c4_i32_229] : memref<8x!tpu.dma_semaphore, #tpu.memory_space<semaphore_mem>> -> memref<1x!tpu.dma_semaphore, #tpu.memory_space<semaphore_mem>>
    %340 = tpu.memref_squeeze %339 : memref<1x!tpu.dma_semaphore, #tpu.memory_space<semaphore_mem>> -> memref<!tpu.dma_semaphore, #tpu.memory_space<semaphore_mem>>
    tpu.enqueue_dma source(%337 : memref<1x128xf32, #tpu.memory_space<any>>) target(%338 : memref<1x128xf32, #tpu.memory_space<vmem>>) target_semaphore(%340 : memref<!tpu.dma_semaphore, #tpu.memory_space<semaphore_mem>>)
    %c4_i32_232 = arith.constant 4 : i32
    %c0_i32_233 = arith.constant 0 : i32
    %341 = tpu.memref_slice %arg2[%114, %c0_i32_233] : memref<501x128xf32, #tpu.memory_space<any>> -> memref<1x128xf32, #tpu.memory_space<any>>
    %c37_i32 = arith.constant 37 : i32
    %c0_i32_234 = arith.constant 0 : i32
    %342 = tpu.memref_slice %arg4[%c37_i32, %c0_i32_234] : memref<64x128xf32, #tpu.memory_space<vmem>> -> memref<1x128xf32, #tpu.memory_space<vmem>>
    %343 = tpu.memref_slice %arg5[%c4_i32_232] : memref<8x!tpu.dma_semaphore, #tpu.memory_space<semaphore_mem>> -> memref<1x!tpu.dma_semaphore, #tpu.memory_space<semaphore_mem>>
    %344 = tpu.memref_squeeze %343 : memref<1x!tpu.dma_semaphore, #tpu.memory_space<semaphore_mem>> -> memref<!tpu.dma_semaphore, #tpu.memory_space<semaphore_mem>>
    tpu.enqueue_dma source(%341 : memref<1x128xf32, #tpu.memory_space<any>>) target(%342 : memref<1x128xf32, #tpu.memory_space<vmem>>) target_semaphore(%344 : memref<!tpu.dma_semaphore, #tpu.memory_space<semaphore_mem>>)
    %c4_i32_235 = arith.constant 4 : i32
    %c0_i32_236 = arith.constant 0 : i32
    %345 = tpu.memref_slice %arg2[%117, %c0_i32_236] : memref<501x128xf32, #tpu.memory_space<any>> -> memref<1x128xf32, #tpu.memory_space<any>>
    %c38_i32 = arith.constant 38 : i32
    %c0_i32_237 = arith.constant 0 : i32
    %346 = tpu.memref_slice %arg4[%c38_i32, %c0_i32_237] : memref<64x128xf32, #tpu.memory_space<vmem>> -> memref<1x128xf32, #tpu.memory_space<vmem>>
    %347 = tpu.memref_slice %arg5[%c4_i32_235] : memref<8x!tpu.dma_semaphore, #tpu.memory_space<semaphore_mem>> -> memref<1x!tpu.dma_semaphore, #tpu.memory_space<semaphore_mem>>
    %348 = tpu.memref_squeeze %347 : memref<1x!tpu.dma_semaphore, #tpu.memory_space<semaphore_mem>> -> memref<!tpu.dma_semaphore, #tpu.memory_space<semaphore_mem>>
    tpu.enqueue_dma source(%345 : memref<1x128xf32, #tpu.memory_space<any>>) target(%346 : memref<1x128xf32, #tpu.memory_space<vmem>>) target_semaphore(%348 : memref<!tpu.dma_semaphore, #tpu.memory_space<semaphore_mem>>)
    %c4_i32_238 = arith.constant 4 : i32
    %c0_i32_239 = arith.constant 0 : i32
    %349 = tpu.memref_slice %arg2[%120, %c0_i32_239] : memref<501x128xf32, #tpu.memory_space<any>> -> memref<1x128xf32, #tpu.memory_space<any>>
    %c39_i32 = arith.constant 39 : i32
    %c0_i32_240 = arith.constant 0 : i32
    %350 = tpu.memref_slice %arg4[%c39_i32, %c0_i32_240] : memref<64x128xf32, #tpu.memory_space<vmem>> -> memref<1x128xf32, #tpu.memory_space<vmem>>
    %351 = tpu.memref_slice %arg5[%c4_i32_238] : memref<8x!tpu.dma_semaphore, #tpu.memory_space<semaphore_mem>> -> memref<1x!tpu.dma_semaphore, #tpu.memory_space<semaphore_mem>>
    %352 = tpu.memref_squeeze %351 : memref<1x!tpu.dma_semaphore, #tpu.memory_space<semaphore_mem>> -> memref<!tpu.dma_semaphore, #tpu.memory_space<semaphore_mem>>
    tpu.enqueue_dma source(%349 : memref<1x128xf32, #tpu.memory_space<any>>) target(%350 : memref<1x128xf32, #tpu.memory_space<vmem>>) target_semaphore(%352 : memref<!tpu.dma_semaphore, #tpu.memory_space<semaphore_mem>>)
    %c5_i32_241 = arith.constant 5 : i32
    %c0_i32_242 = arith.constant 0 : i32
    %353 = tpu.memref_slice %arg2[%123, %c0_i32_242] : memref<501x128xf32, #tpu.memory_space<any>> -> memref<1x128xf32, #tpu.memory_space<any>>
    %c40_i32 = arith.constant 40 : i32
    %c0_i32_243 = arith.constant 0 : i32
    %354 = tpu.memref_slice %arg4[%c40_i32, %c0_i32_243] : memref<64x128xf32, #tpu.memory_space<vmem>> -> memref<1x128xf32, #tpu.memory_space<vmem>>
    %355 = tpu.memref_slice %arg5[%c5_i32_241] : memref<8x!tpu.dma_semaphore, #tpu.memory_space<semaphore_mem>> -> memref<1x!tpu.dma_semaphore, #tpu.memory_space<semaphore_mem>>
    %356 = tpu.memref_squeeze %355 : memref<1x!tpu.dma_semaphore, #tpu.memory_space<semaphore_mem>> -> memref<!tpu.dma_semaphore, #tpu.memory_space<semaphore_mem>>
    tpu.enqueue_dma source(%353 : memref<1x128xf32, #tpu.memory_space<any>>) target(%354 : memref<1x128xf32, #tpu.memory_space<vmem>>) target_semaphore(%356 : memref<!tpu.dma_semaphore, #tpu.memory_space<semaphore_mem>>)
    %c5_i32_244 = arith.constant 5 : i32
    %c0_i32_245 = arith.constant 0 : i32
    %357 = tpu.memref_slice %arg2[%126, %c0_i32_245] : memref<501x128xf32, #tpu.memory_space<any>> -> memref<1x128xf32, #tpu.memory_space<any>>
    %c41_i32 = arith.constant 41 : i32
    %c0_i32_246 = arith.constant 0 : i32
    %358 = tpu.memref_slice %arg4[%c41_i32, %c0_i32_246] : memref<64x128xf32, #tpu.memory_space<vmem>> -> memref<1x128xf32, #tpu.memory_space<vmem>>
    %359 = tpu.memref_slice %arg5[%c5_i32_244] : memref<8x!tpu.dma_semaphore, #tpu.memory_space<semaphore_mem>> -> memref<1x!tpu.dma_semaphore, #tpu.memory_space<semaphore_mem>>
    %360 = tpu.memref_squeeze %359 : memref<1x!tpu.dma_semaphore, #tpu.memory_space<semaphore_mem>> -> memref<!tpu.dma_semaphore, #tpu.memory_space<semaphore_mem>>
    tpu.enqueue_dma source(%357 : memref<1x128xf32, #tpu.memory_space<any>>) target(%358 : memref<1x128xf32, #tpu.memory_space<vmem>>) target_semaphore(%360 : memref<!tpu.dma_semaphore, #tpu.memory_space<semaphore_mem>>)
    %c5_i32_247 = arith.constant 5 : i32
    %c0_i32_248 = arith.constant 0 : i32
    %361 = tpu.memref_slice %arg2[%129, %c0_i32_248] : memref<501x128xf32, #tpu.memory_space<any>> -> memref<1x128xf32, #tpu.memory_space<any>>
    %c42_i32 = arith.constant 42 : i32
    %c0_i32_249 = arith.constant 0 : i32
    %362 = tpu.memref_slice %arg4[%c42_i32, %c0_i32_249] : memref<64x128xf32, #tpu.memory_space<vmem>> -> memref<1x128xf32, #tpu.memory_space<vmem>>
    %363 = tpu.memref_slice %arg5[%c5_i32_247] : memref<8x!tpu.dma_semaphore, #tpu.memory_space<semaphore_mem>> -> memref<1x!tpu.dma_semaphore, #tpu.memory_space<semaphore_mem>>
    %364 = tpu.memref_squeeze %363 : memref<1x!tpu.dma_semaphore, #tpu.memory_space<semaphore_mem>> -> memref<!tpu.dma_semaphore, #tpu.memory_space<semaphore_mem>>
    tpu.enqueue_dma source(%361 : memref<1x128xf32, #tpu.memory_space<any>>) target(%362 : memref<1x128xf32, #tpu.memory_space<vmem>>) target_semaphore(%364 : memref<!tpu.dma_semaphore, #tpu.memory_space<semaphore_mem>>)
    %c5_i32_250 = arith.constant 5 : i32
    %c0_i32_251 = arith.constant 0 : i32
    %365 = tpu.memref_slice %arg2[%132, %c0_i32_251] : memref<501x128xf32, #tpu.memory_space<any>> -> memref<1x128xf32, #tpu.memory_space<any>>
    %c43_i32 = arith.constant 43 : i32
    %c0_i32_252 = arith.constant 0 : i32
    %366 = tpu.memref_slice %arg4[%c43_i32, %c0_i32_252] : memref<64x128xf32, #tpu.memory_space<vmem>> -> memref<1x128xf32, #tpu.memory_space<vmem>>
    %367 = tpu.memref_slice %arg5[%c5_i32_250] : memref<8x!tpu.dma_semaphore, #tpu.memory_space<semaphore_mem>> -> memref<1x!tpu.dma_semaphore, #tpu.memory_space<semaphore_mem>>
    %368 = tpu.memref_squeeze %367 : memref<1x!tpu.dma_semaphore, #tpu.memory_space<semaphore_mem>> -> memref<!tpu.dma_semaphore, #tpu.memory_space<semaphore_mem>>
    tpu.enqueue_dma source(%365 : memref<1x128xf32, #tpu.memory_space<any>>) target(%366 : memref<1x128xf32, #tpu.memory_space<vmem>>) target_semaphore(%368 : memref<!tpu.dma_semaphore, #tpu.memory_space<semaphore_mem>>)
    %c5_i32_253 = arith.constant 5 : i32
    %c0_i32_254 = arith.constant 0 : i32
    %369 = tpu.memref_slice %arg2[%135, %c0_i32_254] : memref<501x128xf32, #tpu.memory_space<any>> -> memref<1x128xf32, #tpu.memory_space<any>>
    %c44_i32 = arith.constant 44 : i32
    %c0_i32_255 = arith.constant 0 : i32
    %370 = tpu.memref_slice %arg4[%c44_i32, %c0_i32_255] : memref<64x128xf32, #tpu.memory_space<vmem>> -> memref<1x128xf32, #tpu.memory_space<vmem>>
    %371 = tpu.memref_slice %arg5[%c5_i32_253] : memref<8x!tpu.dma_semaphore, #tpu.memory_space<semaphore_mem>> -> memref<1x!tpu.dma_semaphore, #tpu.memory_space<semaphore_mem>>
    %372 = tpu.memref_squeeze %371 : memref<1x!tpu.dma_semaphore, #tpu.memory_space<semaphore_mem>> -> memref<!tpu.dma_semaphore, #tpu.memory_space<semaphore_mem>>
    tpu.enqueue_dma source(%369 : memref<1x128xf32, #tpu.memory_space<any>>) target(%370 : memref<1x128xf32, #tpu.memory_space<vmem>>) target_semaphore(%372 : memref<!tpu.dma_semaphore, #tpu.memory_space<semaphore_mem>>)
    %c5_i32_256 = arith.constant 5 : i32
    %c0_i32_257 = arith.constant 0 : i32
    %373 = tpu.memref_slice %arg2[%138, %c0_i32_257] : memref<501x128xf32, #tpu.memory_space<any>> -> memref<1x128xf32, #tpu.memory_space<any>>
    %c45_i32 = arith.constant 45 : i32
    %c0_i32_258 = arith.constant 0 : i32
    %374 = tpu.memref_slice %arg4[%c45_i32, %c0_i32_258] : memref<64x128xf32, #tpu.memory_space<vmem>> -> memref<1x128xf32, #tpu.memory_space<vmem>>
    %375 = tpu.memref_slice %arg5[%c5_i32_256] : memref<8x!tpu.dma_semaphore, #tpu.memory_space<semaphore_mem>> -> memref<1x!tpu.dma_semaphore, #tpu.memory_space<semaphore_mem>>
    %376 = tpu.memref_squeeze %375 : memref<1x!tpu.dma_semaphore, #tpu.memory_space<semaphore_mem>> -> memref<!tpu.dma_semaphore, #tpu.memory_space<semaphore_mem>>
    tpu.enqueue_dma source(%373 : memref<1x128xf32, #tpu.memory_space<any>>) target(%374 : memref<1x128xf32, #tpu.memory_space<vmem>>) target_semaphore(%376 : memref<!tpu.dma_semaphore, #tpu.memory_space<semaphore_mem>>)
    %c5_i32_259 = arith.constant 5 : i32
    %c0_i32_260 = arith.constant 0 : i32
    %377 = tpu.memref_slice %arg2[%141, %c0_i32_260] : memref<501x128xf32, #tpu.memory_space<any>> -> memref<1x128xf32, #tpu.memory_space<any>>
    %c46_i32 = arith.constant 46 : i32
    %c0_i32_261 = arith.constant 0 : i32
    %378 = tpu.memref_slice %arg4[%c46_i32, %c0_i32_261] : memref<64x128xf32, #tpu.memory_space<vmem>> -> memref<1x128xf32, #tpu.memory_space<vmem>>
    %379 = tpu.memref_slice %arg5[%c5_i32_259] : memref<8x!tpu.dma_semaphore, #tpu.memory_space<semaphore_mem>> -> memref<1x!tpu.dma_semaphore, #tpu.memory_space<semaphore_mem>>
    %380 = tpu.memref_squeeze %379 : memref<1x!tpu.dma_semaphore, #tpu.memory_space<semaphore_mem>> -> memref<!tpu.dma_semaphore, #tpu.memory_space<semaphore_mem>>
    tpu.enqueue_dma source(%377 : memref<1x128xf32, #tpu.memory_space<any>>) target(%378 : memref<1x128xf32, #tpu.memory_space<vmem>>) target_semaphore(%380 : memref<!tpu.dma_semaphore, #tpu.memory_space<semaphore_mem>>)
    %c5_i32_262 = arith.constant 5 : i32
    %c0_i32_263 = arith.constant 0 : i32
    %381 = tpu.memref_slice %arg2[%144, %c0_i32_263] : memref<501x128xf32, #tpu.memory_space<any>> -> memref<1x128xf32, #tpu.memory_space<any>>
    %c47_i32 = arith.constant 47 : i32
    %c0_i32_264 = arith.constant 0 : i32
    %382 = tpu.memref_slice %arg4[%c47_i32, %c0_i32_264] : memref<64x128xf32, #tpu.memory_space<vmem>> -> memref<1x128xf32, #tpu.memory_space<vmem>>
    %383 = tpu.memref_slice %arg5[%c5_i32_262] : memref<8x!tpu.dma_semaphore, #tpu.memory_space<semaphore_mem>> -> memref<1x!tpu.dma_semaphore, #tpu.memory_space<semaphore_mem>>
    %384 = tpu.memref_squeeze %383 : memref<1x!tpu.dma_semaphore, #tpu.memory_space<semaphore_mem>> -> memref<!tpu.dma_semaphore, #tpu.memory_space<semaphore_mem>>
    tpu.enqueue_dma source(%381 : memref<1x128xf32, #tpu.memory_space<any>>) target(%382 : memref<1x128xf32, #tpu.memory_space<vmem>>) target_semaphore(%384 : memref<!tpu.dma_semaphore, #tpu.memory_space<semaphore_mem>>)
    %c6_i32_265 = arith.constant 6 : i32
    %c0_i32_266 = arith.constant 0 : i32
    %385 = tpu.memref_slice %arg2[%147, %c0_i32_266] : memref<501x128xf32, #tpu.memory_space<any>> -> memref<1x128xf32, #tpu.memory_space<any>>
    %c48_i32 = arith.constant 48 : i32
    %c0_i32_267 = arith.constant 0 : i32
    %386 = tpu.memref_slice %arg4[%c48_i32, %c0_i32_267] : memref<64x128xf32, #tpu.memory_space<vmem>> -> memref<1x128xf32, #tpu.memory_space<vmem>>
    %387 = tpu.memref_slice %arg5[%c6_i32_265] : memref<8x!tpu.dma_semaphore, #tpu.memory_space<semaphore_mem>> -> memref<1x!tpu.dma_semaphore, #tpu.memory_space<semaphore_mem>>
    %388 = tpu.memref_squeeze %387 : memref<1x!tpu.dma_semaphore, #tpu.memory_space<semaphore_mem>> -> memref<!tpu.dma_semaphore, #tpu.memory_space<semaphore_mem>>
    tpu.enqueue_dma source(%385 : memref<1x128xf32, #tpu.memory_space<any>>) target(%386 : memref<1x128xf32, #tpu.memory_space<vmem>>) target_semaphore(%388 : memref<!tpu.dma_semaphore, #tpu.memory_space<semaphore_mem>>)
    %c6_i32_268 = arith.constant 6 : i32
    %c0_i32_269 = arith.constant 0 : i32
    %389 = tpu.memref_slice %arg2[%150, %c0_i32_269] : memref<501x128xf32, #tpu.memory_space<any>> -> memref<1x128xf32, #tpu.memory_space<any>>
    %c49_i32 = arith.constant 49 : i32
    %c0_i32_270 = arith.constant 0 : i32
    %390 = tpu.memref_slice %arg4[%c49_i32, %c0_i32_270] : memref<64x128xf32, #tpu.memory_space<vmem>> -> memref<1x128xf32, #tpu.memory_space<vmem>>
    %391 = tpu.memref_slice %arg5[%c6_i32_268] : memref<8x!tpu.dma_semaphore, #tpu.memory_space<semaphore_mem>> -> memref<1x!tpu.dma_semaphore, #tpu.memory_space<semaphore_mem>>
    %392 = tpu.memref_squeeze %391 : memref<1x!tpu.dma_semaphore, #tpu.memory_space<semaphore_mem>> -> memref<!tpu.dma_semaphore, #tpu.memory_space<semaphore_mem>>
    tpu.enqueue_dma source(%389 : memref<1x128xf32, #tpu.memory_space<any>>) target(%390 : memref<1x128xf32, #tpu.memory_space<vmem>>) target_semaphore(%392 : memref<!tpu.dma_semaphore, #tpu.memory_space<semaphore_mem>>)
    %c6_i32_271 = arith.constant 6 : i32
    %c0_i32_272 = arith.constant 0 : i32
    %393 = tpu.memref_slice %arg2[%153, %c0_i32_272] : memref<501x128xf32, #tpu.memory_space<any>> -> memref<1x128xf32, #tpu.memory_space<any>>
    %c50_i32 = arith.constant 50 : i32
    %c0_i32_273 = arith.constant 0 : i32
    %394 = tpu.memref_slice %arg4[%c50_i32, %c0_i32_273] : memref<64x128xf32, #tpu.memory_space<vmem>> -> memref<1x128xf32, #tpu.memory_space<vmem>>
    %395 = tpu.memref_slice %arg5[%c6_i32_271] : memref<8x!tpu.dma_semaphore, #tpu.memory_space<semaphore_mem>> -> memref<1x!tpu.dma_semaphore, #tpu.memory_space<semaphore_mem>>
    %396 = tpu.memref_squeeze %395 : memref<1x!tpu.dma_semaphore, #tpu.memory_space<semaphore_mem>> -> memref<!tpu.dma_semaphore, #tpu.memory_space<semaphore_mem>>
    tpu.enqueue_dma source(%393 : memref<1x128xf32, #tpu.memory_space<any>>) target(%394 : memref<1x128xf32, #tpu.memory_space<vmem>>) target_semaphore(%396 : memref<!tpu.dma_semaphore, #tpu.memory_space<semaphore_mem>>)
    %c6_i32_274 = arith.constant 6 : i32
    %c0_i32_275 = arith.constant 0 : i32
    %397 = tpu.memref_slice %arg2[%156, %c0_i32_275] : memref<501x128xf32, #tpu.memory_space<any>> -> memref<1x128xf32, #tpu.memory_space<any>>
    %c51_i32 = arith.constant 51 : i32
    %c0_i32_276 = arith.constant 0 : i32
    %398 = tpu.memref_slice %arg4[%c51_i32, %c0_i32_276] : memref<64x128xf32, #tpu.memory_space<vmem>> -> memref<1x128xf32, #tpu.memory_space<vmem>>
    %399 = tpu.memref_slice %arg5[%c6_i32_274] : memref<8x!tpu.dma_semaphore, #tpu.memory_space<semaphore_mem>> -> memref<1x!tpu.dma_semaphore, #tpu.memory_space<semaphore_mem>>
    %400 = tpu.memref_squeeze %399 : memref<1x!tpu.dma_semaphore, #tpu.memory_space<semaphore_mem>> -> memref<!tpu.dma_semaphore, #tpu.memory_space<semaphore_mem>>
    tpu.enqueue_dma source(%397 : memref<1x128xf32, #tpu.memory_space<any>>) target(%398 : memref<1x128xf32, #tpu.memory_space<vmem>>) target_semaphore(%400 : memref<!tpu.dma_semaphore, #tpu.memory_space<semaphore_mem>>)
    %c6_i32_277 = arith.constant 6 : i32
    %c0_i32_278 = arith.constant 0 : i32
    %401 = tpu.memref_slice %arg2[%159, %c0_i32_278] : memref<501x128xf32, #tpu.memory_space<any>> -> memref<1x128xf32, #tpu.memory_space<any>>
    %c52_i32 = arith.constant 52 : i32
    %c0_i32_279 = arith.constant 0 : i32
    %402 = tpu.memref_slice %arg4[%c52_i32, %c0_i32_279] : memref<64x128xf32, #tpu.memory_space<vmem>> -> memref<1x128xf32, #tpu.memory_space<vmem>>
    %403 = tpu.memref_slice %arg5[%c6_i32_277] : memref<8x!tpu.dma_semaphore, #tpu.memory_space<semaphore_mem>> -> memref<1x!tpu.dma_semaphore, #tpu.memory_space<semaphore_mem>>
    %404 = tpu.memref_squeeze %403 : memref<1x!tpu.dma_semaphore, #tpu.memory_space<semaphore_mem>> -> memref<!tpu.dma_semaphore, #tpu.memory_space<semaphore_mem>>
    tpu.enqueue_dma source(%401 : memref<1x128xf32, #tpu.memory_space<any>>) target(%402 : memref<1x128xf32, #tpu.memory_space<vmem>>) target_semaphore(%404 : memref<!tpu.dma_semaphore, #tpu.memory_space<semaphore_mem>>)
    %c6_i32_280 = arith.constant 6 : i32
    %c0_i32_281 = arith.constant 0 : i32
    %405 = tpu.memref_slice %arg2[%162, %c0_i32_281] : memref<501x128xf32, #tpu.memory_space<any>> -> memref<1x128xf32, #tpu.memory_space<any>>
    %c53_i32 = arith.constant 53 : i32
    %c0_i32_282 = arith.constant 0 : i32
    %406 = tpu.memref_slice %arg4[%c53_i32, %c0_i32_282] : memref<64x128xf32, #tpu.memory_space<vmem>> -> memref<1x128xf32, #tpu.memory_space<vmem>>
    %407 = tpu.memref_slice %arg5[%c6_i32_280] : memref<8x!tpu.dma_semaphore, #tpu.memory_space<semaphore_mem>> -> memref<1x!tpu.dma_semaphore, #tpu.memory_space<semaphore_mem>>
    %408 = tpu.memref_squeeze %407 : memref<1x!tpu.dma_semaphore, #tpu.memory_space<semaphore_mem>> -> memref<!tpu.dma_semaphore, #tpu.memory_space<semaphore_mem>>
    tpu.enqueue_dma source(%405 : memref<1x128xf32, #tpu.memory_space<any>>) target(%406 : memref<1x128xf32, #tpu.memory_space<vmem>>) target_semaphore(%408 : memref<!tpu.dma_semaphore, #tpu.memory_space<semaphore_mem>>)
    %c6_i32_283 = arith.constant 6 : i32
    %c0_i32_284 = arith.constant 0 : i32
    %409 = tpu.memref_slice %arg2[%165, %c0_i32_284] : memref<501x128xf32, #tpu.memory_space<any>> -> memref<1x128xf32, #tpu.memory_space<any>>
    %c54_i32 = arith.constant 54 : i32
    %c0_i32_285 = arith.constant 0 : i32
    %410 = tpu.memref_slice %arg4[%c54_i32, %c0_i32_285] : memref<64x128xf32, #tpu.memory_space<vmem>> -> memref<1x128xf32, #tpu.memory_space<vmem>>
    %411 = tpu.memref_slice %arg5[%c6_i32_283] : memref<8x!tpu.dma_semaphore, #tpu.memory_space<semaphore_mem>> -> memref<1x!tpu.dma_semaphore, #tpu.memory_space<semaphore_mem>>
    %412 = tpu.memref_squeeze %411 : memref<1x!tpu.dma_semaphore, #tpu.memory_space<semaphore_mem>> -> memref<!tpu.dma_semaphore, #tpu.memory_space<semaphore_mem>>
    tpu.enqueue_dma source(%409 : memref<1x128xf32, #tpu.memory_space<any>>) target(%410 : memref<1x128xf32, #tpu.memory_space<vmem>>) target_semaphore(%412 : memref<!tpu.dma_semaphore, #tpu.memory_space<semaphore_mem>>)
    %c6_i32_286 = arith.constant 6 : i32
    %c0_i32_287 = arith.constant 0 : i32
    %413 = tpu.memref_slice %arg2[%168, %c0_i32_287] : memref<501x128xf32, #tpu.memory_space<any>> -> memref<1x128xf32, #tpu.memory_space<any>>
    %c55_i32 = arith.constant 55 : i32
    %c0_i32_288 = arith.constant 0 : i32
    %414 = tpu.memref_slice %arg4[%c55_i32, %c0_i32_288] : memref<64x128xf32, #tpu.memory_space<vmem>> -> memref<1x128xf32, #tpu.memory_space<vmem>>
    %415 = tpu.memref_slice %arg5[%c6_i32_286] : memref<8x!tpu.dma_semaphore, #tpu.memory_space<semaphore_mem>> -> memref<1x!tpu.dma_semaphore, #tpu.memory_space<semaphore_mem>>
    %416 = tpu.memref_squeeze %415 : memref<1x!tpu.dma_semaphore, #tpu.memory_space<semaphore_mem>> -> memref<!tpu.dma_semaphore, #tpu.memory_space<semaphore_mem>>
    tpu.enqueue_dma source(%413 : memref<1x128xf32, #tpu.memory_space<any>>) target(%414 : memref<1x128xf32, #tpu.memory_space<vmem>>) target_semaphore(%416 : memref<!tpu.dma_semaphore, #tpu.memory_space<semaphore_mem>>)
    %c7_i32_289 = arith.constant 7 : i32
    %c0_i32_290 = arith.constant 0 : i32
    %417 = tpu.memref_slice %arg2[%171, %c0_i32_290] : memref<501x128xf32, #tpu.memory_space<any>> -> memref<1x128xf32, #tpu.memory_space<any>>
    %c56_i32 = arith.constant 56 : i32
    %c0_i32_291 = arith.constant 0 : i32
    %418 = tpu.memref_slice %arg4[%c56_i32, %c0_i32_291] : memref<64x128xf32, #tpu.memory_space<vmem>> -> memref<1x128xf32, #tpu.memory_space<vmem>>
    %419 = tpu.memref_slice %arg5[%c7_i32_289] : memref<8x!tpu.dma_semaphore, #tpu.memory_space<semaphore_mem>> -> memref<1x!tpu.dma_semaphore, #tpu.memory_space<semaphore_mem>>
    %420 = tpu.memref_squeeze %419 : memref<1x!tpu.dma_semaphore, #tpu.memory_space<semaphore_mem>> -> memref<!tpu.dma_semaphore, #tpu.memory_space<semaphore_mem>>
    tpu.enqueue_dma source(%417 : memref<1x128xf32, #tpu.memory_space<any>>) target(%418 : memref<1x128xf32, #tpu.memory_space<vmem>>) target_semaphore(%420 : memref<!tpu.dma_semaphore, #tpu.memory_space<semaphore_mem>>)
    %c7_i32_292 = arith.constant 7 : i32
    %c0_i32_293 = arith.constant 0 : i32
    %421 = tpu.memref_slice %arg2[%174, %c0_i32_293] : memref<501x128xf32, #tpu.memory_space<any>> -> memref<1x128xf32, #tpu.memory_space<any>>
    %c57_i32 = arith.constant 57 : i32
    %c0_i32_294 = arith.constant 0 : i32
    %422 = tpu.memref_slice %arg4[%c57_i32, %c0_i32_294] : memref<64x128xf32, #tpu.memory_space<vmem>> -> memref<1x128xf32, #tpu.memory_space<vmem>>
    %423 = tpu.memref_slice %arg5[%c7_i32_292] : memref<8x!tpu.dma_semaphore, #tpu.memory_space<semaphore_mem>> -> memref<1x!tpu.dma_semaphore, #tpu.memory_space<semaphore_mem>>
    %424 = tpu.memref_squeeze %423 : memref<1x!tpu.dma_semaphore, #tpu.memory_space<semaphore_mem>> -> memref<!tpu.dma_semaphore, #tpu.memory_space<semaphore_mem>>
    tpu.enqueue_dma source(%421 : memref<1x128xf32, #tpu.memory_space<any>>) target(%422 : memref<1x128xf32, #tpu.memory_space<vmem>>) target_semaphore(%424 : memref<!tpu.dma_semaphore, #tpu.memory_space<semaphore_mem>>)
    %c7_i32_295 = arith.constant 7 : i32
    %c0_i32_296 = arith.constant 0 : i32
    %425 = tpu.memref_slice %arg2[%177, %c0_i32_296] : memref<501x128xf32, #tpu.memory_space<any>> -> memref<1x128xf32, #tpu.memory_space<any>>
    %c58_i32 = arith.constant 58 : i32
    %c0_i32_297 = arith.constant 0 : i32
    %426 = tpu.memref_slice %arg4[%c58_i32, %c0_i32_297] : memref<64x128xf32, #tpu.memory_space<vmem>> -> memref<1x128xf32, #tpu.memory_space<vmem>>
    %427 = tpu.memref_slice %arg5[%c7_i32_295] : memref<8x!tpu.dma_semaphore, #tpu.memory_space<semaphore_mem>> -> memref<1x!tpu.dma_semaphore, #tpu.memory_space<semaphore_mem>>
    %428 = tpu.memref_squeeze %427 : memref<1x!tpu.dma_semaphore, #tpu.memory_space<semaphore_mem>> -> memref<!tpu.dma_semaphore, #tpu.memory_space<semaphore_mem>>
    tpu.enqueue_dma source(%425 : memref<1x128xf32, #tpu.memory_space<any>>) target(%426 : memref<1x128xf32, #tpu.memory_space<vmem>>) target_semaphore(%428 : memref<!tpu.dma_semaphore, #tpu.memory_space<semaphore_mem>>)
    %c7_i32_298 = arith.constant 7 : i32
    %c0_i32_299 = arith.constant 0 : i32
    %429 = tpu.memref_slice %arg2[%180, %c0_i32_299] : memref<501x128xf32, #tpu.memory_space<any>> -> memref<1x128xf32, #tpu.memory_space<any>>
    %c59_i32 = arith.constant 59 : i32
    %c0_i32_300 = arith.constant 0 : i32
    %430 = tpu.memref_slice %arg4[%c59_i32, %c0_i32_300] : memref<64x128xf32, #tpu.memory_space<vmem>> -> memref<1x128xf32, #tpu.memory_space<vmem>>
    %431 = tpu.memref_slice %arg5[%c7_i32_298] : memref<8x!tpu.dma_semaphore, #tpu.memory_space<semaphore_mem>> -> memref<1x!tpu.dma_semaphore, #tpu.memory_space<semaphore_mem>>
    %432 = tpu.memref_squeeze %431 : memref<1x!tpu.dma_semaphore, #tpu.memory_space<semaphore_mem>> -> memref<!tpu.dma_semaphore, #tpu.memory_space<semaphore_mem>>
    tpu.enqueue_dma source(%429 : memref<1x128xf32, #tpu.memory_space<any>>) target(%430 : memref<1x128xf32, #tpu.memory_space<vmem>>) target_semaphore(%432 : memref<!tpu.dma_semaphore, #tpu.memory_space<semaphore_mem>>)
    %c7_i32_301 = arith.constant 7 : i32
    %c0_i32_302 = arith.constant 0 : i32
    %433 = tpu.memref_slice %arg2[%183, %c0_i32_302] : memref<501x128xf32, #tpu.memory_space<any>> -> memref<1x128xf32, #tpu.memory_space<any>>
    %c60_i32 = arith.constant 60 : i32
    %c0_i32_303 = arith.constant 0 : i32
    %434 = tpu.memref_slice %arg4[%c60_i32, %c0_i32_303] : memref<64x128xf32, #tpu.memory_space<vmem>> -> memref<1x128xf32, #tpu.memory_space<vmem>>
    %435 = tpu.memref_slice %arg5[%c7_i32_301] : memref<8x!tpu.dma_semaphore, #tpu.memory_space<semaphore_mem>> -> memref<1x!tpu.dma_semaphore, #tpu.memory_space<semaphore_mem>>
    %436 = tpu.memref_squeeze %435 : memref<1x!tpu.dma_semaphore, #tpu.memory_space<semaphore_mem>> -> memref<!tpu.dma_semaphore, #tpu.memory_space<semaphore_mem>>
    tpu.enqueue_dma source(%433 : memref<1x128xf32, #tpu.memory_space<any>>) target(%434 : memref<1x128xf32, #tpu.memory_space<vmem>>) target_semaphore(%436 : memref<!tpu.dma_semaphore, #tpu.memory_space<semaphore_mem>>)
    %c7_i32_304 = arith.constant 7 : i32
    %c0_i32_305 = arith.constant 0 : i32
    %437 = tpu.memref_slice %arg2[%186, %c0_i32_305] : memref<501x128xf32, #tpu.memory_space<any>> -> memref<1x128xf32, #tpu.memory_space<any>>
    %c61_i32 = arith.constant 61 : i32
    %c0_i32_306 = arith.constant 0 : i32
    %438 = tpu.memref_slice %arg4[%c61_i32, %c0_i32_306] : memref<64x128xf32, #tpu.memory_space<vmem>> -> memref<1x128xf32, #tpu.memory_space<vmem>>
    %439 = tpu.memref_slice %arg5[%c7_i32_304] : memref<8x!tpu.dma_semaphore, #tpu.memory_space<semaphore_mem>> -> memref<1x!tpu.dma_semaphore, #tpu.memory_space<semaphore_mem>>
    %440 = tpu.memref_squeeze %439 : memref<1x!tpu.dma_semaphore, #tpu.memory_space<semaphore_mem>> -> memref<!tpu.dma_semaphore, #tpu.memory_space<semaphore_mem>>
    tpu.enqueue_dma source(%437 : memref<1x128xf32, #tpu.memory_space<any>>) target(%438 : memref<1x128xf32, #tpu.memory_space<vmem>>) target_semaphore(%440 : memref<!tpu.dma_semaphore, #tpu.memory_space<semaphore_mem>>)
    %c7_i32_307 = arith.constant 7 : i32
    %c0_i32_308 = arith.constant 0 : i32
    %441 = tpu.memref_slice %arg2[%189, %c0_i32_308] : memref<501x128xf32, #tpu.memory_space<any>> -> memref<1x128xf32, #tpu.memory_space<any>>
    %c62_i32 = arith.constant 62 : i32
    %c0_i32_309 = arith.constant 0 : i32
    %442 = tpu.memref_slice %arg4[%c62_i32, %c0_i32_309] : memref<64x128xf32, #tpu.memory_space<vmem>> -> memref<1x128xf32, #tpu.memory_space<vmem>>
    %443 = tpu.memref_slice %arg5[%c7_i32_307] : memref<8x!tpu.dma_semaphore, #tpu.memory_space<semaphore_mem>> -> memref<1x!tpu.dma_semaphore, #tpu.memory_space<semaphore_mem>>
    %444 = tpu.memref_squeeze %443 : memref<1x!tpu.dma_semaphore, #tpu.memory_space<semaphore_mem>> -> memref<!tpu.dma_semaphore, #tpu.memory_space<semaphore_mem>>
    tpu.enqueue_dma source(%441 : memref<1x128xf32, #tpu.memory_space<any>>) target(%442 : memref<1x128xf32, #tpu.memory_space<vmem>>) target_semaphore(%444 : memref<!tpu.dma_semaphore, #tpu.memory_space<semaphore_mem>>)
    %c7_i32_310 = arith.constant 7 : i32
    %c0_i32_311 = arith.constant 0 : i32
    %445 = tpu.memref_slice %arg2[%192, %c0_i32_311] : memref<501x128xf32, #tpu.memory_space<any>> -> memref<1x128xf32, #tpu.memory_space<any>>
    %c63_i32 = arith.constant 63 : i32
    %c0_i32_312 = arith.constant 0 : i32
    %446 = tpu.memref_slice %arg4[%c63_i32, %c0_i32_312] : memref<64x128xf32, #tpu.memory_space<vmem>> -> memref<1x128xf32, #tpu.memory_space<vmem>>
    %447 = tpu.memref_slice %arg5[%c7_i32_310] : memref<8x!tpu.dma_semaphore, #tpu.memory_space<semaphore_mem>> -> memref<1x!tpu.dma_semaphore, #tpu.memory_space<semaphore_mem>>
    %448 = tpu.memref_squeeze %447 : memref<1x!tpu.dma_semaphore, #tpu.memory_space<semaphore_mem>> -> memref<!tpu.dma_semaphore, #tpu.memory_space<semaphore_mem>>
    tpu.enqueue_dma source(%445 : memref<1x128xf32, #tpu.memory_space<any>>) target(%446 : memref<1x128xf32, #tpu.memory_space<vmem>>) target_semaphore(%448 : memref<!tpu.dma_semaphore, #tpu.memory_space<semaphore_mem>>)
    %cst = arith.constant 0.000000e+00 : f32
    %449 = vector.broadcast %cst : f32 to vector<8x128xf32>
    %c0_i32_313 = arith.constant 0 : i32
    %c0_i32_314 = arith.constant 0 : i32
    %450 = tpu.memref_slice %arg2[%3, %c0_i32_314] : memref<501x128xf32, #tpu.memory_space<any>> -> memref<1x128xf32, #tpu.memory_space<any>>
    %c0_i32_315 = arith.constant 0 : i32
    %c0_i32_316 = arith.constant 0 : i32
    %451 = tpu.memref_slice %arg4[%c0_i32_315, %c0_i32_316] : memref<64x128xf32, #tpu.memory_space<vmem>> -> memref<1x128xf32, #tpu.memory_space<vmem>>
    %452 = tpu.memref_slice %arg5[%c0_i32_313] : memref<8x!tpu.dma_semaphore, #tpu.memory_space<semaphore_mem>> -> memref<1x!tpu.dma_semaphore, #tpu.memory_space<semaphore_mem>>
    %453 = tpu.memref_squeeze %452 : memref<1x!tpu.dma_semaphore, #tpu.memory_space<semaphore_mem>> -> memref<!tpu.dma_semaphore, #tpu.memory_space<semaphore_mem>>
    tpu.wait_dma2 semaphore(%453 : memref<!tpu.dma_semaphore, #tpu.memory_space<semaphore_mem>>) src(%450 : memref<1x128xf32, #tpu.memory_space<any>>) dst(%451 : memref<1x128xf32, #tpu.memory_space<vmem>>)
    %c0_i32_317 = arith.constant 0 : i32
    %c0_i32_318 = arith.constant 0 : i32
    %454 = tpu.memref_slice %arg2[%6, %c0_i32_318] : memref<501x128xf32, #tpu.memory_space<any>> -> memref<1x128xf32, #tpu.memory_space<any>>
    %c1_i32_319 = arith.constant 1 : i32
    %c0_i32_320 = arith.constant 0 : i32
    %455 = tpu.memref_slice %arg4[%c1_i32_319, %c0_i32_320] : memref<64x128xf32, #tpu.memory_space<vmem>> -> memref<1x128xf32, #tpu.memory_space<vmem>>
    %456 = tpu.memref_slice %arg5[%c0_i32_317] : memref<8x!tpu.dma_semaphore, #tpu.memory_space<semaphore_mem>> -> memref<1x!tpu.dma_semaphore, #tpu.memory_space<semaphore_mem>>
    %457 = tpu.memref_squeeze %456 : memref<1x!tpu.dma_semaphore, #tpu.memory_space<semaphore_mem>> -> memref<!tpu.dma_semaphore, #tpu.memory_space<semaphore_mem>>
    tpu.wait_dma2 semaphore(%457 : memref<!tpu.dma_semaphore, #tpu.memory_space<semaphore_mem>>) src(%454 : memref<1x128xf32, #tpu.memory_space<any>>) dst(%455 : memref<1x128xf32, #tpu.memory_space<vmem>>)
    %c0_i32_321 = arith.constant 0 : i32
    %c0_i32_322 = arith.constant 0 : i32
    %458 = tpu.memref_slice %arg2[%9, %c0_i32_322] : memref<501x128xf32, #tpu.memory_space<any>> -> memref<1x128xf32, #tpu.memory_space<any>>
    %c2_i32_323 = arith.constant 2 : i32
    %c0_i32_324 = arith.constant 0 : i32
    %459 = tpu.memref_slice %arg4[%c2_i32_323, %c0_i32_324] : memref<64x128xf32, #tpu.memory_space<vmem>> -> memref<1x128xf32, #tpu.memory_space<vmem>>
    %460 = tpu.memref_slice %arg5[%c0_i32_321] : memref<8x!tpu.dma_semaphore, #tpu.memory_space<semaphore_mem>> -> memref<1x!tpu.dma_semaphore, #tpu.memory_space<semaphore_mem>>
    %461 = tpu.memref_squeeze %460 : memref<1x!tpu.dma_semaphore, #tpu.memory_space<semaphore_mem>> -> memref<!tpu.dma_semaphore, #tpu.memory_space<semaphore_mem>>
    tpu.wait_dma2 semaphore(%461 : memref<!tpu.dma_semaphore, #tpu.memory_space<semaphore_mem>>) src(%458 : memref<1x128xf32, #tpu.memory_space<any>>) dst(%459 : memref<1x128xf32, #tpu.memory_space<vmem>>)
    %c0_i32_325 = arith.constant 0 : i32
    %c0_i32_326 = arith.constant 0 : i32
    %462 = tpu.memref_slice %arg2[%12, %c0_i32_326] : memref<501x128xf32, #tpu.memory_space<any>> -> memref<1x128xf32, #tpu.memory_space<any>>
    %c3_i32_327 = arith.constant 3 : i32
    %c0_i32_328 = arith.constant 0 : i32
    %463 = tpu.memref_slice %arg4[%c3_i32_327, %c0_i32_328] : memref<64x128xf32, #tpu.memory_space<vmem>> -> memref<1x128xf32, #tpu.memory_space<vmem>>
    %464 = tpu.memref_slice %arg5[%c0_i32_325] : memref<8x!tpu.dma_semaphore, #tpu.memory_space<semaphore_mem>> -> memref<1x!tpu.dma_semaphore, #tpu.memory_space<semaphore_mem>>
    %465 = tpu.memref_squeeze %464 : memref<1x!tpu.dma_semaphore, #tpu.memory_space<semaphore_mem>> -> memref<!tpu.dma_semaphore, #tpu.memory_space<semaphore_mem>>
    tpu.wait_dma2 semaphore(%465 : memref<!tpu.dma_semaphore, #tpu.memory_space<semaphore_mem>>) src(%462 : memref<1x128xf32, #tpu.memory_space<any>>) dst(%463 : memref<1x128xf32, #tpu.memory_space<vmem>>)
    %c0_i32_329 = arith.constant 0 : i32
    %c0_i32_330 = arith.constant 0 : i32
    %466 = tpu.memref_slice %arg2[%15, %c0_i32_330] : memref<501x128xf32, #tpu.memory_space<any>> -> memref<1x128xf32, #tpu.memory_space<any>>
    %c4_i32_331 = arith.constant 4 : i32
    %c0_i32_332 = arith.constant 0 : i32
    %467 = tpu.memref_slice %arg4[%c4_i32_331, %c0_i32_332] : memref<64x128xf32, #tpu.memory_space<vmem>> -> memref<1x128xf32, #tpu.memory_space<vmem>>
    %468 = tpu.memref_slice %arg5[%c0_i32_329] : memref<8x!tpu.dma_semaphore, #tpu.memory_space<semaphore_mem>> -> memref<1x!tpu.dma_semaphore, #tpu.memory_space<semaphore_mem>>
    %469 = tpu.memref_squeeze %468 : memref<1x!tpu.dma_semaphore, #tpu.memory_space<semaphore_mem>> -> memref<!tpu.dma_semaphore, #tpu.memory_space<semaphore_mem>>
    tpu.wait_dma2 semaphore(%469 : memref<!tpu.dma_semaphore, #tpu.memory_space<semaphore_mem>>) src(%466 : memref<1x128xf32, #tpu.memory_space<any>>) dst(%467 : memref<1x128xf32, #tpu.memory_space<vmem>>)
    %c0_i32_333 = arith.constant 0 : i32
    %c0_i32_334 = arith.constant 0 : i32
    %470 = tpu.memref_slice %arg2[%18, %c0_i32_334] : memref<501x128xf32, #tpu.memory_space<any>> -> memref<1x128xf32, #tpu.memory_space<any>>
    %c5_i32_335 = arith.constant 5 : i32
    %c0_i32_336 = arith.constant 0 : i32
    %471 = tpu.memref_slice %arg4[%c5_i32_335, %c0_i32_336] : memref<64x128xf32, #tpu.memory_space<vmem>> -> memref<1x128xf32, #tpu.memory_space<vmem>>
    %472 = tpu.memref_slice %arg5[%c0_i32_333] : memref<8x!tpu.dma_semaphore, #tpu.memory_space<semaphore_mem>> -> memref<1x!tpu.dma_semaphore, #tpu.memory_space<semaphore_mem>>
    %473 = tpu.memref_squeeze %472 : memref<1x!tpu.dma_semaphore, #tpu.memory_space<semaphore_mem>> -> memref<!tpu.dma_semaphore, #tpu.memory_space<semaphore_mem>>
    tpu.wait_dma2 semaphore(%473 : memref<!tpu.dma_semaphore, #tpu.memory_space<semaphore_mem>>) src(%470 : memref<1x128xf32, #tpu.memory_space<any>>) dst(%471 : memref<1x128xf32, #tpu.memory_space<vmem>>)
    %c0_i32_337 = arith.constant 0 : i32
    %c0_i32_338 = arith.constant 0 : i32
    %474 = tpu.memref_slice %arg2[%21, %c0_i32_338] : memref<501x128xf32, #tpu.memory_space<any>> -> memref<1x128xf32, #tpu.memory_space<any>>
    %c6_i32_339 = arith.constant 6 : i32
    %c0_i32_340 = arith.constant 0 : i32
    %475 = tpu.memref_slice %arg4[%c6_i32_339, %c0_i32_340] : memref<64x128xf32, #tpu.memory_space<vmem>> -> memref<1x128xf32, #tpu.memory_space<vmem>>
    %476 = tpu.memref_slice %arg5[%c0_i32_337] : memref<8x!tpu.dma_semaphore, #tpu.memory_space<semaphore_mem>> -> memref<1x!tpu.dma_semaphore, #tpu.memory_space<semaphore_mem>>
    %477 = tpu.memref_squeeze %476 : memref<1x!tpu.dma_semaphore, #tpu.memory_space<semaphore_mem>> -> memref<!tpu.dma_semaphore, #tpu.memory_space<semaphore_mem>>
    tpu.wait_dma2 semaphore(%477 : memref<!tpu.dma_semaphore, #tpu.memory_space<semaphore_mem>>) src(%474 : memref<1x128xf32, #tpu.memory_space<any>>) dst(%475 : memref<1x128xf32, #tpu.memory_space<vmem>>)
    %c0_i32_341 = arith.constant 0 : i32
    %c0_i32_342 = arith.constant 0 : i32
    %478 = tpu.memref_slice %arg2[%24, %c0_i32_342] : memref<501x128xf32, #tpu.memory_space<any>> -> memref<1x128xf32, #tpu.memory_space<any>>
    %c7_i32_343 = arith.constant 7 : i32
    %c0_i32_344 = arith.constant 0 : i32
    %479 = tpu.memref_slice %arg4[%c7_i32_343, %c0_i32_344] : memref<64x128xf32, #tpu.memory_space<vmem>> -> memref<1x128xf32, #tpu.memory_space<vmem>>
    %480 = tpu.memref_slice %arg5[%c0_i32_341] : memref<8x!tpu.dma_semaphore, #tpu.memory_space<semaphore_mem>> -> memref<1x!tpu.dma_semaphore, #tpu.memory_space<semaphore_mem>>
    %481 = tpu.memref_squeeze %480 : memref<1x!tpu.dma_semaphore, #tpu.memory_space<semaphore_mem>> -> memref<!tpu.dma_semaphore, #tpu.memory_space<semaphore_mem>>
    tpu.wait_dma2 semaphore(%481 : memref<!tpu.dma_semaphore, #tpu.memory_space<semaphore_mem>>) src(%478 : memref<1x128xf32, #tpu.memory_space<any>>) dst(%479 : memref<1x128xf32, #tpu.memory_space<vmem>>)
    %c0_345 = arith.constant 0 : index
    %c0_346 = arith.constant 0 : index
    %482 = vector.load %arg4[%c0_345, %c0_346] : memref<64x128xf32, #tpu.memory_space<vmem>>, vector<8x128xf32>
    %483 = arith.addf %449, %482 : vector<8x128xf32>
    %c1_i32_347 = arith.constant 1 : i32
    %c0_i32_348 = arith.constant 0 : i32
    %484 = tpu.memref_slice %arg2[%27, %c0_i32_348] : memref<501x128xf32, #tpu.memory_space<any>> -> memref<1x128xf32, #tpu.memory_space<any>>
    %c8_i32_349 = arith.constant 8 : i32
    %c0_i32_350 = arith.constant 0 : i32
    %485 = tpu.memref_slice %arg4[%c8_i32_349, %c0_i32_350] : memref<64x128xf32, #tpu.memory_space<vmem>> -> memref<1x128xf32, #tpu.memory_space<vmem>>
    %486 = tpu.memref_slice %arg5[%c1_i32_347] : memref<8x!tpu.dma_semaphore, #tpu.memory_space<semaphore_mem>> -> memref<1x!tpu.dma_semaphore, #tpu.memory_space<semaphore_mem>>
    %487 = tpu.memref_squeeze %486 : memref<1x!tpu.dma_semaphore, #tpu.memory_space<semaphore_mem>> -> memref<!tpu.dma_semaphore, #tpu.memory_space<semaphore_mem>>
    tpu.wait_dma2 semaphore(%487 : memref<!tpu.dma_semaphore, #tpu.memory_space<semaphore_mem>>) src(%484 : memref<1x128xf32, #tpu.memory_space<any>>) dst(%485 : memref<1x128xf32, #tpu.memory_space<vmem>>)
    %c1_i32_351 = arith.constant 1 : i32
    %c0_i32_352 = arith.constant 0 : i32
    %488 = tpu.memref_slice %arg2[%30, %c0_i32_352] : memref<501x128xf32, #tpu.memory_space<any>> -> memref<1x128xf32, #tpu.memory_space<any>>
    %c9_i32_353 = arith.constant 9 : i32
    %c0_i32_354 = arith.constant 0 : i32
    %489 = tpu.memref_slice %arg4[%c9_i32_353, %c0_i32_354] : memref<64x128xf32, #tpu.memory_space<vmem>> -> memref<1x128xf32, #tpu.memory_space<vmem>>
    %490 = tpu.memref_slice %arg5[%c1_i32_351] : memref<8x!tpu.dma_semaphore, #tpu.memory_space<semaphore_mem>> -> memref<1x!tpu.dma_semaphore, #tpu.memory_space<semaphore_mem>>
    %491 = tpu.memref_squeeze %490 : memref<1x!tpu.dma_semaphore, #tpu.memory_space<semaphore_mem>> -> memref<!tpu.dma_semaphore, #tpu.memory_space<semaphore_mem>>
    tpu.wait_dma2 semaphore(%491 : memref<!tpu.dma_semaphore, #tpu.memory_space<semaphore_mem>>) src(%488 : memref<1x128xf32, #tpu.memory_space<any>>) dst(%489 : memref<1x128xf32, #tpu.memory_space<vmem>>)
    %c1_i32_355 = arith.constant 1 : i32
    %c0_i32_356 = arith.constant 0 : i32
    %492 = tpu.memref_slice %arg2[%33, %c0_i32_356] : memref<501x128xf32, #tpu.memory_space<any>> -> memref<1x128xf32, #tpu.memory_space<any>>
    %c10_i32_357 = arith.constant 10 : i32
    %c0_i32_358 = arith.constant 0 : i32
    %493 = tpu.memref_slice %arg4[%c10_i32_357, %c0_i32_358] : memref<64x128xf32, #tpu.memory_space<vmem>> -> memref<1x128xf32, #tpu.memory_space<vmem>>
    %494 = tpu.memref_slice %arg5[%c1_i32_355] : memref<8x!tpu.dma_semaphore, #tpu.memory_space<semaphore_mem>> -> memref<1x!tpu.dma_semaphore, #tpu.memory_space<semaphore_mem>>
    %495 = tpu.memref_squeeze %494 : memref<1x!tpu.dma_semaphore, #tpu.memory_space<semaphore_mem>> -> memref<!tpu.dma_semaphore, #tpu.memory_space<semaphore_mem>>
    tpu.wait_dma2 semaphore(%495 : memref<!tpu.dma_semaphore, #tpu.memory_space<semaphore_mem>>) src(%492 : memref<1x128xf32, #tpu.memory_space<any>>) dst(%493 : memref<1x128xf32, #tpu.memory_space<vmem>>)
    %c1_i32_359 = arith.constant 1 : i32
    %c0_i32_360 = arith.constant 0 : i32
    %496 = tpu.memref_slice %arg2[%36, %c0_i32_360] : memref<501x128xf32, #tpu.memory_space<any>> -> memref<1x128xf32, #tpu.memory_space<any>>
    %c11_i32_361 = arith.constant 11 : i32
    %c0_i32_362 = arith.constant 0 : i32
    %497 = tpu.memref_slice %arg4[%c11_i32_361, %c0_i32_362] : memref<64x128xf32, #tpu.memory_space<vmem>> -> memref<1x128xf32, #tpu.memory_space<vmem>>
    %498 = tpu.memref_slice %arg5[%c1_i32_359] : memref<8x!tpu.dma_semaphore, #tpu.memory_space<semaphore_mem>> -> memref<1x!tpu.dma_semaphore, #tpu.memory_space<semaphore_mem>>
    %499 = tpu.memref_squeeze %498 : memref<1x!tpu.dma_semaphore, #tpu.memory_space<semaphore_mem>> -> memref<!tpu.dma_semaphore, #tpu.memory_space<semaphore_mem>>
    tpu.wait_dma2 semaphore(%499 : memref<!tpu.dma_semaphore, #tpu.memory_space<semaphore_mem>>) src(%496 : memref<1x128xf32, #tpu.memory_space<any>>) dst(%497 : memref<1x128xf32, #tpu.memory_space<vmem>>)
    %c1_i32_363 = arith.constant 1 : i32
    %c0_i32_364 = arith.constant 0 : i32
    %500 = tpu.memref_slice %arg2[%39, %c0_i32_364] : memref<501x128xf32, #tpu.memory_space<any>> -> memref<1x128xf32, #tpu.memory_space<any>>
    %c12_i32_365 = arith.constant 12 : i32
    %c0_i32_366 = arith.constant 0 : i32
    %501 = tpu.memref_slice %arg4[%c12_i32_365, %c0_i32_366] : memref<64x128xf32, #tpu.memory_space<vmem>> -> memref<1x128xf32, #tpu.memory_space<vmem>>
    %502 = tpu.memref_slice %arg5[%c1_i32_363] : memref<8x!tpu.dma_semaphore, #tpu.memory_space<semaphore_mem>> -> memref<1x!tpu.dma_semaphore, #tpu.memory_space<semaphore_mem>>
    %503 = tpu.memref_squeeze %502 : memref<1x!tpu.dma_semaphore, #tpu.memory_space<semaphore_mem>> -> memref<!tpu.dma_semaphore, #tpu.memory_space<semaphore_mem>>
    tpu.wait_dma2 semaphore(%503 : memref<!tpu.dma_semaphore, #tpu.memory_space<semaphore_mem>>) src(%500 : memref<1x128xf32, #tpu.memory_space<any>>) dst(%501 : memref<1x128xf32, #tpu.memory_space<vmem>>)
    %c1_i32_367 = arith.constant 1 : i32
    %c0_i32_368 = arith.constant 0 : i32
    %504 = tpu.memref_slice %arg2[%42, %c0_i32_368] : memref<501x128xf32, #tpu.memory_space<any>> -> memref<1x128xf32, #tpu.memory_space<any>>
    %c13_i32_369 = arith.constant 13 : i32
    %c0_i32_370 = arith.constant 0 : i32
    %505 = tpu.memref_slice %arg4[%c13_i32_369, %c0_i32_370] : memref<64x128xf32, #tpu.memory_space<vmem>> -> memref<1x128xf32, #tpu.memory_space<vmem>>
    %506 = tpu.memref_slice %arg5[%c1_i32_367] : memref<8x!tpu.dma_semaphore, #tpu.memory_space<semaphore_mem>> -> memref<1x!tpu.dma_semaphore, #tpu.memory_space<semaphore_mem>>
    %507 = tpu.memref_squeeze %506 : memref<1x!tpu.dma_semaphore, #tpu.memory_space<semaphore_mem>> -> memref<!tpu.dma_semaphore, #tpu.memory_space<semaphore_mem>>
    tpu.wait_dma2 semaphore(%507 : memref<!tpu.dma_semaphore, #tpu.memory_space<semaphore_mem>>) src(%504 : memref<1x128xf32, #tpu.memory_space<any>>) dst(%505 : memref<1x128xf32, #tpu.memory_space<vmem>>)
    %c1_i32_371 = arith.constant 1 : i32
    %c0_i32_372 = arith.constant 0 : i32
    %508 = tpu.memref_slice %arg2[%45, %c0_i32_372] : memref<501x128xf32, #tpu.memory_space<any>> -> memref<1x128xf32, #tpu.memory_space<any>>
    %c14_i32_373 = arith.constant 14 : i32
    %c0_i32_374 = arith.constant 0 : i32
    %509 = tpu.memref_slice %arg4[%c14_i32_373, %c0_i32_374] : memref<64x128xf32, #tpu.memory_space<vmem>> -> memref<1x128xf32, #tpu.memory_space<vmem>>
    %510 = tpu.memref_slice %arg5[%c1_i32_371] : memref<8x!tpu.dma_semaphore, #tpu.memory_space<semaphore_mem>> -> memref<1x!tpu.dma_semaphore, #tpu.memory_space<semaphore_mem>>
    %511 = tpu.memref_squeeze %510 : memref<1x!tpu.dma_semaphore, #tpu.memory_space<semaphore_mem>> -> memref<!tpu.dma_semaphore, #tpu.memory_space<semaphore_mem>>
    tpu.wait_dma2 semaphore(%511 : memref<!tpu.dma_semaphore, #tpu.memory_space<semaphore_mem>>) src(%508 : memref<1x128xf32, #tpu.memory_space<any>>) dst(%509 : memref<1x128xf32, #tpu.memory_space<vmem>>)
    %c1_i32_375 = arith.constant 1 : i32
    %c0_i32_376 = arith.constant 0 : i32
    %512 = tpu.memref_slice %arg2[%48, %c0_i32_376] : memref<501x128xf32, #tpu.memory_space<any>> -> memref<1x128xf32, #tpu.memory_space<any>>
    %c15_i32_377 = arith.constant 15 : i32
    %c0_i32_378 = arith.constant 0 : i32
    %513 = tpu.memref_slice %arg4[%c15_i32_377, %c0_i32_378] : memref<64x128xf32, #tpu.memory_space<vmem>> -> memref<1x128xf32, #tpu.memory_space<vmem>>
    %514 = tpu.memref_slice %arg5[%c1_i32_375] : memref<8x!tpu.dma_semaphore, #tpu.memory_space<semaphore_mem>> -> memref<1x!tpu.dma_semaphore, #tpu.memory_space<semaphore_mem>>
    %515 = tpu.memref_squeeze %514 : memref<1x!tpu.dma_semaphore, #tpu.memory_space<semaphore_mem>> -> memref<!tpu.dma_semaphore, #tpu.memory_space<semaphore_mem>>
    tpu.wait_dma2 semaphore(%515 : memref<!tpu.dma_semaphore, #tpu.memory_space<semaphore_mem>>) src(%512 : memref<1x128xf32, #tpu.memory_space<any>>) dst(%513 : memref<1x128xf32, #tpu.memory_space<vmem>>)
    %c8 = arith.constant 8 : index
    %c0_379 = arith.constant 0 : index
    %516 = vector.load %arg4[%c8, %c0_379] : memref<64x128xf32, #tpu.memory_space<vmem>>, vector<8x128xf32>
    %517 = arith.addf %483, %516 : vector<8x128xf32>
    %c2_i32_380 = arith.constant 2 : i32
    %c0_i32_381 = arith.constant 0 : i32
    %518 = tpu.memref_slice %arg2[%51, %c0_i32_381] : memref<501x128xf32, #tpu.memory_space<any>> -> memref<1x128xf32, #tpu.memory_space<any>>
    %c16_i32_382 = arith.constant 16 : i32
    %c0_i32_383 = arith.constant 0 : i32
    %519 = tpu.memref_slice %arg4[%c16_i32_382, %c0_i32_383] : memref<64x128xf32, #tpu.memory_space<vmem>> -> memref<1x128xf32, #tpu.memory_space<vmem>>
    %520 = tpu.memref_slice %arg5[%c2_i32_380] : memref<8x!tpu.dma_semaphore, #tpu.memory_space<semaphore_mem>> -> memref<1x!tpu.dma_semaphore, #tpu.memory_space<semaphore_mem>>
    %521 = tpu.memref_squeeze %520 : memref<1x!tpu.dma_semaphore, #tpu.memory_space<semaphore_mem>> -> memref<!tpu.dma_semaphore, #tpu.memory_space<semaphore_mem>>
    tpu.wait_dma2 semaphore(%521 : memref<!tpu.dma_semaphore, #tpu.memory_space<semaphore_mem>>) src(%518 : memref<1x128xf32, #tpu.memory_space<any>>) dst(%519 : memref<1x128xf32, #tpu.memory_space<vmem>>)
    %c2_i32_384 = arith.constant 2 : i32
    %c0_i32_385 = arith.constant 0 : i32
    %522 = tpu.memref_slice %arg2[%54, %c0_i32_385] : memref<501x128xf32, #tpu.memory_space<any>> -> memref<1x128xf32, #tpu.memory_space<any>>
    %c17_i32_386 = arith.constant 17 : i32
    %c0_i32_387 = arith.constant 0 : i32
    %523 = tpu.memref_slice %arg4[%c17_i32_386, %c0_i32_387] : memref<64x128xf32, #tpu.memory_space<vmem>> -> memref<1x128xf32, #tpu.memory_space<vmem>>
    %524 = tpu.memref_slice %arg5[%c2_i32_384] : memref<8x!tpu.dma_semaphore, #tpu.memory_space<semaphore_mem>> -> memref<1x!tpu.dma_semaphore, #tpu.memory_space<semaphore_mem>>
    %525 = tpu.memref_squeeze %524 : memref<1x!tpu.dma_semaphore, #tpu.memory_space<semaphore_mem>> -> memref<!tpu.dma_semaphore, #tpu.memory_space<semaphore_mem>>
    tpu.wait_dma2 semaphore(%525 : memref<!tpu.dma_semaphore, #tpu.memory_space<semaphore_mem>>) src(%522 : memref<1x128xf32, #tpu.memory_space<any>>) dst(%523 : memref<1x128xf32, #tpu.memory_space<vmem>>)
    %c2_i32_388 = arith.constant 2 : i32
    %c0_i32_389 = arith.constant 0 : i32
    %526 = tpu.memref_slice %arg2[%57, %c0_i32_389] : memref<501x128xf32, #tpu.memory_space<any>> -> memref<1x128xf32, #tpu.memory_space<any>>
    %c18_i32_390 = arith.constant 18 : i32
    %c0_i32_391 = arith.constant 0 : i32
    %527 = tpu.memref_slice %arg4[%c18_i32_390, %c0_i32_391] : memref<64x128xf32, #tpu.memory_space<vmem>> -> memref<1x128xf32, #tpu.memory_space<vmem>>
    %528 = tpu.memref_slice %arg5[%c2_i32_388] : memref<8x!tpu.dma_semaphore, #tpu.memory_space<semaphore_mem>> -> memref<1x!tpu.dma_semaphore, #tpu.memory_space<semaphore_mem>>
    %529 = tpu.memref_squeeze %528 : memref<1x!tpu.dma_semaphore, #tpu.memory_space<semaphore_mem>> -> memref<!tpu.dma_semaphore, #tpu.memory_space<semaphore_mem>>
    tpu.wait_dma2 semaphore(%529 : memref<!tpu.dma_semaphore, #tpu.memory_space<semaphore_mem>>) src(%526 : memref<1x128xf32, #tpu.memory_space<any>>) dst(%527 : memref<1x128xf32, #tpu.memory_space<vmem>>)
    %c2_i32_392 = arith.constant 2 : i32
    %c0_i32_393 = arith.constant 0 : i32
    %530 = tpu.memref_slice %arg2[%60, %c0_i32_393] : memref<501x128xf32, #tpu.memory_space<any>> -> memref<1x128xf32, #tpu.memory_space<any>>
    %c19_i32_394 = arith.constant 19 : i32
    %c0_i32_395 = arith.constant 0 : i32
    %531 = tpu.memref_slice %arg4[%c19_i32_394, %c0_i32_395] : memref<64x128xf32, #tpu.memory_space<vmem>> -> memref<1x128xf32, #tpu.memory_space<vmem>>
    %532 = tpu.memref_slice %arg5[%c2_i32_392] : memref<8x!tpu.dma_semaphore, #tpu.memory_space<semaphore_mem>> -> memref<1x!tpu.dma_semaphore, #tpu.memory_space<semaphore_mem>>
    %533 = tpu.memref_squeeze %532 : memref<1x!tpu.dma_semaphore, #tpu.memory_space<semaphore_mem>> -> memref<!tpu.dma_semaphore, #tpu.memory_space<semaphore_mem>>
    tpu.wait_dma2 semaphore(%533 : memref<!tpu.dma_semaphore, #tpu.memory_space<semaphore_mem>>) src(%530 : memref<1x128xf32, #tpu.memory_space<any>>) dst(%531 : memref<1x128xf32, #tpu.memory_space<vmem>>)
    %c2_i32_396 = arith.constant 2 : i32
    %c0_i32_397 = arith.constant 0 : i32
    %534 = tpu.memref_slice %arg2[%63, %c0_i32_397] : memref<501x128xf32, #tpu.memory_space<any>> -> memref<1x128xf32, #tpu.memory_space<any>>
    %c20_i32_398 = arith.constant 20 : i32
    %c0_i32_399 = arith.constant 0 : i32
    %535 = tpu.memref_slice %arg4[%c20_i32_398, %c0_i32_399] : memref<64x128xf32, #tpu.memory_space<vmem>> -> memref<1x128xf32, #tpu.memory_space<vmem>>
    %536 = tpu.memref_slice %arg5[%c2_i32_396] : memref<8x!tpu.dma_semaphore, #tpu.memory_space<semaphore_mem>> -> memref<1x!tpu.dma_semaphore, #tpu.memory_space<semaphore_mem>>
    %537 = tpu.memref_squeeze %536 : memref<1x!tpu.dma_semaphore, #tpu.memory_space<semaphore_mem>> -> memref<!tpu.dma_semaphore, #tpu.memory_space<semaphore_mem>>
    tpu.wait_dma2 semaphore(%537 : memref<!tpu.dma_semaphore, #tpu.memory_space<semaphore_mem>>) src(%534 : memref<1x128xf32, #tpu.memory_space<any>>) dst(%535 : memref<1x128xf32, #tpu.memory_space<vmem>>)
    %c2_i32_400 = arith.constant 2 : i32
    %c0_i32_401 = arith.constant 0 : i32
    %538 = tpu.memref_slice %arg2[%66, %c0_i32_401] : memref<501x128xf32, #tpu.memory_space<any>> -> memref<1x128xf32, #tpu.memory_space<any>>
    %c21_i32_402 = arith.constant 21 : i32
    %c0_i32_403 = arith.constant 0 : i32
    %539 = tpu.memref_slice %arg4[%c21_i32_402, %c0_i32_403] : memref<64x128xf32, #tpu.memory_space<vmem>> -> memref<1x128xf32, #tpu.memory_space<vmem>>
    %540 = tpu.memref_slice %arg5[%c2_i32_400] : memref<8x!tpu.dma_semaphore, #tpu.memory_space<semaphore_mem>> -> memref<1x!tpu.dma_semaphore, #tpu.memory_space<semaphore_mem>>
    %541 = tpu.memref_squeeze %540 : memref<1x!tpu.dma_semaphore, #tpu.memory_space<semaphore_mem>> -> memref<!tpu.dma_semaphore, #tpu.memory_space<semaphore_mem>>
    tpu.wait_dma2 semaphore(%541 : memref<!tpu.dma_semaphore, #tpu.memory_space<semaphore_mem>>) src(%538 : memref<1x128xf32, #tpu.memory_space<any>>) dst(%539 : memref<1x128xf32, #tpu.memory_space<vmem>>)
    %c2_i32_404 = arith.constant 2 : i32
    %c0_i32_405 = arith.constant 0 : i32
    %542 = tpu.memref_slice %arg2[%69, %c0_i32_405] : memref<501x128xf32, #tpu.memory_space<any>> -> memref<1x128xf32, #tpu.memory_space<any>>
    %c22_i32_406 = arith.constant 22 : i32
    %c0_i32_407 = arith.constant 0 : i32
    %543 = tpu.memref_slice %arg4[%c22_i32_406, %c0_i32_407] : memref<64x128xf32, #tpu.memory_space<vmem>> -> memref<1x128xf32, #tpu.memory_space<vmem>>
    %544 = tpu.memref_slice %arg5[%c2_i32_404] : memref<8x!tpu.dma_semaphore, #tpu.memory_space<semaphore_mem>> -> memref<1x!tpu.dma_semaphore, #tpu.memory_space<semaphore_mem>>
    %545 = tpu.memref_squeeze %544 : memref<1x!tpu.dma_semaphore, #tpu.memory_space<semaphore_mem>> -> memref<!tpu.dma_semaphore, #tpu.memory_space<semaphore_mem>>
    tpu.wait_dma2 semaphore(%545 : memref<!tpu.dma_semaphore, #tpu.memory_space<semaphore_mem>>) src(%542 : memref<1x128xf32, #tpu.memory_space<any>>) dst(%543 : memref<1x128xf32, #tpu.memory_space<vmem>>)
    %c2_i32_408 = arith.constant 2 : i32
    %c0_i32_409 = arith.constant 0 : i32
    %546 = tpu.memref_slice %arg2[%72, %c0_i32_409] : memref<501x128xf32, #tpu.memory_space<any>> -> memref<1x128xf32, #tpu.memory_space<any>>
    %c23_i32_410 = arith.constant 23 : i32
    %c0_i32_411 = arith.constant 0 : i32
    %547 = tpu.memref_slice %arg4[%c23_i32_410, %c0_i32_411] : memref<64x128xf32, #tpu.memory_space<vmem>> -> memref<1x128xf32, #tpu.memory_space<vmem>>
    %548 = tpu.memref_slice %arg5[%c2_i32_408] : memref<8x!tpu.dma_semaphore, #tpu.memory_space<semaphore_mem>> -> memref<1x!tpu.dma_semaphore, #tpu.memory_space<semaphore_mem>>
    %549 = tpu.memref_squeeze %548 : memref<1x!tpu.dma_semaphore, #tpu.memory_space<semaphore_mem>> -> memref<!tpu.dma_semaphore, #tpu.memory_space<semaphore_mem>>
    tpu.wait_dma2 semaphore(%549 : memref<!tpu.dma_semaphore, #tpu.memory_space<semaphore_mem>>) src(%546 : memref<1x128xf32, #tpu.memory_space<any>>) dst(%547 : memref<1x128xf32, #tpu.memory_space<vmem>>)
    %c16 = arith.constant 16 : index
    %c0_412 = arith.constant 0 : index
    %550 = vector.load %arg4[%c16, %c0_412] : memref<64x128xf32, #tpu.memory_space<vmem>>, vector<8x128xf32>
    %551 = arith.addf %517, %550 : vector<8x128xf32>
    %c3_i32_413 = arith.constant 3 : i32
    %c0_i32_414 = arith.constant 0 : i32
    %552 = tpu.memref_slice %arg2[%75, %c0_i32_414] : memref<501x128xf32, #tpu.memory_space<any>> -> memref<1x128xf32, #tpu.memory_space<any>>
    %c24_i32_415 = arith.constant 24 : i32
    %c0_i32_416 = arith.constant 0 : i32
    %553 = tpu.memref_slice %arg4[%c24_i32_415, %c0_i32_416] : memref<64x128xf32, #tpu.memory_space<vmem>> -> memref<1x128xf32, #tpu.memory_space<vmem>>
    %554 = tpu.memref_slice %arg5[%c3_i32_413] : memref<8x!tpu.dma_semaphore, #tpu.memory_space<semaphore_mem>> -> memref<1x!tpu.dma_semaphore, #tpu.memory_space<semaphore_mem>>
    %555 = tpu.memref_squeeze %554 : memref<1x!tpu.dma_semaphore, #tpu.memory_space<semaphore_mem>> -> memref<!tpu.dma_semaphore, #tpu.memory_space<semaphore_mem>>
    tpu.wait_dma2 semaphore(%555 : memref<!tpu.dma_semaphore, #tpu.memory_space<semaphore_mem>>) src(%552 : memref<1x128xf32, #tpu.memory_space<any>>) dst(%553 : memref<1x128xf32, #tpu.memory_space<vmem>>)
    %c3_i32_417 = arith.constant 3 : i32
    %c0_i32_418 = arith.constant 0 : i32
    %556 = tpu.memref_slice %arg2[%78, %c0_i32_418] : memref<501x128xf32, #tpu.memory_space<any>> -> memref<1x128xf32, #tpu.memory_space<any>>
    %c25_i32_419 = arith.constant 25 : i32
    %c0_i32_420 = arith.constant 0 : i32
    %557 = tpu.memref_slice %arg4[%c25_i32_419, %c0_i32_420] : memref<64x128xf32, #tpu.memory_space<vmem>> -> memref<1x128xf32, #tpu.memory_space<vmem>>
    %558 = tpu.memref_slice %arg5[%c3_i32_417] : memref<8x!tpu.dma_semaphore, #tpu.memory_space<semaphore_mem>> -> memref<1x!tpu.dma_semaphore, #tpu.memory_space<semaphore_mem>>
    %559 = tpu.memref_squeeze %558 : memref<1x!tpu.dma_semaphore, #tpu.memory_space<semaphore_mem>> -> memref<!tpu.dma_semaphore, #tpu.memory_space<semaphore_mem>>
    tpu.wait_dma2 semaphore(%559 : memref<!tpu.dma_semaphore, #tpu.memory_space<semaphore_mem>>) src(%556 : memref<1x128xf32, #tpu.memory_space<any>>) dst(%557 : memref<1x128xf32, #tpu.memory_space<vmem>>)
    %c3_i32_421 = arith.constant 3 : i32
    %c0_i32_422 = arith.constant 0 : i32
    %560 = tpu.memref_slice %arg2[%81, %c0_i32_422] : memref<501x128xf32, #tpu.memory_space<any>> -> memref<1x128xf32, #tpu.memory_space<any>>
    %c26_i32_423 = arith.constant 26 : i32
    %c0_i32_424 = arith.constant 0 : i32
    %561 = tpu.memref_slice %arg4[%c26_i32_423, %c0_i32_424] : memref<64x128xf32, #tpu.memory_space<vmem>> -> memref<1x128xf32, #tpu.memory_space<vmem>>
    %562 = tpu.memref_slice %arg5[%c3_i32_421] : memref<8x!tpu.dma_semaphore, #tpu.memory_space<semaphore_mem>> -> memref<1x!tpu.dma_semaphore, #tpu.memory_space<semaphore_mem>>
    %563 = tpu.memref_squeeze %562 : memref<1x!tpu.dma_semaphore, #tpu.memory_space<semaphore_mem>> -> memref<!tpu.dma_semaphore, #tpu.memory_space<semaphore_mem>>
    tpu.wait_dma2 semaphore(%563 : memref<!tpu.dma_semaphore, #tpu.memory_space<semaphore_mem>>) src(%560 : memref<1x128xf32, #tpu.memory_space<any>>) dst(%561 : memref<1x128xf32, #tpu.memory_space<vmem>>)
    %c3_i32_425 = arith.constant 3 : i32
    %c0_i32_426 = arith.constant 0 : i32
    %564 = tpu.memref_slice %arg2[%84, %c0_i32_426] : memref<501x128xf32, #tpu.memory_space<any>> -> memref<1x128xf32, #tpu.memory_space<any>>
    %c27_i32_427 = arith.constant 27 : i32
    %c0_i32_428 = arith.constant 0 : i32
    %565 = tpu.memref_slice %arg4[%c27_i32_427, %c0_i32_428] : memref<64x128xf32, #tpu.memory_space<vmem>> -> memref<1x128xf32, #tpu.memory_space<vmem>>
    %566 = tpu.memref_slice %arg5[%c3_i32_425] : memref<8x!tpu.dma_semaphore, #tpu.memory_space<semaphore_mem>> -> memref<1x!tpu.dma_semaphore, #tpu.memory_space<semaphore_mem>>
    %567 = tpu.memref_squeeze %566 : memref<1x!tpu.dma_semaphore, #tpu.memory_space<semaphore_mem>> -> memref<!tpu.dma_semaphore, #tpu.memory_space<semaphore_mem>>
    tpu.wait_dma2 semaphore(%567 : memref<!tpu.dma_semaphore, #tpu.memory_space<semaphore_mem>>) src(%564 : memref<1x128xf32, #tpu.memory_space<any>>) dst(%565 : memref<1x128xf32, #tpu.memory_space<vmem>>)
    %c3_i32_429 = arith.constant 3 : i32
    %c0_i32_430 = arith.constant 0 : i32
    %568 = tpu.memref_slice %arg2[%87, %c0_i32_430] : memref<501x128xf32, #tpu.memory_space<any>> -> memref<1x128xf32, #tpu.memory_space<any>>
    %c28_i32_431 = arith.constant 28 : i32
    %c0_i32_432 = arith.constant 0 : i32
    %569 = tpu.memref_slice %arg4[%c28_i32_431, %c0_i32_432] : memref<64x128xf32, #tpu.memory_space<vmem>> -> memref<1x128xf32, #tpu.memory_space<vmem>>
    %570 = tpu.memref_slice %arg5[%c3_i32_429] : memref<8x!tpu.dma_semaphore, #tpu.memory_space<semaphore_mem>> -> memref<1x!tpu.dma_semaphore, #tpu.memory_space<semaphore_mem>>
    %571 = tpu.memref_squeeze %570 : memref<1x!tpu.dma_semaphore, #tpu.memory_space<semaphore_mem>> -> memref<!tpu.dma_semaphore, #tpu.memory_space<semaphore_mem>>
    tpu.wait_dma2 semaphore(%571 : memref<!tpu.dma_semaphore, #tpu.memory_space<semaphore_mem>>) src(%568 : memref<1x128xf32, #tpu.memory_space<any>>) dst(%569 : memref<1x128xf32, #tpu.memory_space<vmem>>)
    %c3_i32_433 = arith.constant 3 : i32
    %c0_i32_434 = arith.constant 0 : i32
    %572 = tpu.memref_slice %arg2[%90, %c0_i32_434] : memref<501x128xf32, #tpu.memory_space<any>> -> memref<1x128xf32, #tpu.memory_space<any>>
    %c29_i32_435 = arith.constant 29 : i32
    %c0_i32_436 = arith.constant 0 : i32
    %573 = tpu.memref_slice %arg4[%c29_i32_435, %c0_i32_436] : memref<64x128xf32, #tpu.memory_space<vmem>> -> memref<1x128xf32, #tpu.memory_space<vmem>>
    %574 = tpu.memref_slice %arg5[%c3_i32_433] : memref<8x!tpu.dma_semaphore, #tpu.memory_space<semaphore_mem>> -> memref<1x!tpu.dma_semaphore, #tpu.memory_space<semaphore_mem>>
    %575 = tpu.memref_squeeze %574 : memref<1x!tpu.dma_semaphore, #tpu.memory_space<semaphore_mem>> -> memref<!tpu.dma_semaphore, #tpu.memory_space<semaphore_mem>>
    tpu.wait_dma2 semaphore(%575 : memref<!tpu.dma_semaphore, #tpu.memory_space<semaphore_mem>>) src(%572 : memref<1x128xf32, #tpu.memory_space<any>>) dst(%573 : memref<1x128xf32, #tpu.memory_space<vmem>>)
    %c3_i32_437 = arith.constant 3 : i32
    %c0_i32_438 = arith.constant 0 : i32
    %576 = tpu.memref_slice %arg2[%93, %c0_i32_438] : memref<501x128xf32, #tpu.memory_space<any>> -> memref<1x128xf32, #tpu.memory_space<any>>
    %c30_i32_439 = arith.constant 30 : i32
    %c0_i32_440 = arith.constant 0 : i32
    %577 = tpu.memref_slice %arg4[%c30_i32_439, %c0_i32_440] : memref<64x128xf32, #tpu.memory_space<vmem>> -> memref<1x128xf32, #tpu.memory_space<vmem>>
    %578 = tpu.memref_slice %arg5[%c3_i32_437] : memref<8x!tpu.dma_semaphore, #tpu.memory_space<semaphore_mem>> -> memref<1x!tpu.dma_semaphore, #tpu.memory_space<semaphore_mem>>
    %579 = tpu.memref_squeeze %578 : memref<1x!tpu.dma_semaphore, #tpu.memory_space<semaphore_mem>> -> memref<!tpu.dma_semaphore, #tpu.memory_space<semaphore_mem>>
    tpu.wait_dma2 semaphore(%579 : memref<!tpu.dma_semaphore, #tpu.memory_space<semaphore_mem>>) src(%576 : memref<1x128xf32, #tpu.memory_space<any>>) dst(%577 : memref<1x128xf32, #tpu.memory_space<vmem>>)
    %c3_i32_441 = arith.constant 3 : i32
    %c0_i32_442 = arith.constant 0 : i32
    %580 = tpu.memref_slice %arg2[%96, %c0_i32_442] : memref<501x128xf32, #tpu.memory_space<any>> -> memref<1x128xf32, #tpu.memory_space<any>>
    %c31_i32_443 = arith.constant 31 : i32
    %c0_i32_444 = arith.constant 0 : i32
    %581 = tpu.memref_slice %arg4[%c31_i32_443, %c0_i32_444] : memref<64x128xf32, #tpu.memory_space<vmem>> -> memref<1x128xf32, #tpu.memory_space<vmem>>
    %582 = tpu.memref_slice %arg5[%c3_i32_441] : memref<8x!tpu.dma_semaphore, #tpu.memory_space<semaphore_mem>> -> memref<1x!tpu.dma_semaphore, #tpu.memory_space<semaphore_mem>>
    %583 = tpu.memref_squeeze %582 : memref<1x!tpu.dma_semaphore, #tpu.memory_space<semaphore_mem>> -> memref<!tpu.dma_semaphore, #tpu.memory_space<semaphore_mem>>
    tpu.wait_dma2 semaphore(%583 : memref<!tpu.dma_semaphore, #tpu.memory_space<semaphore_mem>>) src(%580 : memref<1x128xf32, #tpu.memory_space<any>>) dst(%581 : memref<1x128xf32, #tpu.memory_space<vmem>>)
    %c24 = arith.constant 24 : index
    %c0_445 = arith.constant 0 : index
    %584 = vector.load %arg4[%c24, %c0_445] : memref<64x128xf32, #tpu.memory_space<vmem>>, vector<8x128xf32>
    %585 = arith.addf %551, %584 : vector<8x128xf32>
    %c4_i32_446 = arith.constant 4 : i32
    %c0_i32_447 = arith.constant 0 : i32
    %586 = tpu.memref_slice %arg2[%99, %c0_i32_447] : memref<501x128xf32, #tpu.memory_space<any>> -> memref<1x128xf32, #tpu.memory_space<any>>
    %c32_i32_448 = arith.constant 32 : i32
    %c0_i32_449 = arith.constant 0 : i32
    %587 = tpu.memref_slice %arg4[%c32_i32_448, %c0_i32_449] : memref<64x128xf32, #tpu.memory_space<vmem>> -> memref<1x128xf32, #tpu.memory_space<vmem>>
    %588 = tpu.memref_slice %arg5[%c4_i32_446] : memref<8x!tpu.dma_semaphore, #tpu.memory_space<semaphore_mem>> -> memref<1x!tpu.dma_semaphore, #tpu.memory_space<semaphore_mem>>
    %589 = tpu.memref_squeeze %588 : memref<1x!tpu.dma_semaphore, #tpu.memory_space<semaphore_mem>> -> memref<!tpu.dma_semaphore, #tpu.memory_space<semaphore_mem>>
    tpu.wait_dma2 semaphore(%589 : memref<!tpu.dma_semaphore, #tpu.memory_space<semaphore_mem>>) src(%586 : memref<1x128xf32, #tpu.memory_space<any>>) dst(%587 : memref<1x128xf32, #tpu.memory_space<vmem>>)
    %c4_i32_450 = arith.constant 4 : i32
    %c0_i32_451 = arith.constant 0 : i32
    %590 = tpu.memref_slice %arg2[%102, %c0_i32_451] : memref<501x128xf32, #tpu.memory_space<any>> -> memref<1x128xf32, #tpu.memory_space<any>>
    %c33_i32_452 = arith.constant 33 : i32
    %c0_i32_453 = arith.constant 0 : i32
    %591 = tpu.memref_slice %arg4[%c33_i32_452, %c0_i32_453] : memref<64x128xf32, #tpu.memory_space<vmem>> -> memref<1x128xf32, #tpu.memory_space<vmem>>
    %592 = tpu.memref_slice %arg5[%c4_i32_450] : memref<8x!tpu.dma_semaphore, #tpu.memory_space<semaphore_mem>> -> memref<1x!tpu.dma_semaphore, #tpu.memory_space<semaphore_mem>>
    %593 = tpu.memref_squeeze %592 : memref<1x!tpu.dma_semaphore, #tpu.memory_space<semaphore_mem>> -> memref<!tpu.dma_semaphore, #tpu.memory_space<semaphore_mem>>
    tpu.wait_dma2 semaphore(%593 : memref<!tpu.dma_semaphore, #tpu.memory_space<semaphore_mem>>) src(%590 : memref<1x128xf32, #tpu.memory_space<any>>) dst(%591 : memref<1x128xf32, #tpu.memory_space<vmem>>)
    %c4_i32_454 = arith.constant 4 : i32
    %c0_i32_455 = arith.constant 0 : i32
    %594 = tpu.memref_slice %arg2[%105, %c0_i32_455] : memref<501x128xf32, #tpu.memory_space<any>> -> memref<1x128xf32, #tpu.memory_space<any>>
    %c34_i32_456 = arith.constant 34 : i32
    %c0_i32_457 = arith.constant 0 : i32
    %595 = tpu.memref_slice %arg4[%c34_i32_456, %c0_i32_457] : memref<64x128xf32, #tpu.memory_space<vmem>> -> memref<1x128xf32, #tpu.memory_space<vmem>>
    %596 = tpu.memref_slice %arg5[%c4_i32_454] : memref<8x!tpu.dma_semaphore, #tpu.memory_space<semaphore_mem>> -> memref<1x!tpu.dma_semaphore, #tpu.memory_space<semaphore_mem>>
    %597 = tpu.memref_squeeze %596 : memref<1x!tpu.dma_semaphore, #tpu.memory_space<semaphore_mem>> -> memref<!tpu.dma_semaphore, #tpu.memory_space<semaphore_mem>>
    tpu.wait_dma2 semaphore(%597 : memref<!tpu.dma_semaphore, #tpu.memory_space<semaphore_mem>>) src(%594 : memref<1x128xf32, #tpu.memory_space<any>>) dst(%595 : memref<1x128xf32, #tpu.memory_space<vmem>>)
    %c4_i32_458 = arith.constant 4 : i32
    %c0_i32_459 = arith.constant 0 : i32
    %598 = tpu.memref_slice %arg2[%108, %c0_i32_459] : memref<501x128xf32, #tpu.memory_space<any>> -> memref<1x128xf32, #tpu.memory_space<any>>
    %c35_i32_460 = arith.constant 35 : i32
    %c0_i32_461 = arith.constant 0 : i32
    %599 = tpu.memref_slice %arg4[%c35_i32_460, %c0_i32_461] : memref<64x128xf32, #tpu.memory_space<vmem>> -> memref<1x128xf32, #tpu.memory_space<vmem>>
    %600 = tpu.memref_slice %arg5[%c4_i32_458] : memref<8x!tpu.dma_semaphore, #tpu.memory_space<semaphore_mem>> -> memref<1x!tpu.dma_semaphore, #tpu.memory_space<semaphore_mem>>
    %601 = tpu.memref_squeeze %600 : memref<1x!tpu.dma_semaphore, #tpu.memory_space<semaphore_mem>> -> memref<!tpu.dma_semaphore, #tpu.memory_space<semaphore_mem>>
    tpu.wait_dma2 semaphore(%601 : memref<!tpu.dma_semaphore, #tpu.memory_space<semaphore_mem>>) src(%598 : memref<1x128xf32, #tpu.memory_space<any>>) dst(%599 : memref<1x128xf32, #tpu.memory_space<vmem>>)
    %c4_i32_462 = arith.constant 4 : i32
    %c0_i32_463 = arith.constant 0 : i32
    %602 = tpu.memref_slice %arg2[%111, %c0_i32_463] : memref<501x128xf32, #tpu.memory_space<any>> -> memref<1x128xf32, #tpu.memory_space<any>>
    %c36_i32_464 = arith.constant 36 : i32
    %c0_i32_465 = arith.constant 0 : i32
    %603 = tpu.memref_slice %arg4[%c36_i32_464, %c0_i32_465] : memref<64x128xf32, #tpu.memory_space<vmem>> -> memref<1x128xf32, #tpu.memory_space<vmem>>
    %604 = tpu.memref_slice %arg5[%c4_i32_462] : memref<8x!tpu.dma_semaphore, #tpu.memory_space<semaphore_mem>> -> memref<1x!tpu.dma_semaphore, #tpu.memory_space<semaphore_mem>>
    %605 = tpu.memref_squeeze %604 : memref<1x!tpu.dma_semaphore, #tpu.memory_space<semaphore_mem>> -> memref<!tpu.dma_semaphore, #tpu.memory_space<semaphore_mem>>
    tpu.wait_dma2 semaphore(%605 : memref<!tpu.dma_semaphore, #tpu.memory_space<semaphore_mem>>) src(%602 : memref<1x128xf32, #tpu.memory_space<any>>) dst(%603 : memref<1x128xf32, #tpu.memory_space<vmem>>)
    %c4_i32_466 = arith.constant 4 : i32
    %c0_i32_467 = arith.constant 0 : i32
    %606 = tpu.memref_slice %arg2[%114, %c0_i32_467] : memref<501x128xf32, #tpu.memory_space<any>> -> memref<1x128xf32, #tpu.memory_space<any>>
    %c37_i32_468 = arith.constant 37 : i32
    %c0_i32_469 = arith.constant 0 : i32
    %607 = tpu.memref_slice %arg4[%c37_i32_468, %c0_i32_469] : memref<64x128xf32, #tpu.memory_space<vmem>> -> memref<1x128xf32, #tpu.memory_space<vmem>>
    %608 = tpu.memref_slice %arg5[%c4_i32_466] : memref<8x!tpu.dma_semaphore, #tpu.memory_space<semaphore_mem>> -> memref<1x!tpu.dma_semaphore, #tpu.memory_space<semaphore_mem>>
    %609 = tpu.memref_squeeze %608 : memref<1x!tpu.dma_semaphore, #tpu.memory_space<semaphore_mem>> -> memref<!tpu.dma_semaphore, #tpu.memory_space<semaphore_mem>>
    tpu.wait_dma2 semaphore(%609 : memref<!tpu.dma_semaphore, #tpu.memory_space<semaphore_mem>>) src(%606 : memref<1x128xf32, #tpu.memory_space<any>>) dst(%607 : memref<1x128xf32, #tpu.memory_space<vmem>>)
    %c4_i32_470 = arith.constant 4 : i32
    %c0_i32_471 = arith.constant 0 : i32
    %610 = tpu.memref_slice %arg2[%117, %c0_i32_471] : memref<501x128xf32, #tpu.memory_space<any>> -> memref<1x128xf32, #tpu.memory_space<any>>
    %c38_i32_472 = arith.constant 38 : i32
    %c0_i32_473 = arith.constant 0 : i32
    %611 = tpu.memref_slice %arg4[%c38_i32_472, %c0_i32_473] : memref<64x128xf32, #tpu.memory_space<vmem>> -> memref<1x128xf32, #tpu.memory_space<vmem>>
    %612 = tpu.memref_slice %arg5[%c4_i32_470] : memref<8x!tpu.dma_semaphore, #tpu.memory_space<semaphore_mem>> -> memref<1x!tpu.dma_semaphore, #tpu.memory_space<semaphore_mem>>
    %613 = tpu.memref_squeeze %612 : memref<1x!tpu.dma_semaphore, #tpu.memory_space<semaphore_mem>> -> memref<!tpu.dma_semaphore, #tpu.memory_space<semaphore_mem>>
    tpu.wait_dma2 semaphore(%613 : memref<!tpu.dma_semaphore, #tpu.memory_space<semaphore_mem>>) src(%610 : memref<1x128xf32, #tpu.memory_space<any>>) dst(%611 : memref<1x128xf32, #tpu.memory_space<vmem>>)
    %c4_i32_474 = arith.constant 4 : i32
    %c0_i32_475 = arith.constant 0 : i32
    %614 = tpu.memref_slice %arg2[%120, %c0_i32_475] : memref<501x128xf32, #tpu.memory_space<any>> -> memref<1x128xf32, #tpu.memory_space<any>>
    %c39_i32_476 = arith.constant 39 : i32
    %c0_i32_477 = arith.constant 0 : i32
    %615 = tpu.memref_slice %arg4[%c39_i32_476, %c0_i32_477] : memref<64x128xf32, #tpu.memory_space<vmem>> -> memref<1x128xf32, #tpu.memory_space<vmem>>
    %616 = tpu.memref_slice %arg5[%c4_i32_474] : memref<8x!tpu.dma_semaphore, #tpu.memory_space<semaphore_mem>> -> memref<1x!tpu.dma_semaphore, #tpu.memory_space<semaphore_mem>>
    %617 = tpu.memref_squeeze %616 : memref<1x!tpu.dma_semaphore, #tpu.memory_space<semaphore_mem>> -> memref<!tpu.dma_semaphore, #tpu.memory_space<semaphore_mem>>
    tpu.wait_dma2 semaphore(%617 : memref<!tpu.dma_semaphore, #tpu.memory_space<semaphore_mem>>) src(%614 : memref<1x128xf32, #tpu.memory_space<any>>) dst(%615 : memref<1x128xf32, #tpu.memory_space<vmem>>)
    %c32 = arith.constant 32 : index
    %c0_478 = arith.constant 0 : index
    %618 = vector.load %arg4[%c32, %c0_478] : memref<64x128xf32, #tpu.memory_space<vmem>>, vector<8x128xf32>
    %619 = arith.addf %585, %618 : vector<8x128xf32>
    %c5_i32_479 = arith.constant 5 : i32
    %c0_i32_480 = arith.constant 0 : i32
    %620 = tpu.memref_slice %arg2[%123, %c0_i32_480] : memref<501x128xf32, #tpu.memory_space<any>> -> memref<1x128xf32, #tpu.memory_space<any>>
    %c40_i32_481 = arith.constant 40 : i32
    %c0_i32_482 = arith.constant 0 : i32
    %621 = tpu.memref_slice %arg4[%c40_i32_481, %c0_i32_482] : memref<64x128xf32, #tpu.memory_space<vmem>> -> memref<1x128xf32, #tpu.memory_space<vmem>>
    %622 = tpu.memref_slice %arg5[%c5_i32_479] : memref<8x!tpu.dma_semaphore, #tpu.memory_space<semaphore_mem>> -> memref<1x!tpu.dma_semaphore, #tpu.memory_space<semaphore_mem>>
    %623 = tpu.memref_squeeze %622 : memref<1x!tpu.dma_semaphore, #tpu.memory_space<semaphore_mem>> -> memref<!tpu.dma_semaphore, #tpu.memory_space<semaphore_mem>>
    tpu.wait_dma2 semaphore(%623 : memref<!tpu.dma_semaphore, #tpu.memory_space<semaphore_mem>>) src(%620 : memref<1x128xf32, #tpu.memory_space<any>>) dst(%621 : memref<1x128xf32, #tpu.memory_space<vmem>>)
    %c5_i32_483 = arith.constant 5 : i32
    %c0_i32_484 = arith.constant 0 : i32
    %624 = tpu.memref_slice %arg2[%126, %c0_i32_484] : memref<501x128xf32, #tpu.memory_space<any>> -> memref<1x128xf32, #tpu.memory_space<any>>
    %c41_i32_485 = arith.constant 41 : i32
    %c0_i32_486 = arith.constant 0 : i32
    %625 = tpu.memref_slice %arg4[%c41_i32_485, %c0_i32_486] : memref<64x128xf32, #tpu.memory_space<vmem>> -> memref<1x128xf32, #tpu.memory_space<vmem>>
    %626 = tpu.memref_slice %arg5[%c5_i32_483] : memref<8x!tpu.dma_semaphore, #tpu.memory_space<semaphore_mem>> -> memref<1x!tpu.dma_semaphore, #tpu.memory_space<semaphore_mem>>
    %627 = tpu.memref_squeeze %626 : memref<1x!tpu.dma_semaphore, #tpu.memory_space<semaphore_mem>> -> memref<!tpu.dma_semaphore, #tpu.memory_space<semaphore_mem>>
    tpu.wait_dma2 semaphore(%627 : memref<!tpu.dma_semaphore, #tpu.memory_space<semaphore_mem>>) src(%624 : memref<1x128xf32, #tpu.memory_space<any>>) dst(%625 : memref<1x128xf32, #tpu.memory_space<vmem>>)
    %c5_i32_487 = arith.constant 5 : i32
    %c0_i32_488 = arith.constant 0 : i32
    %628 = tpu.memref_slice %arg2[%129, %c0_i32_488] : memref<501x128xf32, #tpu.memory_space<any>> -> memref<1x128xf32, #tpu.memory_space<any>>
    %c42_i32_489 = arith.constant 42 : i32
    %c0_i32_490 = arith.constant 0 : i32
    %629 = tpu.memref_slice %arg4[%c42_i32_489, %c0_i32_490] : memref<64x128xf32, #tpu.memory_space<vmem>> -> memref<1x128xf32, #tpu.memory_space<vmem>>
    %630 = tpu.memref_slice %arg5[%c5_i32_487] : memref<8x!tpu.dma_semaphore, #tpu.memory_space<semaphore_mem>> -> memref<1x!tpu.dma_semaphore, #tpu.memory_space<semaphore_mem>>
    %631 = tpu.memref_squeeze %630 : memref<1x!tpu.dma_semaphore, #tpu.memory_space<semaphore_mem>> -> memref<!tpu.dma_semaphore, #tpu.memory_space<semaphore_mem>>
    tpu.wait_dma2 semaphore(%631 : memref<!tpu.dma_semaphore, #tpu.memory_space<semaphore_mem>>) src(%628 : memref<1x128xf32, #tpu.memory_space<any>>) dst(%629 : memref<1x128xf32, #tpu.memory_space<vmem>>)
    %c5_i32_491 = arith.constant 5 : i32
    %c0_i32_492 = arith.constant 0 : i32
    %632 = tpu.memref_slice %arg2[%132, %c0_i32_492] : memref<501x128xf32, #tpu.memory_space<any>> -> memref<1x128xf32, #tpu.memory_space<any>>
    %c43_i32_493 = arith.constant 43 : i32
    %c0_i32_494 = arith.constant 0 : i32
    %633 = tpu.memref_slice %arg4[%c43_i32_493, %c0_i32_494] : memref<64x128xf32, #tpu.memory_space<vmem>> -> memref<1x128xf32, #tpu.memory_space<vmem>>
    %634 = tpu.memref_slice %arg5[%c5_i32_491] : memref<8x!tpu.dma_semaphore, #tpu.memory_space<semaphore_mem>> -> memref<1x!tpu.dma_semaphore, #tpu.memory_space<semaphore_mem>>
    %635 = tpu.memref_squeeze %634 : memref<1x!tpu.dma_semaphore, #tpu.memory_space<semaphore_mem>> -> memref<!tpu.dma_semaphore, #tpu.memory_space<semaphore_mem>>
    tpu.wait_dma2 semaphore(%635 : memref<!tpu.dma_semaphore, #tpu.memory_space<semaphore_mem>>) src(%632 : memref<1x128xf32, #tpu.memory_space<any>>) dst(%633 : memref<1x128xf32, #tpu.memory_space<vmem>>)
    %c5_i32_495 = arith.constant 5 : i32
    %c0_i32_496 = arith.constant 0 : i32
    %636 = tpu.memref_slice %arg2[%135, %c0_i32_496] : memref<501x128xf32, #tpu.memory_space<any>> -> memref<1x128xf32, #tpu.memory_space<any>>
    %c44_i32_497 = arith.constant 44 : i32
    %c0_i32_498 = arith.constant 0 : i32
    %637 = tpu.memref_slice %arg4[%c44_i32_497, %c0_i32_498] : memref<64x128xf32, #tpu.memory_space<vmem>> -> memref<1x128xf32, #tpu.memory_space<vmem>>
    %638 = tpu.memref_slice %arg5[%c5_i32_495] : memref<8x!tpu.dma_semaphore, #tpu.memory_space<semaphore_mem>> -> memref<1x!tpu.dma_semaphore, #tpu.memory_space<semaphore_mem>>
    %639 = tpu.memref_squeeze %638 : memref<1x!tpu.dma_semaphore, #tpu.memory_space<semaphore_mem>> -> memref<!tpu.dma_semaphore, #tpu.memory_space<semaphore_mem>>
    tpu.wait_dma2 semaphore(%639 : memref<!tpu.dma_semaphore, #tpu.memory_space<semaphore_mem>>) src(%636 : memref<1x128xf32, #tpu.memory_space<any>>) dst(%637 : memref<1x128xf32, #tpu.memory_space<vmem>>)
    %c5_i32_499 = arith.constant 5 : i32
    %c0_i32_500 = arith.constant 0 : i32
    %640 = tpu.memref_slice %arg2[%138, %c0_i32_500] : memref<501x128xf32, #tpu.memory_space<any>> -> memref<1x128xf32, #tpu.memory_space<any>>
    %c45_i32_501 = arith.constant 45 : i32
    %c0_i32_502 = arith.constant 0 : i32
    %641 = tpu.memref_slice %arg4[%c45_i32_501, %c0_i32_502] : memref<64x128xf32, #tpu.memory_space<vmem>> -> memref<1x128xf32, #tpu.memory_space<vmem>>
    %642 = tpu.memref_slice %arg5[%c5_i32_499] : memref<8x!tpu.dma_semaphore, #tpu.memory_space<semaphore_mem>> -> memref<1x!tpu.dma_semaphore, #tpu.memory_space<semaphore_mem>>
    %643 = tpu.memref_squeeze %642 : memref<1x!tpu.dma_semaphore, #tpu.memory_space<semaphore_mem>> -> memref<!tpu.dma_semaphore, #tpu.memory_space<semaphore_mem>>
    tpu.wait_dma2 semaphore(%643 : memref<!tpu.dma_semaphore, #tpu.memory_space<semaphore_mem>>) src(%640 : memref<1x128xf32, #tpu.memory_space<any>>) dst(%641 : memref<1x128xf32, #tpu.memory_space<vmem>>)
    %c5_i32_503 = arith.constant 5 : i32
    %c0_i32_504 = arith.constant 0 : i32
    %644 = tpu.memref_slice %arg2[%141, %c0_i32_504] : memref<501x128xf32, #tpu.memory_space<any>> -> memref<1x128xf32, #tpu.memory_space<any>>
    %c46_i32_505 = arith.constant 46 : i32
    %c0_i32_506 = arith.constant 0 : i32
    %645 = tpu.memref_slice %arg4[%c46_i32_505, %c0_i32_506] : memref<64x128xf32, #tpu.memory_space<vmem>> -> memref<1x128xf32, #tpu.memory_space<vmem>>
    %646 = tpu.memref_slice %arg5[%c5_i32_503] : memref<8x!tpu.dma_semaphore, #tpu.memory_space<semaphore_mem>> -> memref<1x!tpu.dma_semaphore, #tpu.memory_space<semaphore_mem>>
    %647 = tpu.memref_squeeze %646 : memref<1x!tpu.dma_semaphore, #tpu.memory_space<semaphore_mem>> -> memref<!tpu.dma_semaphore, #tpu.memory_space<semaphore_mem>>
    tpu.wait_dma2 semaphore(%647 : memref<!tpu.dma_semaphore, #tpu.memory_space<semaphore_mem>>) src(%644 : memref<1x128xf32, #tpu.memory_space<any>>) dst(%645 : memref<1x128xf32, #tpu.memory_space<vmem>>)
    %c5_i32_507 = arith.constant 5 : i32
    %c0_i32_508 = arith.constant 0 : i32
    %648 = tpu.memref_slice %arg2[%144, %c0_i32_508] : memref<501x128xf32, #tpu.memory_space<any>> -> memref<1x128xf32, #tpu.memory_space<any>>
    %c47_i32_509 = arith.constant 47 : i32
    %c0_i32_510 = arith.constant 0 : i32
    %649 = tpu.memref_slice %arg4[%c47_i32_509, %c0_i32_510] : memref<64x128xf32, #tpu.memory_space<vmem>> -> memref<1x128xf32, #tpu.memory_space<vmem>>
    %650 = tpu.memref_slice %arg5[%c5_i32_507] : memref<8x!tpu.dma_semaphore, #tpu.memory_space<semaphore_mem>> -> memref<1x!tpu.dma_semaphore, #tpu.memory_space<semaphore_mem>>
    %651 = tpu.memref_squeeze %650 : memref<1x!tpu.dma_semaphore, #tpu.memory_space<semaphore_mem>> -> memref<!tpu.dma_semaphore, #tpu.memory_space<semaphore_mem>>
    tpu.wait_dma2 semaphore(%651 : memref<!tpu.dma_semaphore, #tpu.memory_space<semaphore_mem>>) src(%648 : memref<1x128xf32, #tpu.memory_space<any>>) dst(%649 : memref<1x128xf32, #tpu.memory_space<vmem>>)
    %c40 = arith.constant 40 : index
    %c0_511 = arith.constant 0 : index
    %652 = vector.load %arg4[%c40, %c0_511] : memref<64x128xf32, #tpu.memory_space<vmem>>, vector<8x128xf32>
    %653 = arith.addf %619, %652 : vector<8x128xf32>
    %c6_i32_512 = arith.constant 6 : i32
    %c0_i32_513 = arith.constant 0 : i32
    %654 = tpu.memref_slice %arg2[%147, %c0_i32_513] : memref<501x128xf32, #tpu.memory_space<any>> -> memref<1x128xf32, #tpu.memory_space<any>>
    %c48_i32_514 = arith.constant 48 : i32
    %c0_i32_515 = arith.constant 0 : i32
    %655 = tpu.memref_slice %arg4[%c48_i32_514, %c0_i32_515] : memref<64x128xf32, #tpu.memory_space<vmem>> -> memref<1x128xf32, #tpu.memory_space<vmem>>
    %656 = tpu.memref_slice %arg5[%c6_i32_512] : memref<8x!tpu.dma_semaphore, #tpu.memory_space<semaphore_mem>> -> memref<1x!tpu.dma_semaphore, #tpu.memory_space<semaphore_mem>>
    %657 = tpu.memref_squeeze %656 : memref<1x!tpu.dma_semaphore, #tpu.memory_space<semaphore_mem>> -> memref<!tpu.dma_semaphore, #tpu.memory_space<semaphore_mem>>
    tpu.wait_dma2 semaphore(%657 : memref<!tpu.dma_semaphore, #tpu.memory_space<semaphore_mem>>) src(%654 : memref<1x128xf32, #tpu.memory_space<any>>) dst(%655 : memref<1x128xf32, #tpu.memory_space<vmem>>)
    %c6_i32_516 = arith.constant 6 : i32
    %c0_i32_517 = arith.constant 0 : i32
    %658 = tpu.memref_slice %arg2[%150, %c0_i32_517] : memref<501x128xf32, #tpu.memory_space<any>> -> memref<1x128xf32, #tpu.memory_space<any>>
    %c49_i32_518 = arith.constant 49 : i32
    %c0_i32_519 = arith.constant 0 : i32
    %659 = tpu.memref_slice %arg4[%c49_i32_518, %c0_i32_519] : memref<64x128xf32, #tpu.memory_space<vmem>> -> memref<1x128xf32, #tpu.memory_space<vmem>>
    %660 = tpu.memref_slice %arg5[%c6_i32_516] : memref<8x!tpu.dma_semaphore, #tpu.memory_space<semaphore_mem>> -> memref<1x!tpu.dma_semaphore, #tpu.memory_space<semaphore_mem>>
    %661 = tpu.memref_squeeze %660 : memref<1x!tpu.dma_semaphore, #tpu.memory_space<semaphore_mem>> -> memref<!tpu.dma_semaphore, #tpu.memory_space<semaphore_mem>>
    tpu.wait_dma2 semaphore(%661 : memref<!tpu.dma_semaphore, #tpu.memory_space<semaphore_mem>>) src(%658 : memref<1x128xf32, #tpu.memory_space<any>>) dst(%659 : memref<1x128xf32, #tpu.memory_space<vmem>>)
    %c6_i32_520 = arith.constant 6 : i32
    %c0_i32_521 = arith.constant 0 : i32
    %662 = tpu.memref_slice %arg2[%153, %c0_i32_521] : memref<501x128xf32, #tpu.memory_space<any>> -> memref<1x128xf32, #tpu.memory_space<any>>
    %c50_i32_522 = arith.constant 50 : i32
    %c0_i32_523 = arith.constant 0 : i32
    %663 = tpu.memref_slice %arg4[%c50_i32_522, %c0_i32_523] : memref<64x128xf32, #tpu.memory_space<vmem>> -> memref<1x128xf32, #tpu.memory_space<vmem>>
    %664 = tpu.memref_slice %arg5[%c6_i32_520] : memref<8x!tpu.dma_semaphore, #tpu.memory_space<semaphore_mem>> -> memref<1x!tpu.dma_semaphore, #tpu.memory_space<semaphore_mem>>
    %665 = tpu.memref_squeeze %664 : memref<1x!tpu.dma_semaphore, #tpu.memory_space<semaphore_mem>> -> memref<!tpu.dma_semaphore, #tpu.memory_space<semaphore_mem>>
    tpu.wait_dma2 semaphore(%665 : memref<!tpu.dma_semaphore, #tpu.memory_space<semaphore_mem>>) src(%662 : memref<1x128xf32, #tpu.memory_space<any>>) dst(%663 : memref<1x128xf32, #tpu.memory_space<vmem>>)
    %c6_i32_524 = arith.constant 6 : i32
    %c0_i32_525 = arith.constant 0 : i32
    %666 = tpu.memref_slice %arg2[%156, %c0_i32_525] : memref<501x128xf32, #tpu.memory_space<any>> -> memref<1x128xf32, #tpu.memory_space<any>>
    %c51_i32_526 = arith.constant 51 : i32
    %c0_i32_527 = arith.constant 0 : i32
    %667 = tpu.memref_slice %arg4[%c51_i32_526, %c0_i32_527] : memref<64x128xf32, #tpu.memory_space<vmem>> -> memref<1x128xf32, #tpu.memory_space<vmem>>
    %668 = tpu.memref_slice %arg5[%c6_i32_524] : memref<8x!tpu.dma_semaphore, #tpu.memory_space<semaphore_mem>> -> memref<1x!tpu.dma_semaphore, #tpu.memory_space<semaphore_mem>>
    %669 = tpu.memref_squeeze %668 : memref<1x!tpu.dma_semaphore, #tpu.memory_space<semaphore_mem>> -> memref<!tpu.dma_semaphore, #tpu.memory_space<semaphore_mem>>
    tpu.wait_dma2 semaphore(%669 : memref<!tpu.dma_semaphore, #tpu.memory_space<semaphore_mem>>) src(%666 : memref<1x128xf32, #tpu.memory_space<any>>) dst(%667 : memref<1x128xf32, #tpu.memory_space<vmem>>)
    %c6_i32_528 = arith.constant 6 : i32
    %c0_i32_529 = arith.constant 0 : i32
    %670 = tpu.memref_slice %arg2[%159, %c0_i32_529] : memref<501x128xf32, #tpu.memory_space<any>> -> memref<1x128xf32, #tpu.memory_space<any>>
    %c52_i32_530 = arith.constant 52 : i32
    %c0_i32_531 = arith.constant 0 : i32
    %671 = tpu.memref_slice %arg4[%c52_i32_530, %c0_i32_531] : memref<64x128xf32, #tpu.memory_space<vmem>> -> memref<1x128xf32, #tpu.memory_space<vmem>>
    %672 = tpu.memref_slice %arg5[%c6_i32_528] : memref<8x!tpu.dma_semaphore, #tpu.memory_space<semaphore_mem>> -> memref<1x!tpu.dma_semaphore, #tpu.memory_space<semaphore_mem>>
    %673 = tpu.memref_squeeze %672 : memref<1x!tpu.dma_semaphore, #tpu.memory_space<semaphore_mem>> -> memref<!tpu.dma_semaphore, #tpu.memory_space<semaphore_mem>>
    tpu.wait_dma2 semaphore(%673 : memref<!tpu.dma_semaphore, #tpu.memory_space<semaphore_mem>>) src(%670 : memref<1x128xf32, #tpu.memory_space<any>>) dst(%671 : memref<1x128xf32, #tpu.memory_space<vmem>>)
    %c6_i32_532 = arith.constant 6 : i32
    %c0_i32_533 = arith.constant 0 : i32
    %674 = tpu.memref_slice %arg2[%162, %c0_i32_533] : memref<501x128xf32, #tpu.memory_space<any>> -> memref<1x128xf32, #tpu.memory_space<any>>
    %c53_i32_534 = arith.constant 53 : i32
    %c0_i32_535 = arith.constant 0 : i32
    %675 = tpu.memref_slice %arg4[%c53_i32_534, %c0_i32_535] : memref<64x128xf32, #tpu.memory_space<vmem>> -> memref<1x128xf32, #tpu.memory_space<vmem>>
    %676 = tpu.memref_slice %arg5[%c6_i32_532] : memref<8x!tpu.dma_semaphore, #tpu.memory_space<semaphore_mem>> -> memref<1x!tpu.dma_semaphore, #tpu.memory_space<semaphore_mem>>
    %677 = tpu.memref_squeeze %676 : memref<1x!tpu.dma_semaphore, #tpu.memory_space<semaphore_mem>> -> memref<!tpu.dma_semaphore, #tpu.memory_space<semaphore_mem>>
    tpu.wait_dma2 semaphore(%677 : memref<!tpu.dma_semaphore, #tpu.memory_space<semaphore_mem>>) src(%674 : memref<1x128xf32, #tpu.memory_space<any>>) dst(%675 : memref<1x128xf32, #tpu.memory_space<vmem>>)
    %c6_i32_536 = arith.constant 6 : i32
    %c0_i32_537 = arith.constant 0 : i32
    %678 = tpu.memref_slice %arg2[%165, %c0_i32_537] : memref<501x128xf32, #tpu.memory_space<any>> -> memref<1x128xf32, #tpu.memory_space<any>>
    %c54_i32_538 = arith.constant 54 : i32
    %c0_i32_539 = arith.constant 0 : i32
    %679 = tpu.memref_slice %arg4[%c54_i32_538, %c0_i32_539] : memref<64x128xf32, #tpu.memory_space<vmem>> -> memref<1x128xf32, #tpu.memory_space<vmem>>
    %680 = tpu.memref_slice %arg5[%c6_i32_536] : memref<8x!tpu.dma_semaphore, #tpu.memory_space<semaphore_mem>> -> memref<1x!tpu.dma_semaphore, #tpu.memory_space<semaphore_mem>>
    %681 = tpu.memref_squeeze %680 : memref<1x!tpu.dma_semaphore, #tpu.memory_space<semaphore_mem>> -> memref<!tpu.dma_semaphore, #tpu.memory_space<semaphore_mem>>
    tpu.wait_dma2 semaphore(%681 : memref<!tpu.dma_semaphore, #tpu.memory_space<semaphore_mem>>) src(%678 : memref<1x128xf32, #tpu.memory_space<any>>) dst(%679 : memref<1x128xf32, #tpu.memory_space<vmem>>)
    %c6_i32_540 = arith.constant 6 : i32
    %c0_i32_541 = arith.constant 0 : i32
    %682 = tpu.memref_slice %arg2[%168, %c0_i32_541] : memref<501x128xf32, #tpu.memory_space<any>> -> memref<1x128xf32, #tpu.memory_space<any>>
    %c55_i32_542 = arith.constant 55 : i32
    %c0_i32_543 = arith.constant 0 : i32
    %683 = tpu.memref_slice %arg4[%c55_i32_542, %c0_i32_543] : memref<64x128xf32, #tpu.memory_space<vmem>> -> memref<1x128xf32, #tpu.memory_space<vmem>>
    %684 = tpu.memref_slice %arg5[%c6_i32_540] : memref<8x!tpu.dma_semaphore, #tpu.memory_space<semaphore_mem>> -> memref<1x!tpu.dma_semaphore, #tpu.memory_space<semaphore_mem>>
    %685 = tpu.memref_squeeze %684 : memref<1x!tpu.dma_semaphore, #tpu.memory_space<semaphore_mem>> -> memref<!tpu.dma_semaphore, #tpu.memory_space<semaphore_mem>>
    tpu.wait_dma2 semaphore(%685 : memref<!tpu.dma_semaphore, #tpu.memory_space<semaphore_mem>>) src(%682 : memref<1x128xf32, #tpu.memory_space<any>>) dst(%683 : memref<1x128xf32, #tpu.memory_space<vmem>>)
    %c48 = arith.constant 48 : index
    %c0_544 = arith.constant 0 : index
    %686 = vector.load %arg4[%c48, %c0_544] : memref<64x128xf32, #tpu.memory_space<vmem>>, vector<8x128xf32>
    %687 = arith.addf %653, %686 : vector<8x128xf32>
    %c7_i32_545 = arith.constant 7 : i32
    %c0_i32_546 = arith.constant 0 : i32
    %688 = tpu.memref_slice %arg2[%171, %c0_i32_546] : memref<501x128xf32, #tpu.memory_space<any>> -> memref<1x128xf32, #tpu.memory_space<any>>
    %c56_i32_547 = arith.constant 56 : i32
    %c0_i32_548 = arith.constant 0 : i32
    %689 = tpu.memref_slice %arg4[%c56_i32_547, %c0_i32_548] : memref<64x128xf32, #tpu.memory_space<vmem>> -> memref<1x128xf32, #tpu.memory_space<vmem>>
    %690 = tpu.memref_slice %arg5[%c7_i32_545] : memref<8x!tpu.dma_semaphore, #tpu.memory_space<semaphore_mem>> -> memref<1x!tpu.dma_semaphore, #tpu.memory_space<semaphore_mem>>
    %691 = tpu.memref_squeeze %690 : memref<1x!tpu.dma_semaphore, #tpu.memory_space<semaphore_mem>> -> memref<!tpu.dma_semaphore, #tpu.memory_space<semaphore_mem>>
    tpu.wait_dma2 semaphore(%691 : memref<!tpu.dma_semaphore, #tpu.memory_space<semaphore_mem>>) src(%688 : memref<1x128xf32, #tpu.memory_space<any>>) dst(%689 : memref<1x128xf32, #tpu.memory_space<vmem>>)
    %c7_i32_549 = arith.constant 7 : i32
    %c0_i32_550 = arith.constant 0 : i32
    %692 = tpu.memref_slice %arg2[%174, %c0_i32_550] : memref<501x128xf32, #tpu.memory_space<any>> -> memref<1x128xf32, #tpu.memory_space<any>>
    %c57_i32_551 = arith.constant 57 : i32
    %c0_i32_552 = arith.constant 0 : i32
    %693 = tpu.memref_slice %arg4[%c57_i32_551, %c0_i32_552] : memref<64x128xf32, #tpu.memory_space<vmem>> -> memref<1x128xf32, #tpu.memory_space<vmem>>
    %694 = tpu.memref_slice %arg5[%c7_i32_549] : memref<8x!tpu.dma_semaphore, #tpu.memory_space<semaphore_mem>> -> memref<1x!tpu.dma_semaphore, #tpu.memory_space<semaphore_mem>>
    %695 = tpu.memref_squeeze %694 : memref<1x!tpu.dma_semaphore, #tpu.memory_space<semaphore_mem>> -> memref<!tpu.dma_semaphore, #tpu.memory_space<semaphore_mem>>
    tpu.wait_dma2 semaphore(%695 : memref<!tpu.dma_semaphore, #tpu.memory_space<semaphore_mem>>) src(%692 : memref<1x128xf32, #tpu.memory_space<any>>) dst(%693 : memref<1x128xf32, #tpu.memory_space<vmem>>)
    %c7_i32_553 = arith.constant 7 : i32
    %c0_i32_554 = arith.constant 0 : i32
    %696 = tpu.memref_slice %arg2[%177, %c0_i32_554] : memref<501x128xf32, #tpu.memory_space<any>> -> memref<1x128xf32, #tpu.memory_space<any>>
    %c58_i32_555 = arith.constant 58 : i32
    %c0_i32_556 = arith.constant 0 : i32
    %697 = tpu.memref_slice %arg4[%c58_i32_555, %c0_i32_556] : memref<64x128xf32, #tpu.memory_space<vmem>> -> memref<1x128xf32, #tpu.memory_space<vmem>>
    %698 = tpu.memref_slice %arg5[%c7_i32_553] : memref<8x!tpu.dma_semaphore, #tpu.memory_space<semaphore_mem>> -> memref<1x!tpu.dma_semaphore, #tpu.memory_space<semaphore_mem>>
    %699 = tpu.memref_squeeze %698 : memref<1x!tpu.dma_semaphore, #tpu.memory_space<semaphore_mem>> -> memref<!tpu.dma_semaphore, #tpu.memory_space<semaphore_mem>>
    tpu.wait_dma2 semaphore(%699 : memref<!tpu.dma_semaphore, #tpu.memory_space<semaphore_mem>>) src(%696 : memref<1x128xf32, #tpu.memory_space<any>>) dst(%697 : memref<1x128xf32, #tpu.memory_space<vmem>>)
    %c7_i32_557 = arith.constant 7 : i32
    %c0_i32_558 = arith.constant 0 : i32
    %700 = tpu.memref_slice %arg2[%180, %c0_i32_558] : memref<501x128xf32, #tpu.memory_space<any>> -> memref<1x128xf32, #tpu.memory_space<any>>
    %c59_i32_559 = arith.constant 59 : i32
    %c0_i32_560 = arith.constant 0 : i32
    %701 = tpu.memref_slice %arg4[%c59_i32_559, %c0_i32_560] : memref<64x128xf32, #tpu.memory_space<vmem>> -> memref<1x128xf32, #tpu.memory_space<vmem>>
    %702 = tpu.memref_slice %arg5[%c7_i32_557] : memref<8x!tpu.dma_semaphore, #tpu.memory_space<semaphore_mem>> -> memref<1x!tpu.dma_semaphore, #tpu.memory_space<semaphore_mem>>
    %703 = tpu.memref_squeeze %702 : memref<1x!tpu.dma_semaphore, #tpu.memory_space<semaphore_mem>> -> memref<!tpu.dma_semaphore, #tpu.memory_space<semaphore_mem>>
    tpu.wait_dma2 semaphore(%703 : memref<!tpu.dma_semaphore, #tpu.memory_space<semaphore_mem>>) src(%700 : memref<1x128xf32, #tpu.memory_space<any>>) dst(%701 : memref<1x128xf32, #tpu.memory_space<vmem>>)
    %c7_i32_561 = arith.constant 7 : i32
    %c0_i32_562 = arith.constant 0 : i32
    %704 = tpu.memref_slice %arg2[%183, %c0_i32_562] : memref<501x128xf32, #tpu.memory_space<any>> -> memref<1x128xf32, #tpu.memory_space<any>>
    %c60_i32_563 = arith.constant 60 : i32
    %c0_i32_564 = arith.constant 0 : i32
    %705 = tpu.memref_slice %arg4[%c60_i32_563, %c0_i32_564] : memref<64x128xf32, #tpu.memory_space<vmem>> -> memref<1x128xf32, #tpu.memory_space<vmem>>
    %706 = tpu.memref_slice %arg5[%c7_i32_561] : memref<8x!tpu.dma_semaphore, #tpu.memory_space<semaphore_mem>> -> memref<1x!tpu.dma_semaphore, #tpu.memory_space<semaphore_mem>>
    %707 = tpu.memref_squeeze %706 : memref<1x!tpu.dma_semaphore, #tpu.memory_space<semaphore_mem>> -> memref<!tpu.dma_semaphore, #tpu.memory_space<semaphore_mem>>
    tpu.wait_dma2 semaphore(%707 : memref<!tpu.dma_semaphore, #tpu.memory_space<semaphore_mem>>) src(%704 : memref<1x128xf32, #tpu.memory_space<any>>) dst(%705 : memref<1x128xf32, #tpu.memory_space<vmem>>)
    %c7_i32_565 = arith.constant 7 : i32
    %c0_i32_566 = arith.constant 0 : i32
    %708 = tpu.memref_slice %arg2[%186, %c0_i32_566] : memref<501x128xf32, #tpu.memory_space<any>> -> memref<1x128xf32, #tpu.memory_space<any>>
    %c61_i32_567 = arith.constant 61 : i32
    %c0_i32_568 = arith.constant 0 : i32
    %709 = tpu.memref_slice %arg4[%c61_i32_567, %c0_i32_568] : memref<64x128xf32, #tpu.memory_space<vmem>> -> memref<1x128xf32, #tpu.memory_space<vmem>>
    %710 = tpu.memref_slice %arg5[%c7_i32_565] : memref<8x!tpu.dma_semaphore, #tpu.memory_space<semaphore_mem>> -> memref<1x!tpu.dma_semaphore, #tpu.memory_space<semaphore_mem>>
    %711 = tpu.memref_squeeze %710 : memref<1x!tpu.dma_semaphore, #tpu.memory_space<semaphore_mem>> -> memref<!tpu.dma_semaphore, #tpu.memory_space<semaphore_mem>>
    tpu.wait_dma2 semaphore(%711 : memref<!tpu.dma_semaphore, #tpu.memory_space<semaphore_mem>>) src(%708 : memref<1x128xf32, #tpu.memory_space<any>>) dst(%709 : memref<1x128xf32, #tpu.memory_space<vmem>>)
    %c7_i32_569 = arith.constant 7 : i32
    %c0_i32_570 = arith.constant 0 : i32
    %712 = tpu.memref_slice %arg2[%189, %c0_i32_570] : memref<501x128xf32, #tpu.memory_space<any>> -> memref<1x128xf32, #tpu.memory_space<any>>
    %c62_i32_571 = arith.constant 62 : i32
    %c0_i32_572 = arith.constant 0 : i32
    %713 = tpu.memref_slice %arg4[%c62_i32_571, %c0_i32_572] : memref<64x128xf32, #tpu.memory_space<vmem>> -> memref<1x128xf32, #tpu.memory_space<vmem>>
    %714 = tpu.memref_slice %arg5[%c7_i32_569] : memref<8x!tpu.dma_semaphore, #tpu.memory_space<semaphore_mem>> -> memref<1x!tpu.dma_semaphore, #tpu.memory_space<semaphore_mem>>
    %715 = tpu.memref_squeeze %714 : memref<1x!tpu.dma_semaphore, #tpu.memory_space<semaphore_mem>> -> memref<!tpu.dma_semaphore, #tpu.memory_space<semaphore_mem>>
    tpu.wait_dma2 semaphore(%715 : memref<!tpu.dma_semaphore, #tpu.memory_space<semaphore_mem>>) src(%712 : memref<1x128xf32, #tpu.memory_space<any>>) dst(%713 : memref<1x128xf32, #tpu.memory_space<vmem>>)
    %c7_i32_573 = arith.constant 7 : i32
    %c0_i32_574 = arith.constant 0 : i32
    %716 = tpu.memref_slice %arg2[%192, %c0_i32_574] : memref<501x128xf32, #tpu.memory_space<any>> -> memref<1x128xf32, #tpu.memory_space<any>>
    %c63_i32_575 = arith.constant 63 : i32
    %c0_i32_576 = arith.constant 0 : i32
    %717 = tpu.memref_slice %arg4[%c63_i32_575, %c0_i32_576] : memref<64x128xf32, #tpu.memory_space<vmem>> -> memref<1x128xf32, #tpu.memory_space<vmem>>
    %718 = tpu.memref_slice %arg5[%c7_i32_573] : memref<8x!tpu.dma_semaphore, #tpu.memory_space<semaphore_mem>> -> memref<1x!tpu.dma_semaphore, #tpu.memory_space<semaphore_mem>>
    %719 = tpu.memref_squeeze %718 : memref<1x!tpu.dma_semaphore, #tpu.memory_space<semaphore_mem>> -> memref<!tpu.dma_semaphore, #tpu.memory_space<semaphore_mem>>
    tpu.wait_dma2 semaphore(%719 : memref<!tpu.dma_semaphore, #tpu.memory_space<semaphore_mem>>) src(%716 : memref<1x128xf32, #tpu.memory_space<any>>) dst(%717 : memref<1x128xf32, #tpu.memory_space<vmem>>)
    %c56 = arith.constant 56 : index
    %c0_577 = arith.constant 0 : index
    %720 = vector.load %arg4[%c56, %c0_577] : memref<64x128xf32, #tpu.memory_space<vmem>>, vector<8x128xf32>
    %721 = arith.addf %687, %720 : vector<8x128xf32>
    %cst_578 = arith.constant 1.250000e-01 : f32
    %722 = vector.broadcast %cst_578 : f32 to vector<8x128xf32>
    %723 = arith.mulf %721, %722 : vector<8x128xf32>
    %c0_579 = arith.constant 0 : index
    %c0_580 = arith.constant 0 : index
    %724 = vector.load %arg3[%c0_579, %c0_580] : memref<8x128xf32, #tpu.memory_space<vmem>>, vector<8x128xf32>
    tpu.vector_store %arg3[%c0_579, %c0_580], %723 {strides = array<i32>} : memref<8x128xf32, #tpu.memory_space<vmem>>, vector<8x128xf32>,
    return
  }
  func.func @transform_1(%arg0: i32, %arg1: memref<16x8xi32, #tpu.memory_space<smem>>) -> (i32, i32) {
    %c0_i32 = arith.constant 0 : i32
    %c0_i32_0 = arith.constant 0 : i32
    return %arg0, %c0_i32 : i32, i32
  }
}

</mosaic_0001>

<llo_original>
// kernel: tpu_custom_call.1
$region0: #{tpu_custom_call.1}
  #allocation0 [shape = 'u32[]', space=smem, size = 0x4, offset = 0x4, fixed_abs, tag = 'smem constant byte address 0x4 - core index']
  #allocation1 [shape = 'u32[144,128]{1,0:T(1,128)}', space=vmem, size = 0x12000, scoped, tag = 'internal scratch']
  #allocation2 [shape = 'f32[64,128]{1,0:T(8,128)}', space=vmem, size = 0x8000, scoped, tag = 'scratch operand']
  #allocation3 [shape = 's32[8]{0}', space=sflag, size = 0x20, scoped, tag = 'scratch operand']
  #allocation4 [shape = 's32[1]{0}', space=sflag, size = 0x4, scoped, tag = 'scoped memory for tpu_custom_call.1']
  #allocation5 [shape = 'u8[8192]{0}', space=smem, size = 0x2000, scoped, tag = 'prefetched SMEM operand 0']
  #allocation8 [shape = 's32[]', space=sflag, size = 0x4, offset = 0, fixed_abs, tag = 'sflag constant byte address 0x0 - dummy sync flag']
  #allocation9 [shape = 's32[]', space=sflag, size = 0x4, offset = 0, fixed_abs, tag = 'sflag constant byte address 0x0 - dummy sync flag']
  #allocation10 [shape = 'u32[]', space=smem, size = 0x4, offset = 0x44, fixed_abs, tag = 'smem constant byte address 0x44 - assertion arg 0']
  #allocation11 [shape = 'u32[]', space=smem, size = 0x4, offset = 0x48, fixed_abs, tag = 'smem constant byte address 0x48 - assertion arg 1']
  #allocation12 [shape = 's32[]', space=sflag, size = 0x4, offset = 0, fixed_abs, tag = 'sflag constant byte address 0x0 - dummy sync flag']
  #allocation13 [shape = 's32[]', space=sflag, size = 0x4, offset = 0, fixed_abs, tag = 'sflag constant byte address 0x0 - dummy sync flag']
  #allocation14 [shape = 's32[]', space=sflag, size = 0x4, offset = 0, fixed_abs, tag = 'sflag constant byte address 0x0 - dummy sync flag']
  #allocation15 [shape = 's32[]', space=sflag, size = 0x4, offset = 0, fixed_abs, tag = 'sflag constant byte address 0x0 - dummy sync flag']
  #allocation16 [shape = 's32[]', space=sflag, size = 0x4, offset = 0, fixed_abs, tag = 'sflag constant byte address 0x0 - dummy sync flag']
  #allocation17 [shape = 's32[]', space=sflag, size = 0x4, offset = 0, fixed_abs, tag = 'sflag constant byte address 0x0 - dummy sync flag']
  #allocation18 [shape = 's32[]', space=sflag, size = 0x4, offset = 0, fixed_abs, tag = 'sflag constant byte address 0x0 - dummy sync flag']
  #allocation19 [shape = 's32[]', space=sflag, size = 0x4, offset = 0, fixed_abs, tag = 'sflag constant byte address 0x0 - dummy sync flag']
  #allocation20 [shape = 's32[]', space=sflag, size = 0x4, offset = 0, fixed_abs, tag = 'sflag constant byte address 0x0 - dummy sync flag']
  #allocation21 [shape = 's32[]', space=sflag, size = 0x4, offset = 0, fixed_abs, tag = 'sflag constant byte address 0x0 - dummy sync flag']
  #allocation22 [shape = 's32[]', space=sflag, size = 0x4, offset = 0, fixed_abs, tag = 'sflag constant byte address 0x0 - dummy sync flag']
  #allocation23 [shape = 's32[]', space=sflag, size = 0x4, offset = 0, fixed_abs, tag = 'sflag constant byte address 0x0 - dummy sync flag']
  #allocation24 [shape = 's32[]', space=sflag, size = 0x4, offset = 0, fixed_abs, tag = 'sflag constant byte address 0x0 - dummy sync flag']
  #allocation25 [shape = 's32[]', space=sflag, size = 0x4, offset = 0, fixed_abs, tag = 'sflag constant byte address 0x0 - dummy sync flag']
  #allocation26 [shape = 's32[]', space=sflag, size = 0x4, offset = 0, fixed_abs, tag = 'sflag constant byte address 0x0 - dummy sync flag']
  #allocation27 [shape = 's32[]', space=sflag, size = 0x4, offset = 0, fixed_abs, tag = 'sflag constant byte address 0x0 - dummy sync flag']
  #allocation28 [shape = 's32[]', space=sflag, size = 0x4, offset = 0, fixed_abs, tag = 'sflag constant byte address 0x0 - dummy sync flag']
  #allocation29 [shape = 's32[]', space=sflag, size = 0x4, offset = 0, fixed_abs, tag = 'sflag constant byte address 0x0 - dummy sync flag']
  #allocation30 [shape = 's32[]', space=sflag, size = 0x4, offset = 0, fixed_abs, tag = 'sflag constant byte address 0x0 - dummy sync flag']
  #allocation31 [shape = 's32[]', space=sflag, size = 0x4, offset = 0, fixed_abs, tag = 'sflag constant byte address 0x0 - dummy sync flag']
  #allocation32 [shape = 's32[]', space=sflag, size = 0x4, offset = 0, fixed_abs, tag = 'sflag constant byte address 0x0 - dummy sync flag']
  #allocation33 [shape = 's32[]', space=sflag, size = 0x4, offset = 0, fixed_abs, tag = 'sflag constant byte address 0x0 - dummy sync flag']
  #allocation34 [shape = 's32[]', space=sflag, size = 0x4, offset = 0, fixed_abs, tag = 'sflag constant byte address 0x0 - dummy sync flag']
  #allocation35 [shape = 's32[]', space=sflag, size = 0x4, offset = 0, fixed_abs, tag = 'sflag constant byte address 0x0 - dummy sync flag']
  #allocation36 [shape = 's32[]', space=sflag, size = 0x4, offset = 0, fixed_abs, tag = 'sflag constant byte address 0x0 - dummy sync flag']
  #allocation37 [shape = 's32[]', space=sflag, size = 0x4, offset = 0, fixed_abs, tag = 'sflag constant byte address 0x0 - dummy sync flag']
  #allocation38 [shape = 's32[]', space=sflag, size = 0x4, offset = 0, fixed_abs, tag = 'sflag constant byte address 0x0 - dummy sync flag']
  #allocation39 [shape = 's32[]', space=sflag, size = 0x4, offset = 0, fixed_abs, tag = 'sflag constant byte address 0x0 - dummy sync flag']
  #allocation40 [shape = 's32[]', space=sflag, size = 0x4, offset = 0, fixed_abs, tag = 'sflag constant byte address 0x0 - dummy sync flag']
  #allocation41 [shape = 's32[]', space=sflag, size = 0x4, offset = 0, fixed_abs, tag = 'sflag constant byte address 0x0 - dummy sync flag']
  #allocation42 [shape = 's32[]', space=sflag, size = 0x4, offset = 0, fixed_abs, tag = 'sflag constant byte address 0x0 - dummy sync flag']
  #allocation43 [shape = 's32[]', space=sflag, size = 0x4, offset = 0, fixed_abs, tag = 'sflag constant byte address 0x0 - dummy sync flag']
  #allocation44 [shape = 's32[]', space=sflag, size = 0x4, offset = 0, fixed_abs, tag = 'sflag constant byte address 0x0 - dummy sync flag']
  #allocation45 [shape = 's32[]', space=sflag, size = 0x4, offset = 0, fixed_abs, tag = 'sflag constant byte address 0x0 - dummy sync flag']
  #allocation46 [shape = 's32[]', space=sflag, size = 0x4, offset = 0, fixed_abs, tag = 'sflag constant byte address 0x0 - dummy sync flag']
  #allocation47 [shape = 's32[]', space=sflag, size = 0x4, offset = 0, fixed_abs, tag = 'sflag constant byte address 0x0 - dummy sync flag']
  #allocation48 [shape = 's32[]', space=sflag, size = 0x4, offset = 0, fixed_abs, tag = 'sflag constant byte address 0x0 - dummy sync flag']
  #allocation49 [shape = 's32[]', space=sflag, size = 0x4, offset = 0, fixed_abs, tag = 'sflag constant byte address 0x0 - dummy sync flag']
  #allocation50 [shape = 's32[]', space=sflag, size = 0x4, offset = 0, fixed_abs, tag = 'sflag constant byte address 0x0 - dummy sync flag']
  #allocation51 [shape = 's32[]', space=sflag, size = 0x4, offset = 0, fixed_abs, tag = 'sflag constant byte address 0x0 - dummy sync flag']
  #allocation52 [shape = 's32[]', space=sflag, size = 0x4, offset = 0, fixed_abs, tag = 'sflag constant byte address 0x0 - dummy sync flag']
  #allocation53 [shape = 's32[]', space=sflag, size = 0x4, offset = 0, fixed_abs, tag = 'sflag constant byte address 0x0 - dummy sync flag']
  #allocation54 [shape = 's32[]', space=sflag, size = 0x4, offset = 0, fixed_abs, tag = 'sflag constant byte address 0x0 - dummy sync flag']
  #allocation55 [shape = 's32[]', space=sflag, size = 0x4, offset = 0, fixed_abs, tag = 'sflag constant byte address 0x0 - dummy sync flag']
  #allocation56 [shape = 's32[]', space=sflag, size = 0x4, offset = 0, fixed_abs, tag = 'sflag constant byte address 0x0 - dummy sync flag']
  #allocation57 [shape = 's32[]', space=sflag, size = 0x4, offset = 0, fixed_abs, tag = 'sflag constant byte address 0x0 - dummy sync flag']
  #allocation58 [shape = 's32[]', space=sflag, size = 0x4, offset = 0, fixed_abs, tag = 'sflag constant byte address 0x0 - dummy sync flag']
  #allocation59 [shape = 's32[]', space=sflag, size = 0x4, offset = 0, fixed_abs, tag = 'sflag constant byte address 0x0 - dummy sync flag']
  #allocation60 [shape = 's32[]', space=sflag, size = 0x4, offset = 0, fixed_abs, tag = 'sflag constant byte address 0x0 - dummy sync flag']
  #allocation61 [shape = 's32[]', space=sflag, size = 0x4, offset = 0, fixed_abs, tag = 'sflag constant byte address 0x0 - dummy sync flag']
  #allocation62 [shape = 's32[]', space=sflag, size = 0x4, offset = 0, fixed_abs, tag = 'sflag constant byte address 0x0 - dummy sync flag']
  #allocation63 [shape = 's32[]', space=sflag, size = 0x4, offset = 0, fixed_abs, tag = 'sflag constant byte address 0x0 - dummy sync flag']
  #allocation64 [shape = 's32[]', space=sflag, size = 0x4, offset = 0, fixed_abs, tag = 'sflag constant byte address 0x0 - dummy sync flag']
  #allocation65 [shape = 's32[]', space=sflag, size = 0x4, offset = 0, fixed_abs, tag = 'sflag constant byte address 0x0 - dummy sync flag']
  #allocation66 [shape = 's32[]', space=sflag, size = 0x4, offset = 0, fixed_abs, tag = 'sflag constant byte address 0x0 - dummy sync flag']
  #allocation67 [shape = 's32[]', space=sflag, size = 0x4, offset = 0, fixed_abs, tag = 'sflag constant byte address 0x0 - dummy sync flag']
  #allocation68 [shape = 's32[]', space=sflag, size = 0x4, offset = 0, fixed_abs, tag = 'sflag constant byte address 0x0 - dummy sync flag']
  #allocation69 [shape = 's32[]', space=sflag, size = 0x4, offset = 0, fixed_abs, tag = 'sflag constant byte address 0x0 - dummy sync flag']
  #allocation70 [shape = 's32[]', space=sflag, size = 0x4, offset = 0, fixed_abs, tag = 'sflag constant byte address 0x0 - dummy sync flag']
  #allocation71 [shape = 's32[]', space=sflag, size = 0x4, offset = 0, fixed_abs, tag = 'sflag constant byte address 0x0 - dummy sync flag']
  #allocation72 [shape = 's32[]', space=sflag, size = 0x4, offset = 0, fixed_abs, tag = 'sflag constant byte address 0x0 - dummy sync flag']
  #allocation73 [shape = 's32[]', space=sflag, size = 0x4, offset = 0, fixed_abs, tag = 'sflag constant byte address 0x0 - dummy sync flag']
  #allocation74 [shape = 's32[]', space=sflag, size = 0x4, offset = 0, fixed_abs, tag = 'sflag constant byte address 0x0 - dummy sync flag']
  #allocation75 [shape = 's32[]', space=sflag, size = 0x4, offset = 0, fixed_abs, tag = 'sflag constant byte address 0x0 - dummy sync flag']
  #allocation76 [shape = 's32[]', space=sflag, size = 0x4, offset = 0, fixed_abs, tag = 'sflag constant byte address 0x0 - dummy sync flag']
  #allocation77 [shape = 's32[]', space=sflag, size = 0x4, offset = 0, fixed_abs, tag = 'sflag constant byte address 0x0 - dummy sync flag']
  #allocation78 [shape = 's32[]', space=sflag, size = 0x4, offset = 0, fixed_abs, tag = 'sflag constant byte address 0x0 - dummy sync flag']
  #allocation79 [shape = 's32[]', space=sflag, size = 0x4, offset = 0, fixed_abs, tag = 'sflag constant byte address 0x0 - dummy sync flag']
  #allocation80 [shape = 's32[]', space=sflag, size = 0x4, offset = 0, fixed_abs, tag = 'sflag constant byte address 0x0 - dummy sync flag']
  #allocation81 [shape = 's32[]', space=sflag, size = 0x4, offset = 0, fixed_abs, tag = 'sflag constant byte address 0x0 - dummy sync flag']
  #allocation82 [shape = 's32[]', space=sflag, size = 0x4, offset = 0, fixed_abs, tag = 'sflag constant byte address 0x0 - dummy sync flag']
  #allocation83 [shape = 's32[]', space=sflag, size = 0x4, offset = 0, fixed_abs, tag = 'sflag constant byte address 0x0 - dummy sync flag']
  #allocation84 [shape = 's32[]', space=sflag, size = 0x4, offset = 0, fixed_abs, tag = 'sflag constant byte address 0x0 - dummy sync flag']
  #allocation85 [shape = 's32[]', space=sflag, size = 0x4, offset = 0, fixed_abs, tag = 'sflag constant byte address 0x0 - dummy sync flag']
  #allocation86 [shape = 's32[]', space=sflag, size = 0x4, offset = 0, fixed_abs, tag = 'sflag constant byte address 0x0 - dummy sync flag']
  #allocation87 [shape = 's32[]', space=sflag, size = 0x4, offset = 0, fixed_abs, tag = 'sflag constant byte address 0x0 - dummy sync flag']
  #allocation88 [shape = 's32[]', space=sflag, size = 0x4, offset = 0, fixed_abs, tag = 'sflag constant byte address 0x0 - dummy sync flag']
  #allocation89 [shape = 's32[]', space=sflag, size = 0x4, offset = 0, fixed_abs, tag = 'sflag constant byte address 0x0 - dummy sync flag']
  #allocation90 [shape = 's32[]', space=sflag, size = 0x4, offset = 0, fixed_abs, tag = 'sflag constant byte address 0x0 - dummy sync flag']
  #allocation91 [shape = 's32[]', space=sflag, size = 0x4, offset = 0, fixed_abs, tag = 'sflag constant byte address 0x0 - dummy sync flag']
  #allocation92 [shape = 's32[]', space=sflag, size = 0x4, offset = 0, fixed_abs, tag = 'sflag constant byte address 0x0 - dummy sync flag']
  #allocation93 [shape = 's32[]', space=sflag, size = 0x4, offset = 0, fixed_abs, tag = 'sflag constant byte address 0x0 - dummy sync flag']
  #allocation94 [shape = 's32[]', space=sflag, size = 0x4, offset = 0, fixed_abs, tag = 'sflag constant byte address 0x0 - dummy sync flag']
  #allocation95 [shape = 's32[]', space=sflag, size = 0x4, offset = 0, fixed_abs, tag = 'sflag constant byte address 0x0 - dummy sync flag']
  #allocation96 [shape = 's32[]', space=sflag, size = 0x4, offset = 0, fixed_abs, tag = 'sflag constant byte address 0x0 - dummy sync flag']
  #allocation97 [shape = 's32[]', space=sflag, size = 0x4, offset = 0, fixed_abs, tag = 'sflag constant byte address 0x0 - dummy sync flag']
  #allocation98 [shape = 's32[]', space=sflag, size = 0x4, offset = 0, fixed_abs, tag = 'sflag constant byte address 0x0 - dummy sync flag']
  #allocation99 [shape = 's32[]', space=sflag, size = 0x4, offset = 0, fixed_abs, tag = 'sflag constant byte address 0x0 - dummy sync flag']
  #allocation100 [shape = 's32[]', space=sflag, size = 0x4, offset = 0, fixed_abs, tag = 'sflag constant byte address 0x0 - dummy sync flag']
  #allocation101 [shape = 's32[]', space=sflag, size = 0x4, offset = 0, fixed_abs, tag = 'sflag constant byte address 0x0 - dummy sync flag']
  #allocation102 [shape = 's32[]', space=sflag, size = 0x4, offset = 0, fixed_abs, tag = 'sflag constant byte address 0x0 - dummy sync flag']
  #allocation103 [shape = 's32[]', space=sflag, size = 0x4, offset = 0, fixed_abs, tag = 'sflag constant byte address 0x0 - dummy sync flag']
  #allocation104 [shape = 's32[]', space=sflag, size = 0x4, offset = 0, fixed_abs, tag = 'sflag constant byte address 0x0 - dummy sync flag']
  #allocation105 [shape = 's32[]', space=sflag, size = 0x4, offset = 0, fixed_abs, tag = 'sflag constant byte address 0x0 - dummy sync flag']
  #allocation106 [shape = 's32[]', space=sflag, size = 0x4, offset = 0, fixed_abs, tag = 'sflag constant byte address 0x0 - dummy sync flag']
  #allocation107 [shape = 's32[]', space=sflag, size = 0x4, offset = 0, fixed_abs, tag = 'sflag constant byte address 0x0 - dummy sync flag']
  #allocation108 [shape = 's32[]', space=sflag, size = 0x4, offset = 0, fixed_abs, tag = 'sflag constant byte address 0x0 - dummy sync flag']
  #allocation109 [shape = 's32[]', space=sflag, size = 0x4, offset = 0, fixed_abs, tag = 'sflag constant byte address 0x0 - dummy sync flag']
  #allocation110 [shape = 's32[]', space=sflag, size = 0x4, offset = 0, fixed_abs, tag = 'sflag constant byte address 0x0 - dummy sync flag']
  #allocation111 [shape = 's32[]', space=sflag, size = 0x4, offset = 0, fixed_abs, tag = 'sflag constant byte address 0x0 - dummy sync flag']
  #allocation112 [shape = 's32[]', space=sflag, size = 0x4, offset = 0, fixed_abs, tag = 'sflag constant byte address 0x0 - dummy sync flag']
  #allocation113 [shape = 's32[]', space=sflag, size = 0x4, offset = 0, fixed_abs, tag = 'sflag constant byte address 0x0 - dummy sync flag']
  #allocation114 [shape = 's32[]', space=sflag, size = 0x4, offset = 0, fixed_abs, tag = 'sflag constant byte address 0x0 - dummy sync flag']
  #allocation115 [shape = 's32[]', space=sflag, size = 0x4, offset = 0, fixed_abs, tag = 'sflag constant byte address 0x0 - dummy sync flag']
  #allocation116 [shape = 's32[]', space=sflag, size = 0x4, offset = 0, fixed_abs, tag = 'sflag constant byte address 0x0 - dummy sync flag']
  #allocation117 [shape = 's32[]', space=sflag, size = 0x4, offset = 0, fixed_abs, tag = 'sflag constant byte address 0x0 - dummy sync flag']
  #allocation118 [shape = 's32[]', space=sflag, size = 0x4, offset = 0, fixed_abs, tag = 'sflag constant byte address 0x0 - dummy sync flag']
  #allocation119 [shape = 's32[]', space=sflag, size = 0x4, offset = 0, fixed_abs, tag = 'sflag constant byte address 0x0 - dummy sync flag']
  #allocation120 [shape = 's32[]', space=sflag, size = 0x4, offset = 0, fixed_abs, tag = 'sflag constant byte address 0x0 - dummy sync flag']
  #allocation121 [shape = 's32[]', space=sflag, size = 0x4, offset = 0, fixed_abs, tag = 'sflag constant byte address 0x0 - dummy sync flag']
  #allocation122 [shape = 's32[]', space=sflag, size = 0x4, offset = 0, fixed_abs, tag = 'sflag constant byte address 0x0 - dummy sync flag']
  #allocation123 [shape = 's32[]', space=sflag, size = 0x4, offset = 0, fixed_abs, tag = 'sflag constant byte address 0x0 - dummy sync flag']
  #allocation124 [shape = 's32[]', space=sflag, size = 0x4, offset = 0, fixed_abs, tag = 'sflag constant byte address 0x0 - dummy sync flag']
  #allocation125 [shape = 's32[]', space=sflag, size = 0x4, offset = 0, fixed_abs, tag = 'sflag constant byte address 0x0 - dummy sync flag']
  #allocation126 [shape = 's32[]', space=sflag, size = 0x4, offset = 0, fixed_abs, tag = 'sflag constant byte address 0x0 - dummy sync flag']
  #allocation127 [shape = 's32[]', space=sflag, size = 0x4, offset = 0, fixed_abs, tag = 'sflag constant byte address 0x0 - dummy sync flag']
  #allocation128 [shape = 's32[]', space=sflag, size = 0x4, offset = 0, fixed_abs, tag = 'sflag constant byte address 0x0 - dummy sync flag']
  #allocation129 [shape = 's32[]', space=sflag, size = 0x4, offset = 0, fixed_abs, tag = 'sflag constant byte address 0x0 - dummy sync flag']
  #allocation130 [shape = 's32[]', space=sflag, size = 0x4, offset = 0, fixed_abs, tag = 'sflag constant byte address 0x0 - dummy sync flag']
  #allocation131 [shape = 's32[]', space=sflag, size = 0x4, offset = 0, fixed_abs, tag = 'sflag constant byte address 0x0 - dummy sync flag']
  #allocation132 [shape = 's32[]', space=sflag, size = 0x4, offset = 0, fixed_abs, tag = 'sflag constant byte address 0x0 - dummy sync flag']
  #allocation133 [shape = 's32[]', space=sflag, size = 0x4, offset = 0, fixed_abs, tag = 'sflag constant byte address 0x0 - dummy sync flag']
  #allocation134 [shape = 's32[]', space=sflag, size = 0x4, offset = 0, fixed_abs, tag = 'sflag constant byte address 0x0 - dummy sync flag']
  #allocation135 [shape = 's32[]', space=sflag, size = 0x4, offset = 0, fixed_abs, tag = 'sflag constant byte address 0x0 - dummy sync flag']
  #allocation136 [shape = 's32[]', space=sflag, size = 0x4, offset = 0, fixed_abs, tag = 'sflag constant byte address 0x0 - dummy sync flag']
  #allocation137 [shape = 's32[]', space=sflag, size = 0x4, offset = 0, fixed_abs, tag = 'sflag constant byte address 0x0 - dummy sync flag']
  %s0 = inlined_call_operand.vmem [shape: s32[16,8], index: 0, kind: input, shape index: {}]
  %s1 = inlined_call_operand.hbm [shape: f32[501,128], index: 1, kind: input, shape index: {}]
  %s2 = inlined_call_operand.hbm [shape: f32[16,128], index: 2, kind: output, shape index: {}]
  %s3 = sld [smem:[#allocation0]]
  $region281: #{tpu_custom_call.1} parent=0
    _
  %s5 = ssub.s32 1, %s3
  %s6 = scalar_select 0, %s5, %s3
  %s7 = sshll.u32 %s0, 4
  %s8 = int_to_ptr.vmem [resolvable:$true] %s7
  %10 = dma.vmem_to_smem %s8, 256, [#allocation5], [#allocation4]
  %11 = dma.done [#allocation4], 256
  %12 = sfence
  $region1: #{tpu_custom_call.1} parent=0
    #allocation6 [shape = 'u8[8192]{0}', space=vmem, size = 0x2000, scoped, tag = 'output window, operand 0']
    #allocation7 [shape = 's32[2]{0}', space=sflag, size = 0x8, scoped, tag = 'scoped memory for tpu_custom_call.1']
    %13 = vsyncpa [#allocation7], 0
    %s14 = scalar_lea.sflag [#allocation7], 1
    %15 = vsyncpa %s14, 0
    loop: start=0, step=1, limit=3
    $region2: #{tpu_custom_call.1} parent=1 // loop_pre_header
      _
    $region3: #{tpu_custom_call.1} parent=1 // loop_header
      %s17 = sphi 0, %s21
      %p18 = scmp.ge.s32.totalorder %s17, 3
      %s26 = sphi 0, %s28
      %s29 = sphi 0, %s26
      %s39 = sphi 0, %s29
    $region4: #{tpu_custom_call.1} parent=1 // loop_header_branch
      %20 = sbr.rel (%p18) target = $region8
    $region5: #{tpu_custom_call.1} parent=1 // loop_body
      %s22 = ssub.s32 %s17, 1
      %s23 = sadd.s32 %s17, 1
      %s24 = ssub.s32 %s17, %s23
      %p25 = scmp.eq.s32.totalorder %s24, 0
      %s27 = sadd.s32 %s26, 1
      %s28 = scalar_select %p25, %s26, %s27
      %p30 = pneg %p25
      %p31 = scmp.eq.s32.totalorder %s17, 1
      %p32 = por %p30, %p31
      %p33 = scmp.ne.s32.totalorder %s26, %s29
      %p34 = scmp.eq.s32.totalorder %s17, 0
      %p35 = por %p33, %p34
      %p36 = scmp.ne.s32.totalorder %s26, %s29
      %p37 = scmp.eq.s32.totalorder %s22, 1
      %p38 = por %p36, %p37
      %p40 = scmp.ne.s32.totalorder %s29, %s39
      %p41 = scmp.eq.s32.totalorder %s22, 0
      %p42 = por %p40, %p41
      %p43 = scmp.lt.s32.totalorder %s17, 2
      // Predicated region
      $region9: #{tpu_custom_call.1} parent=5 // pred_check
        %p44 = pneg %p43
      $region10: #{tpu_custom_call.1} parent=5 // pred_check_branch
        %46 = sbr.rel (%p44) target = $region12
      $region11: #{tpu_custom_call.1} parent=5 // pred_region
        %p47 = pneg %p35
        %p48 = pneg %p32
        %s49 = sand.u32 %s26, 1
        %s50 = scalar_lea.sflag [#allocation7], %s49
        %s51 = sand.u32 %s26, 1
        %s52 = smul.addr %s51, 8
        %s53 = scalar_lea.vmem [#allocation6], %s52
        %s54 = smul.u32 %s17, 8
        %s55 = smul.u32 %s54, 128
        %s56 = sld [smem:[#allocation5 + %s55]]
        %s57 = sadd.s32 %s54, 1
        %s58 = smul.u32 %s57, 128
        %s59 = sld [smem:[#allocation5 + %s58]]
        %s60 = sadd.s32 %s54, 2
        %s61 = smul.u32 %s60, 128
        %s62 = sld [smem:[#allocation5 + %s61]]
        %s63 = sadd.s32 %s54, 3
        %s64 = smul.u32 %s63, 128
        %s65 = sld [smem:[#allocation5 + %s64]]
        %s66 = sadd.s32 %s54, 4
        %s67 = smul.u32 %s66, 128
        %s68 = sld [smem:[#allocation5 + %s67]]
        %s69 = sadd.s32 %s54, 5
        %s70 = smul.u32 %s69, 128
        %s71 = sld [smem:[#allocation5 + %s70]]
        %s72 = sadd.s32 %s54, 6
        %s73 = smul.u32 %s72, 128
        %s74 = sld [smem:[#allocation5 + %s73]]
        %s75 = sadd.s32 %s54, 7
        %s76 = smul.u32 %s75, 128
        %s77 = sld [smem:[#allocation5 + %s76]]
        %s78 = sadd.s32 %s55, 1
        %s79 = sld [smem:[#allocation5 + %s78]]
        %s80 = sadd.s32 %s58, 1
        %s81 = sld [smem:[#allocation5 + %s80]]
        %s82 = sadd.s32 %s61, 1
        %s83 = sld [smem:[#allocation5 + %s82]]
        %s84 = sadd.s32 %s64, 1
        %s85 = sld [smem:[#allocation5 + %s84]]
        %s86 = sadd.s32 %s67, 1
        %s87 = sld [smem:[#allocation5 + %s86]]
        %s88 = sadd.s32 %s70, 1
        %s89 = sld [smem:[#allocation5 + %s88]]
        %s90 = sadd.s32 %s73, 1
        %s91 = sld [smem:[#allocation5 + %s90]]
        %s92 = sadd.s32 %s76, 1
        %s93 = sld [smem:[#allocation5 + %s92]]
        %s94 = sadd.s32 %s55, 2
        %s95 = sld [smem:[#allocation5 + %s94]]
        %s96 = sadd.s32 %s58, 2
        %s97 = sld [smem:[#allocation5 + %s96]]
        %s98 = sadd.s32 %s61, 2
        %s99 = sld [smem:[#allocation5 + %s98]]
        %s100 = sadd.s32 %s64, 2
        %s101 = sld [smem:[#allocation5 + %s100]]
        %s102 = sadd.s32 %s67, 2
        %s103 = sld [smem:[#allocation5 + %s102]]
        %s104 = sadd.s32 %s70, 2
        %s105 = sld [smem:[#allocation5 + %s104]]
        %s106 = sadd.s32 %s73, 2
        %s107 = sld [smem:[#allocation5 + %s106]]
        %s108 = sadd.s32 %s76, 2
        %s109 = sld [smem:[#allocation5 + %s108]]
        %s110 = sadd.s32 %s55, 3
        %s111 = sld [smem:[#allocation5 + %s110]]
        %s112 = sadd.s32 %s58, 3
        %s113 = sld [smem:[#allocation5 + %s112]]
        %s114 = sadd.s32 %s61, 3
        %s115 = sld [smem:[#allocation5 + %s114]]
        %s116 = sadd.s32 %s64, 3
        %s117 = sld [smem:[#allocation5 + %s116]]
        %s118 = sadd.s32 %s67, 3
        %s119 = sld [smem:[#allocation5 + %s118]]
        %s120 = sadd.s32 %s70, 3
        %s121 = sld [smem:[#allocation5 + %s120]]
        %s122 = sadd.s32 %s73, 3
        %s123 = sld [smem:[#allocation5 + %s122]]
        %s124 = sadd.s32 %s76, 3
        %s125 = sld [smem:[#allocation5 + %s124]]
        %s126 = sadd.s32 %s55, 4
        %s127 = sld [smem:[#allocation5 + %s126]]
        %s128 = sadd.s32 %s58, 4
        %s129 = sld [smem:[#allocation5 + %s128]]
        %s130 = sadd.s32 %s61, 4
        %s131 = sld [smem:[#allocation5 + %s130]]
        %s132 = sadd.s32 %s64, 4
        %s133 = sld [smem:[#allocation5 + %s132]]
        %s134 = sadd.s32 %s67, 4
        %s135 = sld [smem:[#allocation5 + %s134]]
        %s136 = sadd.s32 %s70, 4
        %s137 = sld [smem:[#allocation5 + %s136]]
        %s138 = sadd.s32 %s73, 4
        %s139 = sld [smem:[#allocation5 + %s138]]
        %s140 = sadd.s32 %s76, 4
        %s141 = sld [smem:[#allocation5 + %s140]]
        %s142 = sadd.s32 %s55, 5
        %s143 = sld [smem:[#allocation5 + %s142]]
        %s144 = sadd.s32 %s58, 5
        %s145 = sld [smem:[#allocation5 + %s144]]
        %s146 = sadd.s32 %s61, 5
        %s147 = sld [smem:[#allocation5 + %s146]]
        %s148 = sadd.s32 %s64, 5
        %s149 = sld [smem:[#allocation5 + %s148]]
        %s150 = sadd.s32 %s67, 5
        %s151 = sld [smem:[#allocation5 + %s150]]
        %s152 = sadd.s32 %s70, 5
        %s153 = sld [smem:[#allocation5 + %s152]]
        %s154 = sadd.s32 %s73, 5
        %s155 = sld [smem:[#allocation5 + %s154]]
        %s156 = sadd.s32 %s76, 5
        %s157 = sld [smem:[#allocation5 + %s156]]
        %s158 = sadd.s32 %s55, 6
        %s159 = sld [smem:[#allocation5 + %s158]]
        %s160 = sadd.s32 %s58, 6
        %s161 = sld [smem:[#allocation5 + %s160]]
        %s162 = sadd.s32 %s61, 6
        %s163 = sld [smem:[#allocation5 + %s162]]
        %s164 = sadd.s32 %s64, 6
        %s165 = sld [smem:[#allocation5 + %s164]]
        %s166 = sadd.s32 %s67, 6
        %s167 = sld [smem:[#allocation5 + %s166]]
        %s168 = sadd.s32 %s70, 6
        %s169 = sld [smem:[#allocation5 + %s168]]
        %s170 = sadd.s32 %s73, 6
        %s171 = sld [smem:[#allocation5 + %s170]]
        %s172 = sadd.s32 %s76, 6
        %s173 = sld [smem:[#allocation5 + %s172]]
        %s174 = sadd.s32 %s55, 7
        %s175 = sld [smem:[#allocation5 + %s174]]
        %s176 = sadd.s32 %s58, 7
        %s177 = sld [smem:[#allocation5 + %s176]]
        %s178 = sadd.s32 %s61, 7
        %s179 = sld [smem:[#allocation5 + %s178]]
        %s180 = sadd.s32 %s64, 7
        %s181 = sld [smem:[#allocation5 + %s180]]
        %s182 = sadd.s32 %s67, 7
        %s183 = sld [smem:[#allocation5 + %s182]]
        %s184 = sadd.s32 %s70, 7
        %s185 = sld [smem:[#allocation5 + %s184]]
        %s186 = sadd.s32 %s73, 7
        %s187 = sld [smem:[#allocation5 + %s186]]
        %s188 = sadd.s32 %s76, 7
        %s189 = sld [smem:[#allocation5 + %s188]]
        %s190 = smul.addr %s56, 16
        %s191 = scalar_lea.hbm %s1, %s190
        // Predicated region
        $region13: #{tpu_custom_call.1} parent=11 // pred_check
          _
        $region14: #{tpu_custom_call.1} parent=11 // pred_check_branch
          %193 = sbr.rel target = $region16
        $region15: #{tpu_custom_call.1} parent=11 // pred_region
          %194 = sst [smem:[#allocation10]] [#allocation9]
          %195 = sst [smem:[#allocation11]] [#allocation8]
        $region16: #{tpu_custom_call.1} parent=11 // pred_fallthru
          _
        %197 = shalt.err (0)
        %s199 = sshll.u32 [#allocation2], 4
        %s200 = int_to_ptr.vmem [resolvable:$true] %s199
        %202 = dma.hbm_to_vmem [thread:$0]  %s191, 16, %s200, [#allocation3]
        %s203 = smul.addr %s59, 16
        %s204 = scalar_lea.hbm %s1, %s203
        %s205 = scalar_lea.vmem [#allocation2], 1
        // Predicated region
        $region17: #{tpu_custom_call.1} parent=11 // pred_check
          _
        $region18: #{tpu_custom_call.1} parent=11 // pred_check_branch
          %207 = sbr.rel target = $region20
        $region19: #{tpu_custom_call.1} parent=11 // pred_region
          %208 = sst [smem:[#allocation10]] [#allocation13]
          %209 = sst [smem:[#allocation11]] [#allocation12]
        $region20: #{tpu_custom_call.1} parent=11 // pred_fallthru
          _
        %211 = shalt.err (0)
        %s213 = sshll.u32 %s205, 4
        %s214 = int_to_ptr.vmem [resolvable:$true] %s213
        %216 = dma.hbm_to_vmem [thread:$0]  %s204, 16, %s214, [#allocation3]
        %s217 = smul.addr %s62, 16
        %s218 = scalar_lea.hbm %s1, %s217
        %s219 = scalar_lea.vmem [#allocation2], 2
        // Predicated region
        $region21: #{tpu_custom_call.1} parent=11 // pred_check
          _
        $region22: #{tpu_custom_call.1} parent=11 // pred_check_branch
          %221 = sbr.rel target = $region24
        $region23: #{tpu_custom_call.1} parent=11 // pred_region
          %222 = sst [smem:[#allocation10]] [#allocation15]
          %223 = sst [smem:[#allocation11]] [#allocation14]
        $region24: #{tpu_custom_call.1} parent=11 // pred_fallthru
          _
        %225 = shalt.err (0)
        %s227 = sshll.u32 %s219, 4
        %s228 = int_to_ptr.vmem [resolvable:$true] %s227
        %230 = dma.hbm_to_vmem [thread:$0]  %s218, 16, %s228, [#allocation3]
        %s231 = smul.addr %s65, 16
        %s232 = scalar_lea.hbm %s1, %s231
        %s233 = scalar_lea.vmem [#allocation2], 3
        // Predicated region
        $region25: #{tpu_custom_call.1} parent=11 // pred_check
          _
        $region26: #{tpu_custom_call.1} parent=11 // pred_check_branch
          %235 = sbr.rel target = $region28
        $region27: #{tpu_custom_call.1} parent=11 // pred_region
          %236 = sst [smem:[#allocation10]] [#allocation17]
          %237 = sst [smem:[#allocation11]] [#allocation16]
        $region28: #{tpu_custom_call.1} parent=11 // pred_fallthru
          _
        %239 = shalt.err (0)
        %s241 = sshll.u32 %s233, 4
        %s242 = int_to_ptr.vmem [resolvable:$true] %s241
        %244 = dma.hbm_to_vmem [thread:$0]  %s232, 16, %s242, [#allocation3]
        %s245 = smul.addr %s68, 16
        %s246 = scalar_lea.hbm %s1, %s245
        %s247 = scalar_lea.vmem [#allocation2], 4
        // Predicated region
        $region29: #{tpu_custom_call.1} parent=11 // pred_check
          _
        $region30: #{tpu_custom_call.1} parent=11 // pred_check_branch
          %249 = sbr.rel target = $region32
        $region31: #{tpu_custom_call.1} parent=11 // pred_region
          %250 = sst [smem:[#allocation10]] [#allocation19]
          %251 = sst [smem:[#allocation11]] [#allocation18]
        $region32: #{tpu_custom_call.1} parent=11 // pred_fallthru
          _
        %253 = shalt.err (0)
        %s255 = sshll.u32 %s247, 4
        %s256 = int_to_ptr.vmem [resolvable:$true] %s255
        %258 = dma.hbm_to_vmem [thread:$0]  %s246, 16, %s256, [#allocation3]
        %s259 = smul.addr %s71, 16
        %s260 = scalar_lea.hbm %s1, %s259
        %s261 = scalar_lea.vmem [#allocation2], 5
        // Predicated region
        $region33: #{tpu_custom_call.1} parent=11 // pred_check
          _
        $region34: #{tpu_custom_call.1} parent=11 // pred_check_branch
          %263 = sbr.rel target = $region36
        $region35: #{tpu_custom_call.1} parent=11 // pred_region
          %264 = sst [smem:[#allocation10]] [#allocation21]
          %265 = sst [smem:[#allocation11]] [#allocation20]
        $region36: #{tpu_custom_call.1} parent=11 // pred_fallthru
          _
        %267 = shalt.err (0)
        %s269 = sshll.u32 %s261, 4
        %s270 = int_to_ptr.vmem [resolvable:$true] %s269
        %272 = dma.hbm_to_vmem [thread:$0]  %s260, 16, %s270, [#allocation3]
        %s273 = smul.addr %s74, 16
        %s274 = scalar_lea.hbm %s1, %s273
        %s275 = scalar_lea.vmem [#allocation2], 6
        // Predicated region
        $region37: #{tpu_custom_call.1} parent=11 // pred_check
          _
        $region38: #{tpu_custom_call.1} parent=11 // pred_check_branch
          %277 = sbr.rel target = $region40
        $region39: #{tpu_custom_call.1} parent=11 // pred_region
          %278 = sst [smem:[#allocation10]] [#allocation23]
          %279 = sst [smem:[#allocation11]] [#allocation22]
        $region40: #{tpu_custom_call.1} parent=11 // pred_fallthru
          _
        %281 = shalt.err (0)
        %s283 = sshll.u32 %s275, 4
        %s284 = int_to_ptr.vmem [resolvable:$true] %s283
        %286 = dma.hbm_to_vmem [thread:$0]  %s274, 16, %s284, [#allocation3]
        %s287 = smul.addr %s77, 16
        %s288 = scalar_lea.hbm %s1, %s287
        %s289 = scalar_lea.vmem [#allocation2], 7
        // Predicated region
        $region41: #{tpu_custom_call.1} parent=11 // pred_check
          _
        $region42: #{tpu_custom_call.1} parent=11 // pred_check_branch
          %291 = sbr.rel target = $region44
        $region43: #{tpu_custom_call.1} parent=11 // pred_region
          %292 = sst [smem:[#allocation10]] [#allocation25]
          %293 = sst [smem:[#allocation11]] [#allocation24]
        $region44: #{tpu_custom_call.1} parent=11 // pred_fallthru
          _
        %295 = shalt.err (0)
        %s297 = sshll.u32 %s289, 4
        %s298 = int_to_ptr.vmem [resolvable:$true] %s297
        %300 = dma.hbm_to_vmem [thread:$0]  %s288, 16, %s298, [#allocation3]
        %s301 = smul.addr %s79, 16
        %s302 = scalar_lea.hbm %s1, %s301
        %s303 = scalar_lea.vmem [#allocation2], 8
        %s304 = scalar_lea.sflag [#allocation3], 1
        // Predicated region
        $region45: #{tpu_custom_call.1} parent=11 // pred_check
          _
        $region46: #{tpu_custom_call.1} parent=11 // pred_check_branch
          %306 = sbr.rel target = $region48
        $region47: #{tpu_custom_call.1} parent=11 // pred_region
          %307 = sst [smem:[#allocation10]] [#allocation27]
          %308 = sst [smem:[#allocation11]] [#allocation26]
        $region48: #{tpu_custom_call.1} parent=11 // pred_fallthru
          _
        %310 = shalt.err (0)
        %s312 = sshll.u32 %s303, 4
        %s313 = int_to_ptr.vmem [resolvable:$true] %s312
        %315 = dma.hbm_to_vmem [thread:$0]  %s302, 16, %s313, %s304
        %s316 = smul.addr %s81, 16
        %s317 = scalar_lea.hbm %s1, %s316
        %s318 = scalar_lea.vmem [#allocation2], 9
        // Predicated region
        $region49: #{tpu_custom_call.1} parent=11 // pred_check
          _
        $region50: #{tpu_custom_call.1} parent=11 // pred_check_branch
          %320 = sbr.rel target = $region52
        $region51: #{tpu_custom_call.1} parent=11 // pred_region
          %321 = sst [smem:[#allocation10]] [#allocation29]
          %322 = sst [smem:[#allocation11]] [#allocation28]
        $region52: #{tpu_custom_call.1} parent=11 // pred_fallthru
          _
        %324 = shalt.err (0)
        %s326 = sshll.u32 %s318, 4
        %s327 = int_to_ptr.vmem [resolvable:$true] %s326
        %329 = dma.hbm_to_vmem [thread:$0]  %s317, 16, %s327, %s304
        %s330 = smul.addr %s83, 16
        %s331 = scalar_lea.hbm %s1, %s330
        %s332 = scalar_lea.vmem [#allocation2], 10
        // Predicated region
        $region53: #{tpu_custom_call.1} parent=11 // pred_check
          _
        $region54: #{tpu_custom_call.1} parent=11 // pred_check_branch
          %334 = sbr.rel target = $region56
        $region55: #{tpu_custom_call.1} parent=11 // pred_region
          %335 = sst [smem:[#allocation10]] [#allocation31]
          %336 = sst [smem:[#allocation11]] [#allocation30]
        $region56: #{tpu_custom_call.1} parent=11 // pred_fallthru
          _
        %338 = shalt.err (0)
        %s340 = sshll.u32 %s332, 4
        %s341 = int_to_ptr.vmem [resolvable:$true] %s340
        %343 = dma.hbm_to_vmem [thread:$0]  %s331, 16, %s341, %s304
        %s344 = smul.addr %s85, 16
        %s345 = scalar_lea.hbm %s1, %s344
        %s346 = scalar_lea.vmem [#allocation2], 11
        // Predicated region
        $region57: #{tpu_custom_call.1} parent=11 // pred_check
          _
        $region58: #{tpu_custom_call.1} parent=11 // pred_check_branch
          %348 = sbr.rel target = $region60
        $region59: #{tpu_custom_call.1} parent=11 // pred_region
          %349 = sst [smem:[#allocation10]] [#allocation33]
          %350 = sst [smem:[#allocation11]] [#allocation32]
        $region60: #{tpu_custom_call.1} parent=11 // pred_fallthru
          _
        %352 = shalt.err (0)
        %s354 = sshll.u32 %s346, 4
        %s355 = int_to_ptr.vmem [resolvable:$true] %s354
        %357 = dma.hbm_to_vmem [thread:$0]  %s345, 16, %s355, %s304
        %s358 = smul.addr %s87, 16
        %s359 = scalar_lea.hbm %s1, %s358
        %s360 = scalar_lea.vmem [#allocation2], 12
        // Predicated region
        $region61: #{tpu_custom_call.1} parent=11 // pred_check
          _
        $region62: #{tpu_custom_call.1} parent=11 // pred_check_branch
          %362 = sbr.rel target = $region64
        $region63: #{tpu_custom_call.1} parent=11 // pred_region
          %363 = sst [smem:[#allocation10]] [#allocation35]
          %364 = sst [smem:[#allocation11]] [#allocation34]
        $region64: #{tpu_custom_call.1} parent=11 // pred_fallthru
          _
        %366 = shalt.err (0)
        %s368 = sshll.u32 %s360, 4
        %s369 = int_to_ptr.vmem [resolvable:$true] %s368
        %371 = dma.hbm_to_vmem [thread:$0]  %s359, 16, %s369, %s304
        %s372 = smul.addr %s89, 16
        %s373 = scalar_lea.hbm %s1, %s372
        %s374 = scalar_lea.vmem [#allocation2], 13
        // Predicated region
        $region65: #{tpu_custom_call.1} parent=11 // pred_check
          _
        $region66: #{tpu_custom_call.1} parent=11 // pred_check_branch
          %376 = sbr.rel target = $region68
        $region67: #{tpu_custom_call.1} parent=11 // pred_region
          %377 = sst [smem:[#allocation10]] [#allocation37]
          %378 = sst [smem:[#allocation11]] [#allocation36]
        $region68: #{tpu_custom_call.1} parent=11 // pred_fallthru
          _
        %380 = shalt.err (0)
        %s382 = sshll.u32 %s374, 4
        %s383 = int_to_ptr.vmem [resolvable:$true] %s382
        %385 = dma.hbm_to_vmem [thread:$0]  %s373, 16, %s383, %s304
        %s386 = smul.addr %s91, 16
        %s387 = scalar_lea.hbm %s1, %s386
        %s388 = scalar_lea.vmem [#allocation2], 14
        // Predicated region
        $region69: #{tpu_custom_call.1} parent=11 // pred_check
          _
        $region70: #{tpu_custom_call.1} parent=11 // pred_check_branch
          %390 = sbr.rel target = $region72
        $region71: #{tpu_custom_call.1} parent=11 // pred_region
          %391 = sst [smem:[#allocation10]] [#allocation39]
          %392 = sst [smem:[#allocation11]] [#allocation38]
        $region72: #{tpu_custom_call.1} parent=11 // pred_fallthru
          _
        %394 = shalt.err (0)
        %s396 = sshll.u32 %s388, 4
        %s397 = int_to_ptr.vmem [resolvable:$true] %s396
        %399 = dma.hbm_to_vmem [thread:$0]  %s387, 16, %s397, %s304
        %s400 = smul.addr %s93, 16
        %s401 = scalar_lea.hbm %s1, %s400
        %s402 = scalar_lea.vmem [#allocation2], 15
        // Predicated region
        $region73: #{tpu_custom_call.1} parent=11 // pred_check
          _
        $region74: #{tpu_custom_call.1} parent=11 // pred_check_branch
          %404 = sbr.rel target = $region76
        $region75: #{tpu_custom_call.1} parent=11 // pred_region
          %405 = sst [smem:[#allocation10]] [#allocation41]
          %406 = sst [smem:[#allocation11]] [#allocation40]
        $region76: #{tpu_custom_call.1} parent=11 // pred_fallthru
          _
        %408 = shalt.err (0)
        %s410 = sshll.u32 %s402, 4
        %s411 = int_to_ptr.vmem [resolvable:$true] %s410
        %413 = dma.hbm_to_vmem [thread:$0]  %s401, 16, %s411, %s304
        %s414 = smul.addr %s95, 16
        %s415 = scalar_lea.hbm %s1, %s414
        %s416 = scalar_lea.vmem [#allocation2], 16
        %s417 = scalar_lea.sflag [#allocation3], 2
        // Predicated region
        $region77: #{tpu_custom_call.1} parent=11 // pred_check
          _
        $region78: #{tpu_custom_call.1} parent=11 // pred_check_branch
          %419 = sbr.rel target = $region80
        $region79: #{tpu_custom_call.1} parent=11 // pred_region
          %420 = sst [smem:[#allocation10]] [#allocation43]
          %421 = sst [smem:[#allocation11]] [#allocation42]
        $region80: #{tpu_custom_call.1} parent=11 // pred_fallthru
          _
        %423 = shalt.err (0)
        %s425 = sshll.u32 %s416, 4
        %s426 = int_to_ptr.vmem [resolvable:$true] %s425
        %428 = dma.hbm_to_vmem [thread:$0]  %s415, 16, %s426, %s417
        %s429 = smul.addr %s97, 16
        %s430 = scalar_lea.hbm %s1, %s429
        %s431 = scalar_lea.vmem [#allocation2], 17
        // Predicated region
        $region81: #{tpu_custom_call.1} parent=11 // pred_check
          _
        $region82: #{tpu_custom_call.1} parent=11 // pred_check_branch
          %433 = sbr.rel target = $region84
        $region83: #{tpu_custom_call.1} parent=11 // pred_region
          %434 = sst [smem:[#allocation10]] [#allocation45]
          %435 = sst [smem:[#allocation11]] [#allocation44]
        $region84: #{tpu_custom_call.1} parent=11 // pred_fallthru
          _
        %437 = shalt.err (0)
        %s439 = sshll.u32 %s431, 4
        %s440 = int_to_ptr.vmem [resolvable:$true] %s439
        %442 = dma.hbm_to_vmem [thread:$0]  %s430, 16, %s440, %s417
        %s443 = smul.addr %s99, 16
        %s444 = scalar_lea.hbm %s1, %s443
        %s445 = scalar_lea.vmem [#allocation2], 18
        // Predicated region
        $region85: #{tpu_custom_call.1} parent=11 // pred_check
          _
        $region86: #{tpu_custom_call.1} parent=11 // pred_check_branch
          %447 = sbr.rel target = $region88
        $region87: #{tpu_custom_call.1} parent=11 // pred_region
          %448 = sst [smem:[#allocation10]] [#allocation47]
          %449 = sst [smem:[#allocation11]] [#allocation46]
        $region88: #{tpu_custom_call.1} parent=11 // pred_fallthru
          _
        %451 = shalt.err (0)
        %s453 = sshll.u32 %s445, 4
        %s454 = int_to_ptr.vmem [resolvable:$true] %s453
        %456 = dma.hbm_to_vmem [thread:$0]  %s444, 16, %s454, %s417
        %s457 = smul.addr %s101, 16
        %s458 = scalar_lea.hbm %s1, %s457
        %s459 = scalar_lea.vmem [#allocation2], 19
        // Predicated region
        $region89: #{tpu_custom_call.1} parent=11 // pred_check
          _
        $region90: #{tpu_custom_call.1} parent=11 // pred_check_branch
          %461 = sbr.rel target = $region92
        $region91: #{tpu_custom_call.1} parent=11 // pred_region
          %462 = sst [smem:[#allocation10]] [#allocation49]
          %463 = sst [smem:[#allocation11]] [#allocation48]
        $region92: #{tpu_custom_call.1} parent=11 // pred_fallthru
          _
        %465 = shalt.err (0)
        %s467 = sshll.u32 %s459, 4
        %s468 = int_to_ptr.vmem [resolvable:$true] %s467
        %470 = dma.hbm_to_vmem [thread:$0]  %s458, 16, %s468, %s417
        %s471 = smul.addr %s103, 16
        %s472 = scalar_lea.hbm %s1, %s471
        %s473 = scalar_lea.vmem [#allocation2], 20
        // Predicated region
        $region93: #{tpu_custom_call.1} parent=11 // pred_check
          _
        $region94: #{tpu_custom_call.1} parent=11 // pred_check_branch
          %475 = sbr.rel target = $region96
        $region95: #{tpu_custom_call.1} parent=11 // pred_region
          %476 = sst [smem:[#allocation10]] [#allocation51]
          %477 = sst [smem:[#allocation11]] [#allocation50]
        $region96: #{tpu_custom_call.1} parent=11 // pred_fallthru
          _
        %479 = shalt.err (0)
        %s481 = sshll.u32 %s473, 4
        %s482 = int_to_ptr.vmem [resolvable:$true] %s481
        %484 = dma.hbm_to_vmem [thread:$0]  %s472, 16, %s482, %s417
        %s485 = smul.addr %s105, 16
        %s486 = scalar_lea.hbm %s1, %s485
        %s487 = scalar_lea.vmem [#allocation2], 21
        // Predicated region
        $region97: #{tpu_custom_call.1} parent=11 // pred_check
          _
        $region98: #{tpu_custom_call.1} parent=11 // pred_check_branch
          %489 = sbr.rel target = $region100
        $region99: #{tpu_custom_call.1} parent=11 // pred_region
          %490 = sst [smem:[#allocation10]] [#allocation53]
          %491 = sst [smem:[#allocation11]] [#allocation52]
        $region100: #{tpu_custom_call.1} parent=11 // pred_fallthru
          _
        %493 = shalt.err (0)
        %s495 = sshll.u32 %s487, 4
        %s496 = int_to_ptr.vmem [resolvable:$true] %s495
        %498 = dma.hbm_to_vmem [thread:$0]  %s486, 16, %s496, %s417
        %s499 = smul.addr %s107, 16
        %s500 = scalar_lea.hbm %s1, %s499
        %s501 = scalar_lea.vmem [#allocation2], 22
        // Predicated region
        $region101: #{tpu_custom_call.1} parent=11 // pred_check
          _
        $region102: #{tpu_custom_call.1} parent=11 // pred_check_branch
          %503 = sbr.rel target = $region104
        $region103: #{tpu_custom_call.1} parent=11 // pred_region
          %504 = sst [smem:[#allocation10]] [#allocation55]
          %505 = sst [smem:[#allocation11]] [#allocation54]
        $region104: #{tpu_custom_call.1} parent=11 // pred_fallthru
          _
        %507 = shalt.err (0)
        %s509 = sshll.u32 %s501, 4
        %s510 = int_to_ptr.vmem [resolvable:$true] %s509
        %512 = dma.hbm_to_vmem [thread:$0]  %s500, 16, %s510, %s417
        %s513 = smul.addr %s109, 16
        %s514 = scalar_lea.hbm %s1, %s513
        %s515 = scalar_lea.vmem [#allocation2], 23
        // Predicated region
        $region105: #{tpu_custom_call.1} parent=11 // pred_check
          _
        $region106: #{tpu_custom_call.1} parent=11 // pred_check_branch
          %517 = sbr.rel target = $region108
        $region107: #{tpu_custom_call.1} parent=11 // pred_region
          %518 = sst [smem:[#allocation10]] [#allocation57]
          %519 = sst [smem:[#allocation11]] [#allocation56]
        $region108: #{tpu_custom_call.1} parent=11 // pred_fallthru
          _
        %521 = shalt.err (0)
        %s523 = sshll.u32 %s515, 4
        %s524 = int_to_ptr.vmem [resolvable:$true] %s523
        %526 = dma.hbm_to_vmem [thread:$0]  %s514, 16, %s524, %s417
        %s527 = smul.addr %s111, 16
        %s528 = scalar_lea.hbm %s1, %s527
        %s529 = scalar_lea.vmem [#allocation2], 24
        %s530 = scalar_lea.sflag [#allocation3], 3
        // Predicated region
        $region109: #{tpu_custom_call.1} parent=11 // pred_check
          _
        $region110: #{tpu_custom_call.1} parent=11 // pred_check_branch
          %532 = sbr.rel target = $region112
        $region111: #{tpu_custom_call.1} parent=11 // pred_region
          %533 = sst [smem:[#allocation10]] [#allocation59]
          %534 = sst [smem:[#allocation11]] [#allocation58]
        $region112: #{tpu_custom_call.1} parent=11 // pred_fallthru
          _
        %536 = shalt.err (0)
        %s538 = sshll.u32 %s529, 4
        %s539 = int_to_ptr.vmem [resolvable:$true] %s538
        %541 = dma.hbm_to_vmem [thread:$0]  %s528, 16, %s539, %s530
        %s542 = smul.addr %s113, 16
        %s543 = scalar_lea.hbm %s1, %s542
        %s544 = scalar_lea.vmem [#allocation2], 25
        // Predicated region
        $region113: #{tpu_custom_call.1} parent=11 // pred_check
          _
        $region114: #{tpu_custom_call.1} parent=11 // pred_check_branch
          %546 = sbr.rel target = $region116
        $region115: #{tpu_custom_call.1} parent=11 // pred_region
          %547 = sst [smem:[#allocation10]] [#allocation61]
          %548 = sst [smem:[#allocation11]] [#allocation60]
        $region116: #{tpu_custom_call.1} parent=11 // pred_fallthru
          _
        %550 = shalt.err (0)
        %s552 = sshll.u32 %s544, 4
        %s553 = int_to_ptr.vmem [resolvable:$true] %s552
        %555 = dma.hbm_to_vmem [thread:$0]  %s543, 16, %s553, %s530
        %s556 = smul.addr %s115, 16
        %s557 = scalar_lea.hbm %s1, %s556
        %s558 = scalar_lea.vmem [#allocation2], 26
        // Predicated region
        $region117: #{tpu_custom_call.1} parent=11 // pred_check
          _
        $region118: #{tpu_custom_call.1} parent=11 // pred_check_branch
          %560 = sbr.rel target = $region120
        $region119: #{tpu_custom_call.1} parent=11 // pred_region
          %561 = sst [smem:[#allocation10]] [#allocation63]
          %562 = sst [smem:[#allocation11]] [#allocation62]
        $region120: #{tpu_custom_call.1} parent=11 // pred_fallthru
          _
        %564 = shalt.err (0)
        %s566 = sshll.u32 %s558, 4
        %s567 = int_to_ptr.vmem [resolvable:$true] %s566
        %569 = dma.hbm_to_vmem [thread:$0]  %s557, 16, %s567, %s530
        %s570 = smul.addr %s117, 16
        %s571 = scalar_lea.hbm %s1, %s570
        %s572 = scalar_lea.vmem [#allocation2], 27
        // Predicated region
        $region121: #{tpu_custom_call.1} parent=11 // pred_check
          _
        $region122: #{tpu_custom_call.1} parent=11 // pred_check_branch
          %574 = sbr.rel target = $region124
        $region123: #{tpu_custom_call.1} parent=11 // pred_region
          %575 = sst [smem:[#allocation10]] [#allocation65]
          %576 = sst [smem:[#allocation11]] [#allocation64]
        $region124: #{tpu_custom_call.1} parent=11 // pred_fallthru
          _
        %578 = shalt.err (0)
        %s580 = sshll.u32 %s572, 4
        %s581 = int_to_ptr.vmem [resolvable:$true] %s580
        %583 = dma.hbm_to_vmem [thread:$0]  %s571, 16, %s581, %s530
        %s584 = smul.addr %s119, 16
        %s585 = scalar_lea.hbm %s1, %s584
        %s586 = scalar_lea.vmem [#allocation2], 28
        // Predicated region
        $region125: #{tpu_custom_call.1} parent=11 // pred_check
          _
        $region126: #{tpu_custom_call.1} parent=11 // pred_check_branch
          %588 = sbr.rel target = $region128
        $region127: #{tpu_custom_call.1} parent=11 // pred_region
          %589 = sst [smem:[#allocation10]] [#allocation67]
          %590 = sst [smem:[#allocation11]] [#allocation66]
        $region128: #{tpu_custom_call.1} parent=11 // pred_fallthru
          _
        %592 = shalt.err (0)
        %s594 = sshll.u32 %s586, 4
        %s595 = int_to_ptr.vmem [resolvable:$true] %s594
        %597 = dma.hbm_to_vmem [thread:$0]  %s585, 16, %s595, %s530
        %s598 = smul.addr %s121, 16
        %s599 = scalar_lea.hbm %s1, %s598
        %s600 = scalar_lea.vmem [#allocation2], 29
        // Predicated region
        $region129: #{tpu_custom_call.1} parent=11 // pred_check
          _
        $region130: #{tpu_custom_call.1} parent=11 // pred_check_branch
          %602 = sbr.rel target = $region132
        $region131: #{tpu_custom_call.1} parent=11 // pred_region
          %603 = sst [smem:[#allocation10]] [#allocation69]
          %604 = sst [smem:[#allocation11]] [#allocation68]
        $region132: #{tpu_custom_call.1} parent=11 // pred_fallthru
          _
        %606 = shalt.err (0)
        %s608 = sshll.u32 %s600, 4
        %s609 = int_to_ptr.vmem [resolvable:$true] %s608
        %611 = dma.hbm_to_vmem [thread:$0]  %s599, 16, %s609, %s530
        %s612 = smul.addr %s123, 16
        %s613 = scalar_lea.hbm %s1, %s612
        %s614 = scalar_lea.vmem [#allocation2], 30
        // Predicated region
        $region133: #{tpu_custom_call.1} parent=11 // pred_check
          _
        $region134: #{tpu_custom_call.1} parent=11 // pred_check_branch
          %616 = sbr.rel target = $region136
        $region135: #{tpu_custom_call.1} parent=11 // pred_region
          %617 = sst [smem:[#allocation10]] [#allocation71]
          %618 = sst [smem:[#allocation11]] [#allocation70]
        $region136: #{tpu_custom_call.1} parent=11 // pred_fallthru
          _
        %620 = shalt.err (0)
        %s622 = sshll.u32 %s614, 4
        %s623 = int_to_ptr.vmem [resolvable:$true] %s622
        %625 = dma.hbm_to_vmem [thread:$0]  %s613, 16, %s623, %s530
        %s626 = smul.addr %s125, 16
        %s627 = scalar_lea.hbm %s1, %s626
        %s628 = scalar_lea.vmem [#allocation2], 31
        // Predicated region
        $region137: #{tpu_custom_call.1} parent=11 // pred_check
          _
        $region138: #{tpu_custom_call.1} parent=11 // pred_check_branch
          %630 = sbr.rel target = $region140
        $region139: #{tpu_custom_call.1} parent=11 // pred_region
          %631 = sst [smem:[#allocation10]] [#allocation73]
          %632 = sst [smem:[#allocation11]] [#allocation72]
        $region140: #{tpu_custom_call.1} parent=11 // pred_fallthru
          _
        %634 = shalt.err (0)
        %s636 = sshll.u32 %s628, 4
        %s637 = int_to_ptr.vmem [resolvable:$true] %s636
        %639 = dma.hbm_to_vmem [thread:$0]  %s627, 16, %s637, %s530
        %s640 = smul.addr %s127, 16
        %s641 = scalar_lea.hbm %s1, %s640
        %s642 = scalar_lea.vmem [#allocation2], 32
        %s643 = scalar_lea.sflag [#allocation3], 4
        // Predicated region
        $region141: #{tpu_custom_call.1} parent=11 // pred_check
          _
        $region142: #{tpu_custom_call.1} parent=11 // pred_check_branch
          %645 = sbr.rel target = $region144
        $region143: #{tpu_custom_call.1} parent=11 // pred_region
          %646 = sst [smem:[#allocation10]] [#allocation75]
          %647 = sst [smem:[#allocation11]] [#allocation74]
        $region144: #{tpu_custom_call.1} parent=11 // pred_fallthru
          _
        %649 = shalt.err (0)
        %s651 = sshll.u32 %s642, 4
        %s652 = int_to_ptr.vmem [resolvable:$true] %s651
        %654 = dma.hbm_to_vmem [thread:$0]  %s641, 16, %s652, %s643
        %s655 = smul.addr %s129, 16
        %s656 = scalar_lea.hbm %s1, %s655
        %s657 = scalar_lea.vmem [#allocation2], 33
        // Predicated region
        $region145: #{tpu_custom_call.1} parent=11 // pred_check
          _
        $region146: #{tpu_custom_call.1} parent=11 // pred_check_branch
          %659 = sbr.rel target = $region148
        $region147: #{tpu_custom_call.1} parent=11 // pred_region
          %660 = sst [smem:[#allocation10]] [#allocation77]
          %661 = sst [smem:[#allocation11]] [#allocation76]
        $region148: #{tpu_custom_call.1} parent=11 // pred_fallthru
          _
        %663 = shalt.err (0)
        %s665 = sshll.u32 %s657, 4
        %s666 = int_to_ptr.vmem [resolvable:$true] %s665
        %668 = dma.hbm_to_vmem [thread:$0]  %s656, 16, %s666, %s643
        %s669 = smul.addr %s131, 16
        %s670 = scalar_lea.hbm %s1, %s669
        %s671 = scalar_lea.vmem [#allocation2], 34
        // Predicated region
        $region149: #{tpu_custom_call.1} parent=11 // pred_check
          _
        $region150: #{tpu_custom_call.1} parent=11 // pred_check_branch
          %673 = sbr.rel target = $region152
        $region151: #{tpu_custom_call.1} parent=11 // pred_region
          %674 = sst [smem:[#allocation10]] [#allocation79]
          %675 = sst [smem:[#allocation11]] [#allocation78]
        $region152: #{tpu_custom_call.1} parent=11 // pred_fallthru
          _
        %677 = shalt.err (0)
        %s679 = sshll.u32 %s671, 4
        %s680 = int_to_ptr.vmem [resolvable:$true] %s679
        %682 = dma.hbm_to_vmem [thread:$0]  %s670, 16, %s680, %s643
        %s683 = smul.addr %s133, 16
        %s684 = scalar_lea.hbm %s1, %s683
        %s685 = scalar_lea.vmem [#allocation2], 35
        // Predicated region
        $region153: #{tpu_custom_call.1} parent=11 // pred_check
          _
        $region154: #{tpu_custom_call.1} parent=11 // pred_check_branch
          %687 = sbr.rel target = $region156
        $region155: #{tpu_custom_call.1} parent=11 // pred_region
          %688 = sst [smem:[#allocation10]] [#allocation81]
          %689 = sst [smem:[#allocation11]] [#allocation80]
        $region156: #{tpu_custom_call.1} parent=11 // pred_fallthru
          _
        %691 = shalt.err (0)
        %s693 = sshll.u32 %s685, 4
        %s694 = int_to_ptr.vmem [resolvable:$true] %s693
        %696 = dma.hbm_to_vmem [thread:$0]  %s684, 16, %s694, %s643
        %s697 = smul.addr %s135, 16
        %s698 = scalar_lea.hbm %s1, %s697
        %s699 = scalar_lea.vmem [#allocation2], 36
        // Predicated region
        $region157: #{tpu_custom_call.1} parent=11 // pred_check
          _
        $region158: #{tpu_custom_call.1} parent=11 // pred_check_branch
          %701 = sbr.rel target = $region160
        $region159: #{tpu_custom_call.1} parent=11 // pred_region
          %702 = sst [smem:[#allocation10]] [#allocation83]
          %703 = sst [smem:[#allocation11]] [#allocation82]
        $region160: #{tpu_custom_call.1} parent=11 // pred_fallthru
          _
        %705 = shalt.err (0)
        %s707 = sshll.u32 %s699, 4
        %s708 = int_to_ptr.vmem [resolvable:$true] %s707
        %710 = dma.hbm_to_vmem [thread:$0]  %s698, 16, %s708, %s643
        %s711 = smul.addr %s137, 16
        %s712 = scalar_lea.hbm %s1, %s711
        %s713 = scalar_lea.vmem [#allocation2], 37
        // Predicated region
        $region161: #{tpu_custom_call.1} parent=11 // pred_check
          _
        $region162: #{tpu_custom_call.1} parent=11 // pred_check_branch
          %715 = sbr.rel target = $region164
        $region163: #{tpu_custom_call.1} parent=11 // pred_region
          %716 = sst [smem:[#allocation10]] [#allocation85]
          %717 = sst [smem:[#allocation11]] [#allocation84]
        $region164: #{tpu_custom_call.1} parent=11 // pred_fallthru
          _
        %719 = shalt.err (0)
        %s721 = sshll.u32 %s713, 4
        %s722 = int_to_ptr.vmem [resolvable:$true] %s721
        %724 = dma.hbm_to_vmem [thread:$0]  %s712, 16, %s722, %s643
        %s725 = smul.addr %s139, 16
        %s726 = scalar_lea.hbm %s1, %s725
        %s727 = scalar_lea.vmem [#allocation2], 38
        // Predicated region
        $region165: #{tpu_custom_call.1} parent=11 // pred_check
          _
        $region166: #{tpu_custom_call.1} parent=11 // pred_check_branch
          %729 = sbr.rel target = $region168
        $region167: #{tpu_custom_call.1} parent=11 // pred_region
          %730 = sst [smem:[#allocation10]] [#allocation87]
          %731 = sst [smem:[#allocation11]] [#allocation86]
        $region168: #{tpu_custom_call.1} parent=11 // pred_fallthru
          _
        %733 = shalt.err (0)
        %s735 = sshll.u32 %s727, 4
        %s736 = int_to_ptr.vmem [resolvable:$true] %s735
        %738 = dma.hbm_to_vmem [thread:$0]  %s726, 16, %s736, %s643
        %s739 = smul.addr %s141, 16
        %s740 = scalar_lea.hbm %s1, %s739
        %s741 = scalar_lea.vmem [#allocation2], 39
        // Predicated region
        $region169: #{tpu_custom_call.1} parent=11 // pred_check
          _
        $region170: #{tpu_custom_call.1} parent=11 // pred_check_branch
          %743 = sbr.rel target = $region172
        $region171: #{tpu_custom_call.1} parent=11 // pred_region
          %744 = sst [smem:[#allocation10]] [#allocation89]
          %745 = sst [smem:[#allocation11]] [#allocation88]
        $region172: #{tpu_custom_call.1} parent=11 // pred_fallthru
          _
        %747 = shalt.err (0)
        %s749 = sshll.u32 %s741, 4
        %s750 = int_to_ptr.vmem [resolvable:$true] %s749
        %752 = dma.hbm_to_vmem [thread:$0]  %s740, 16, %s750, %s643
        %s753 = smul.addr %s143, 16
        %s754 = scalar_lea.hbm %s1, %s753
        %s755 = scalar_lea.vmem [#allocation2], 40
        %s756 = scalar_lea.sflag [#allocation3], 5
        // Predicated region
        $region173: #{tpu_custom_call.1} parent=11 // pred_check
          _
        $region174: #{tpu_custom_call.1} parent=11 // pred_check_branch
          %758 = sbr.rel target = $region176
        $region175: #{tpu_custom_call.1} parent=11 // pred_region
          %759 = sst [smem:[#allocation10]] [#allocation91]
          %760 = sst [smem:[#allocation11]] [#allocation90]
        $region176: #{tpu_custom_call.1} parent=11 // pred_fallthru
          _
        %762 = shalt.err (0)
        %s764 = sshll.u32 %s755, 4
        %s765 = int_to_ptr.vmem [resolvable:$true] %s764
        %767 = dma.hbm_to_vmem [thread:$0]  %s754, 16, %s765, %s756
        %s768 = smul.addr %s145, 16
        %s769 = scalar_lea.hbm %s1, %s768
        %s770 = scalar_lea.vmem [#allocation2], 41
        // Predicated region
        $region177: #{tpu_custom_call.1} parent=11 // pred_check
          _
        $region178: #{tpu_custom_call.1} parent=11 // pred_check_branch
          %772 = sbr.rel target = $region180
        $region179: #{tpu_custom_call.1} parent=11 // pred_region
          %773 = sst [smem:[#allocation10]] [#allocation93]
          %774 = sst [smem:[#allocation11]] [#allocation92]
        $region180: #{tpu_custom_call.1} parent=11 // pred_fallthru
          _
        %776 = shalt.err (0)
        %s778 = sshll.u32 %s770, 4
        %s779 = int_to_ptr.vmem [resolvable:$true] %s778
        %781 = dma.hbm_to_vmem [thread:$0]  %s769, 16, %s779, %s756
        %s782 = smul.addr %s147, 16
        %s783 = scalar_lea.hbm %s1, %s782
        %s784 = scalar_lea.vmem [#allocation2], 42
        // Predicated region
        $region181: #{tpu_custom_call.1} parent=11 // pred_check
          _
        $region182: #{tpu_custom_call.1} parent=11 // pred_check_branch
          %786 = sbr.rel target = $region184
        $region183: #{tpu_custom_call.1} parent=11 // pred_region
          %787 = sst [smem:[#allocation10]] [#allocation95]
          %788 = sst [smem:[#allocation11]] [#allocation94]
        $region184: #{tpu_custom_call.1} parent=11 // pred_fallthru
          _
        %790 = shalt.err (0)
        %s792 = sshll.u32 %s784, 4
        %s793 = int_to_ptr.vmem [resolvable:$true] %s792
        %795 = dma.hbm_to_vmem [thread:$0]  %s783, 16, %s793, %s756
        %s796 = smul.addr %s149, 16
        %s797 = scalar_lea.hbm %s1, %s796
        %s798 = scalar_lea.vmem [#allocation2], 43
        // Predicated region
        $region185: #{tpu_custom_call.1} parent=11 // pred_check
          _
        $region186: #{tpu_custom_call.1} parent=11 // pred_check_branch
          %800 = sbr.rel target = $region188
        $region187: #{tpu_custom_call.1} parent=11 // pred_region
          %801 = sst [smem:[#allocation10]] [#allocation97]
          %802 = sst [smem:[#allocation11]] [#allocation96]
        $region188: #{tpu_custom_call.1} parent=11 // pred_fallthru
          _
        %804 = shalt.err (0)
        %s806 = sshll.u32 %s798, 4
        %s807 = int_to_ptr.vmem [resolvable:$true] %s806
        %809 = dma.hbm_to_vmem [thread:$0]  %s797, 16, %s807, %s756
        %s810 = smul.addr %s151, 16
        %s811 = scalar_lea.hbm %s1, %s810
        %s812 = scalar_lea.vmem [#allocation2], 44
        // Predicated region
        $region189: #{tpu_custom_call.1} parent=11 // pred_check
          _
        $region190: #{tpu_custom_call.1} parent=11 // pred_check_branch
          %814 = sbr.rel target = $region192
        $region191: #{tpu_custom_call.1} parent=11 // pred_region
          %815 = sst [smem:[#allocation10]] [#allocation99]
          %816 = sst [smem:[#allocation11]] [#allocation98]
        $region192: #{tpu_custom_call.1} parent=11 // pred_fallthru
          _
        %818 = shalt.err (0)
        %s820 = sshll.u32 %s812, 4
        %s821 = int_to_ptr.vmem [resolvable:$true] %s820
        %823 = dma.hbm_to_vmem [thread:$0]  %s811, 16, %s821, %s756
        %s824 = smul.addr %s153, 16
        %s825 = scalar_lea.hbm %s1, %s824
        %s826 = scalar_lea.vmem [#allocation2], 45
        // Predicated region
        $region193: #{tpu_custom_call.1} parent=11 // pred_check
          _
        $region194: #{tpu_custom_call.1} parent=11 // pred_check_branch
          %828 = sbr.rel target = $region196
        $region195: #{tpu_custom_call.1} parent=11 // pred_region
          %829 = sst [smem:[#allocation10]] [#allocation101]
          %830 = sst [smem:[#allocation11]] [#allocation100]
        $region196: #{tpu_custom_call.1} parent=11 // pred_fallthru
          _
        %832 = shalt.err (0)
        %s834 = sshll.u32 %s826, 4
        %s835 = int_to_ptr.vmem [resolvable:$true] %s834
        %837 = dma.hbm_to_vmem [thread:$0]  %s825, 16, %s835, %s756
        %s838 = smul.addr %s155, 16
        %s839 = scalar_lea.hbm %s1, %s838
        %s840 = scalar_lea.vmem [#allocation2], 46
        // Predicated region
        $region197: #{tpu_custom_call.1} parent=11 // pred_check
          _
        $region198: #{tpu_custom_call.1} parent=11 // pred_check_branch
          %842 = sbr.rel target = $region200
        $region199: #{tpu_custom_call.1} parent=11 // pred_region
          %843 = sst [smem:[#allocation10]] [#allocation103]
          %844 = sst [smem:[#allocation11]] [#allocation102]
        $region200: #{tpu_custom_call.1} parent=11 // pred_fallthru
          _
        %846 = shalt.err (0)
        %s848 = sshll.u32 %s840, 4
        %s849 = int_to_ptr.vmem [resolvable:$true] %s848
        %851 = dma.hbm_to_vmem [thread:$0]  %s839, 16, %s849, %s756
        %s852 = smul.addr %s157, 16
        %s853 = scalar_lea.hbm %s1, %s852
        %s854 = scalar_lea.vmem [#allocation2], 47
        // Predicated region
        $region201: #{tpu_custom_call.1} parent=11 // pred_check
          _
        $region202: #{tpu_custom_call.1} parent=11 // pred_check_branch
          %856 = sbr.rel target = $region204
        $region203: #{tpu_custom_call.1} parent=11 // pred_region
          %857 = sst [smem:[#allocation10]] [#allocation105]
          %858 = sst [smem:[#allocation11]] [#allocation104]
        $region204: #{tpu_custom_call.1} parent=11 // pred_fallthru
          _
        %860 = shalt.err (0)
        %s862 = sshll.u32 %s854, 4
        %s863 = int_to_ptr.vmem [resolvable:$true] %s862
        %865 = dma.hbm_to_vmem [thread:$0]  %s853, 16, %s863, %s756
        %s866 = smul.addr %s159, 16
        %s867 = scalar_lea.hbm %s1, %s866
        %s868 = scalar_lea.vmem [#allocation2], 48
        %s869 = scalar_lea.sflag [#allocation3], 6
        // Predicated region
        $region205: #{tpu_custom_call.1} parent=11 // pred_check
          _
        $region206: #{tpu_custom_call.1} parent=11 // pred_check_branch
          %871 = sbr.rel target = $region208
        $region207: #{tpu_custom_call.1} parent=11 // pred_region
          %872 = sst [smem:[#allocation10]] [#allocation107]
          %873 = sst [smem:[#allocation11]] [#allocation106]
        $region208: #{tpu_custom_call.1} parent=11 // pred_fallthru
          _
        %875 = shalt.err (0)
        %s877 = sshll.u32 %s868, 4
        %s878 = int_to_ptr.vmem [resolvable:$true] %s877
        %880 = dma.hbm_to_vmem [thread:$0]  %s867, 16, %s878, %s869
        %s881 = smul.addr %s161, 16
        %s882 = scalar_lea.hbm %s1, %s881
        %s883 = scalar_lea.vmem [#allocation2], 49
        // Predicated region
        $region209: #{tpu_custom_call.1} parent=11 // pred_check
          _
        $region210: #{tpu_custom_call.1} parent=11 // pred_check_branch
          %885 = sbr.rel target = $region212
        $region211: #{tpu_custom_call.1} parent=11 // pred_region
          %886 = sst [smem:[#allocation10]] [#allocation109]
          %887 = sst [smem:[#allocation11]] [#allocation108]
        $region212: #{tpu_custom_call.1} parent=11 // pred_fallthru
          _
        %889 = shalt.err (0)
        %s891 = sshll.u32 %s883, 4
        %s892 = int_to_ptr.vmem [resolvable:$true] %s891
        %894 = dma.hbm_to_vmem [thread:$0]  %s882, 16, %s892, %s869
        %s895 = smul.addr %s163, 16
        %s896 = scalar_lea.hbm %s1, %s895
        %s897 = scalar_lea.vmem [#allocation2], 50
        // Predicated region
        $region213: #{tpu_custom_call.1} parent=11 // pred_check
          _
        $region214: #{tpu_custom_call.1} parent=11 // pred_check_branch
          %899 = sbr.rel target = $region216
        $region215: #{tpu_custom_call.1} parent=11 // pred_region
          %900 = sst [smem:[#allocation10]] [#allocation111]
          %901 = sst [smem:[#allocation11]] [#allocation110]
        $region216: #{tpu_custom_call.1} parent=11 // pred_fallthru
          _
        %903 = shalt.err (0)
        %s905 = sshll.u32 %s897, 4
        %s906 = int_to_ptr.vmem [resolvable:$true] %s905
        %908 = dma.hbm_to_vmem [thread:$0]  %s896, 16, %s906, %s869
        %s909 = smul.addr %s165, 16
        %s910 = scalar_lea.hbm %s1, %s909
        %s911 = scalar_lea.vmem [#allocation2], 51
        // Predicated region
        $region217: #{tpu_custom_call.1} parent=11 // pred_check
          _
        $region218: #{tpu_custom_call.1} parent=11 // pred_check_branch
          %913 = sbr.rel target = $region220
        $region219: #{tpu_custom_call.1} parent=11 // pred_region
          %914 = sst [smem:[#allocation10]] [#allocation113]
          %915 = sst [smem:[#allocation11]] [#allocation112]
        $region220: #{tpu_custom_call.1} parent=11 // pred_fallthru
          _
        %917 = shalt.err (0)
        %s919 = sshll.u32 %s911, 4
        %s920 = int_to_ptr.vmem [resolvable:$true] %s919
        %922 = dma.hbm_to_vmem [thread:$0]  %s910, 16, %s920, %s869
        %s923 = smul.addr %s167, 16
        %s924 = scalar_lea.hbm %s1, %s923
        %s925 = scalar_lea.vmem [#allocation2], 52
        // Predicated region
        $region221: #{tpu_custom_call.1} parent=11 // pred_check
          _
        $region222: #{tpu_custom_call.1} parent=11 // pred_check_branch
          %927 = sbr.rel target = $region224
        $region223: #{tpu_custom_call.1} parent=11 // pred_region
          %928 = sst [smem:[#allocation10]] [#allocation115]
          %929 = sst [smem:[#allocation11]] [#allocation114]
        $region224: #{tpu_custom_call.1} parent=11 // pred_fallthru
          _
        %931 = shalt.err (0)
        %s933 = sshll.u32 %s925, 4
        %s934 = int_to_ptr.vmem [resolvable:$true] %s933
        %936 = dma.hbm_to_vmem [thread:$0]  %s924, 16, %s934, %s869
        %s937 = smul.addr %s169, 16
        %s938 = scalar_lea.hbm %s1, %s937
        %s939 = scalar_lea.vmem [#allocation2], 53
        // Predicated region
        $region225: #{tpu_custom_call.1} parent=11 // pred_check
          _
        $region226: #{tpu_custom_call.1} parent=11 // pred_check_branch
          %941 = sbr.rel target = $region228
        $region227: #{tpu_custom_call.1} parent=11 // pred_region
          %942 = sst [smem:[#allocation10]] [#allocation117]
          %943 = sst [smem:[#allocation11]] [#allocation116]
        $region228: #{tpu_custom_call.1} parent=11 // pred_fallthru
          _
        %945 = shalt.err (0)
        %s947 = sshll.u32 %s939, 4
        %s948 = int_to_ptr.vmem [resolvable:$true] %s947
        %950 = dma.hbm_to_vmem [thread:$0]  %s938, 16, %s948, %s869
        %s951 = smul.addr %s171, 16
        %s952 = scalar_lea.hbm %s1, %s951
        %s953 = scalar_lea.vmem [#allocation2], 54
        // Predicated region
        $region229: #{tpu_custom_call.1} parent=11 // pred_check
          _
        $region230: #{tpu_custom_call.1} parent=11 // pred_check_branch
          %955 = sbr.rel target = $region232
        $region231: #{tpu_custom_call.1} parent=11 // pred_region
          %956 = sst [smem:[#allocation10]] [#allocation119]
          %957 = sst [smem:[#allocation11]] [#allocation118]
        $region232: #{tpu_custom_call.1} parent=11 // pred_fallthru
          _
        %959 = shalt.err (0)
        %s961 = sshll.u32 %s953, 4
        %s962 = int_to_ptr.vmem [resolvable:$true] %s961
        %964 = dma.hbm_to_vmem [thread:$0]  %s952, 16, %s962, %s869
        %s965 = smul.addr %s173, 16
        %s966 = scalar_lea.hbm %s1, %s965
        %s967 = scalar_lea.vmem [#allocation2], 55
        // Predicated region
        $region233: #{tpu_custom_call.1} parent=11 // pred_check
          _
        $region234: #{tpu_custom_call.1} parent=11 // pred_check_branch
          %969 = sbr.rel target = $region236
        $region235: #{tpu_custom_call.1} parent=11 // pred_region
          %970 = sst [smem:[#allocation10]] [#allocation121]
          %971 = sst [smem:[#allocation11]] [#allocation120]
        $region236: #{tpu_custom_call.1} parent=11 // pred_fallthru
          _
        %973 = shalt.err (0)
        %s975 = sshll.u32 %s967, 4
        %s976 = int_to_ptr.vmem [resolvable:$true] %s975
        %978 = dma.hbm_to_vmem [thread:$0]  %s966, 16, %s976, %s869
        %s979 = smul.addr %s175, 16
        %s980 = scalar_lea.hbm %s1, %s979
        %s981 = scalar_lea.vmem [#allocation2], 56
        %s982 = scalar_lea.sflag [#allocation3], 7
        // Predicated region
        $region237: #{tpu_custom_call.1} parent=11 // pred_check
          _
        $region238: #{tpu_custom_call.1} parent=11 // pred_check_branch
          %984 = sbr.rel target = $region240
        $region239: #{tpu_custom_call.1} parent=11 // pred_region
          %985 = sst [smem:[#allocation10]] [#allocation123]
          %986 = sst [smem:[#allocation11]] [#allocation122]
        $region240: #{tpu_custom_call.1} parent=11 // pred_fallthru
          _
        %988 = shalt.err (0)
        %s990 = sshll.u32 %s981, 4
        %s991 = int_to_ptr.vmem [resolvable:$true] %s990
        %993 = dma.hbm_to_vmem [thread:$0]  %s980, 16, %s991, %s982
        %s994 = smul.addr %s177, 16
        %s995 = scalar_lea.hbm %s1, %s994
        %s996 = scalar_lea.vmem [#allocation2], 57
        // Predicated region
        $region241: #{tpu_custom_call.1} parent=11 // pred_check
          _
        $region242: #{tpu_custom_call.1} parent=11 // pred_check_branch
          %998 = sbr.rel target = $region244
        $region243: #{tpu_custom_call.1} parent=11 // pred_region
          %999 = sst [smem:[#allocation10]] [#allocation125]
          %1000 = sst [smem:[#allocation11]] [#allocation124]
        $region244: #{tpu_custom_call.1} parent=11 // pred_fallthru
          _
        %1002 = shalt.err (0)
        %s1004 = sshll.u32 %s996, 4
        %s1005 = int_to_ptr.vmem [resolvable:$true] %s1004
        %1007 = dma.hbm_to_vmem [thread:$0]  %s995, 16, %s1005, %s982
        %s1008 = smul.addr %s179, 16
        %s1009 = scalar_lea.hbm %s1, %s1008
        %s1010 = scalar_lea.vmem [#allocation2], 58
        // Predicated region
        $region245: #{tpu_custom_call.1} parent=11 // pred_check
          _
        $region246: #{tpu_custom_call.1} parent=11 // pred_check_branch
          %1012 = sbr.rel target = $region248
        $region247: #{tpu_custom_call.1} parent=11 // pred_region
          %1013 = sst [smem:[#allocation10]] [#allocation127]
          %1014 = sst [smem:[#allocation11]] [#allocation126]
        $region248: #{tpu_custom_call.1} parent=11 // pred_fallthru
          _
        %1016 = shalt.err (0)
        %s1018 = sshll.u32 %s1010, 4
        %s1019 = int_to_ptr.vmem [resolvable:$true] %s1018
        %1021 = dma.hbm_to_vmem [thread:$0]  %s1009, 16, %s1019, %s982
        %s1022 = smul.addr %s181, 16
        %s1023 = scalar_lea.hbm %s1, %s1022
        %s1024 = scalar_lea.vmem [#allocation2], 59
        // Predicated region
        $region249: #{tpu_custom_call.1} parent=11 // pred_check
          _
        $region250: #{tpu_custom_call.1} parent=11 // pred_check_branch
          %1026 = sbr.rel target = $region252
        $region251: #{tpu_custom_call.1} parent=11 // pred_region
          %1027 = sst [smem:[#allocation10]] [#allocation129]
          %1028 = sst [smem:[#allocation11]] [#allocation128]
        $region252: #{tpu_custom_call.1} parent=11 // pred_fallthru
          _
        %1030 = shalt.err (0)
        %s1032 = sshll.u32 %s1024, 4
        %s1033 = int_to_ptr.vmem [resolvable:$true] %s1032
        %1035 = dma.hbm_to_vmem [thread:$0]  %s1023, 16, %s1033, %s982
        %s1036 = smul.addr %s183, 16
        %s1037 = scalar_lea.hbm %s1, %s1036
        %s1038 = scalar_lea.vmem [#allocation2], 60
        // Predicated region
        $region253: #{tpu_custom_call.1} parent=11 // pred_check
          _
        $region254: #{tpu_custom_call.1} parent=11 // pred_check_branch
          %1040 = sbr.rel target = $region256
        $region255: #{tpu_custom_call.1} parent=11 // pred_region
          %1041 = sst [smem:[#allocation10]] [#allocation131]
          %1042 = sst [smem:[#allocation11]] [#allocation130]
        $region256: #{tpu_custom_call.1} parent=11 // pred_fallthru
          _
        %1044 = shalt.err (0)
        %s1046 = sshll.u32 %s1038, 4
        %s1047 = int_to_ptr.vmem [resolvable:$true] %s1046
        %1049 = dma.hbm_to_vmem [thread:$0]  %s1037, 16, %s1047, %s982
        %s1050 = smul.addr %s185, 16
        %s1051 = scalar_lea.hbm %s1, %s1050
        %s1052 = scalar_lea.vmem [#allocation2], 61
        // Predicated region
        $region257: #{tpu_custom_call.1} parent=11 // pred_check
          _
        $region258: #{tpu_custom_call.1} parent=11 // pred_check_branch
          %1054 = sbr.rel target = $region260
        $region259: #{tpu_custom_call.1} parent=11 // pred_region
          %1055 = sst [smem:[#allocation10]] [#allocation133]
          %1056 = sst [smem:[#allocation11]] [#allocation132]
        $region260: #{tpu_custom_call.1} parent=11 // pred_fallthru
          _
        %1058 = shalt.err (0)
        %s1060 = sshll.u32 %s1052, 4
        %s1061 = int_to_ptr.vmem [resolvable:$true] %s1060
        %1063 = dma.hbm_to_vmem [thread:$0]  %s1051, 16, %s1061, %s982
        %s1064 = smul.addr %s187, 16
        %s1065 = scalar_lea.hbm %s1, %s1064
        %s1066 = scalar_lea.vmem [#allocation2], 62
        // Predicated region
        $region261: #{tpu_custom_call.1} parent=11 // pred_check
          _
        $region262: #{tpu_custom_call.1} parent=11 // pred_check_branch
          %1068 = sbr.rel target = $region264
        $region263: #{tpu_custom_call.1} parent=11 // pred_region
          %1069 = sst [smem:[#allocation10]] [#allocation135]
          %1070 = sst [smem:[#allocation11]] [#allocation134]
        $region264: #{tpu_custom_call.1} parent=11 // pred_fallthru
          _
        %1072 = shalt.err (0)
        %s1074 = sshll.u32 %s1066, 4
        %s1075 = int_to_ptr.vmem [resolvable:$true] %s1074
        %1077 = dma.hbm_to_vmem [thread:$0]  %s1065, 16, %s1075, %s982
        %s1078 = smul.addr %s189, 16
        %s1079 = scalar_lea.hbm %s1, %s1078
        %s1080 = scalar_lea.vmem [#allocation2], 63
        // Predicated region
        $region265: #{tpu_custom_call.1} parent=11 // pred_check
          _
        $region266: #{tpu_custom_call.1} parent=11 // pred_check_branch
          %1082 = sbr.rel target = $region268
        $region267: #{tpu_custom_call.1} parent=11 // pred_region
          %1083 = sst [smem:[#allocation10]] [#allocation137]
          %1084 = sst [smem:[#allocation11]] [#allocation136]
        $region268: #{tpu_custom_call.1} parent=11 // pred_fallthru
          _
        %1086 = shalt.err (0)
        %s1088 = sshll.u32 %s1080, 4
        %s1089 = int_to_ptr.vmem [resolvable:$true] %s1088
        %1091 = dma.hbm_to_vmem [thread:$0]  %s1079, 16, %s1089, %s982
        %s1092 = smul.u32 1, 1
        %s1093 = sshll.u32 %s1092, 4
        %1094 = dma.done [#allocation3], %s1093
        %s1095 = sshll.u32 %s1092, 4
        %1096 = dma.done [#allocation3], %s1095
        %s1097 = sshll.u32 %s1092, 4
        %1098 = dma.done [#allocation3], %s1097
        %s1099 = sshll.u32 %s1092, 4
        %1100 = dma.done [#allocation3], %s1099
        %s1101 = sshll.u32 %s1092, 4
        %1102 = dma.done [#allocation3], %s1101
        %s1103 = sshll.u32 %s1092, 4
        %1104 = dma.done [#allocation3], %s1103
        %s1105 = sshll.u32 %s1092, 4
        %1106 = dma.done [#allocation3], %s1105
        %s1107 = sshll.u32 %s1092, 4
        %1108 = dma.done [#allocation3], %s1107
        %v1109 = vld [vmem:[#allocation2] sm:$0xff]
        %v1110 = vadd.f32 %v1109, 0.0
        %s1111 = sshll.u32 %s1092, 4
        %1112 = dma.done %s304, %s1111
        %s1113 = sshll.u32 %s1092, 4
        %1114 = dma.done %s304, %s1113
        %s1115 = sshll.u32 %s1092, 4
        %1116 = dma.done %s304, %s1115
        %s1117 = sshll.u32 %s1092, 4
        %1118 = dma.done %s304, %s1117
        %s1119 = sshll.u32 %s1092, 4
        %1120 = dma.done %s304, %s1119
        %s1121 = sshll.u32 %s1092, 4
        %1122 = dma.done %s304, %s1121
        %s1123 = sshll.u32 %s1092, 4
        %1124 = dma.done %s304, %s1123
        %s1125 = sshll.u32 %s1092, 4
        %1126 = dma.done %s304, %s1125
        %v1127 = vld [vmem:[#allocation2 + $0x8] sm:$0xff]
        %v1128 = vadd.f32 %v1110, %v1127
        %s1129 = sshll.u32 %s1092, 4
        %1130 = dma.done %s417, %s1129
        %s1131 = sshll.u32 %s1092, 4
        %1132 = dma.done %s417, %s1131
        %s1133 = sshll.u32 %s1092, 4
        %1134 = dma.done %s417, %s1133
        %s1135 = sshll.u32 %s1092, 4
        %1136 = dma.done %s417, %s1135
        %s1137 = sshll.u32 %s1092, 4
        %1138 = dma.done %s417, %s1137
        %s1139 = sshll.u32 %s1092, 4
        %1140 = dma.done %s417, %s1139
        %s1141 = sshll.u32 %s1092, 4
        %1142 = dma.done %s417, %s1141
        %s1143 = sshll.u32 %s1092, 4
        %1144 = dma.done %s417, %s1143
        %v1145 = vld [vmem:[#allocation2 + $0x10] sm:$0xff]
        %v1146 = vadd.f32 %v1128, %v1145
        %s1147 = sshll.u32 %s1092, 4
        %1148 = dma.done %s530, %s1147
        %s1149 = sshll.u32 %s1092, 4
        %1150 = dma.done %s530, %s1149
        %s1151 = sshll.u32 %s1092, 4
        %1152 = dma.done %s530, %s1151
        %s1153 = sshll.u32 %s1092, 4
        %1154 = dma.done %s530, %s1153
        %s1155 = sshll.u32 %s1092, 4
        %1156 = dma.done %s530, %s1155
        %s1157 = sshll.u32 %s1092, 4
        %1158 = dma.done %s530, %s1157
        %s1159 = sshll.u32 %s1092, 4
        %1160 = dma.done %s530, %s1159
        %s1161 = sshll.u32 %s1092, 4
        %1162 = dma.done %s530, %s1161
        %v1163 = vld [vmem:[#allocation2 + $0x18] sm:$0xff]
        %v1164 = vadd.f32 %v1146, %v1163
        %s1165 = sshll.u32 %s1092, 4
        %1166 = dma.done %s643, %s1165
        %s1167 = sshll.u32 %s1092, 4
        %1168 = dma.done %s643, %s1167
        %s1169 = sshll.u32 %s1092, 4
        %1170 = dma.done %s643, %s1169
        %s1171 = sshll.u32 %s1092, 4
        %1172 = dma.done %s643, %s1171
        %s1173 = sshll.u32 %s1092, 4
        %1174 = dma.done %s643, %s1173
        %s1175 = sshll.u32 %s1092, 4
        %1176 = dma.done %s643, %s1175
        %s1177 = sshll.u32 %s1092, 4
        %1178 = dma.done %s643, %s1177
        %s1179 = sshll.u32 %s1092, 4
        %1180 = dma.done %s643, %s1179
        %v1181 = vld [vmem:[#allocation2 + $0x20] sm:$0xff]
        %v1182 = vadd.f32 %v1164, %v1181
        %s1183 = sshll.u32 %s1092, 4
        %1184 = dma.done %s756, %s1183
        %s1185 = sshll.u32 %s1092, 4
        %1186 = dma.done %s756, %s1185
        %s1187 = sshll.u32 %s1092, 4
        %1188 = dma.done %s756, %s1187
        %s1189 = sshll.u32 %s1092, 4
        %1190 = dma.done %s756, %s1189
        %s1191 = sshll.u32 %s1092, 4
        %1192 = dma.done %s756, %s1191
        %s1193 = sshll.u32 %s1092, 4
        %1194 = dma.done %s756, %s1193
        %s1195 = sshll.u32 %s1092, 4
        %1196 = dma.done %s756, %s1195
        %s1197 = sshll.u32 %s1092, 4
        %1198 = dma.done %s756, %s1197
        %v1199 = vld [vmem:[#allocation2 + $0x28] sm:$0xff]
        %v1200 = vadd.f32 %v1182, %v1199
        %s1201 = sshll.u32 %s1092, 4
        %1202 = dma.done %s869, %s1201
        %s1203 = sshll.u32 %s1092, 4
        %1204 = dma.done %s869, %s1203
        %s1205 = sshll.u32 %s1092, 4
        %1206 = dma.done %s869, %s1205
        %s1207 = sshll.u32 %s1092, 4
        %1208 = dma.done %s869, %s1207
        %s1209 = sshll.u32 %s1092, 4
        %1210 = dma.done %s869, %s1209
        %s1211 = sshll.u32 %s1092, 4
        %1212 = dma.done %s869, %s1211
        %s1213 = sshll.u32 %s1092, 4
        %1214 = dma.done %s869, %s1213
        %s1215 = sshll.u32 %s1092, 4
        %1216 = dma.done %s869, %s1215
        %v1217 = vld [vmem:[#allocation2 + $0x30] sm:$0xff]
        %v1218 = vadd.f32 %v1200, %v1217
        %s1219 = sshll.u32 %s1092, 4
        %1220 = dma.done %s982, %s1219
        %s1221 = sshll.u32 %s1092, 4
        %1222 = dma.done %s982, %s1221
        %s1223 = sshll.u32 %s1092, 4
        %1224 = dma.done %s982, %s1223
        %s1225 = sshll.u32 %s1092, 4
        %1226 = dma.done %s982, %s1225
        %s1227 = sshll.u32 %s1092, 4
        %1228 = dma.done %s982, %s1227
        %s1229 = sshll.u32 %s1092, 4
        %1230 = dma.done %s982, %s1229
        %s1231 = sshll.u32 %s1092, 4
        %1232 = dma.done %s982, %s1231
        %s1233 = sshll.u32 %s1092, 4
        %1234 = dma.done %s982, %s1233
        %v1235 = vld [vmem:[#allocation2 + $0x38] sm:$0xff]
        %v1236 = vadd.f32 %v1218, %v1235
        %v1237 = vmul.f32 %v1236, 0.125
        %1238 = vst [vmem:[%s53] sm:$0xff] %v1237
        %s1239 = sand.u32 %s26, 1
        %s1240 = scalar_lea.sflag [#allocation7], %s1239
        %s1241 = sand.u32 %s26, 1
        %s1242 = smul.addr %s1241, 8
        %s1243 = scalar_lea.vmem [#allocation6], %s1242
        // Predicated region
        $region269: #{tpu_custom_call.1} parent=11 // pred_check
          %p1244 = pneg %p32
        $region270: #{tpu_custom_call.1} parent=11 // pred_check_branch
          %1246 = sbr.rel (%p1244) target = $region272
        $region271: #{tpu_custom_call.1} parent=11 // pred_region
          %s1248 = ssub.s32 128, 128
          %1249 = vsyncadd %s1240, %s1248
          %s1250 = smul.addr %s17, 128
          %s1251 = scalar_lea.hbm %s2, %s1250
          %s1253 = sshll.u32 %s1243, 4
          %s1254 = int_to_ptr.vmem [resolvable:$true] %s1253
          %1256 = dma.vmem_to_hbm [thread:$0]  %s1254, 128, %s1251, %s1240
        $region272: #{tpu_custom_call.1} parent=11 // pred_fallthru
          _
      $region12: #{tpu_custom_call.1} parent=5 // pred_fallthru
        _
      %p1257 = scmp.le.s32.totalorder 1, %s17
      // Predicated region
      $region273: #{tpu_custom_call.1} parent=5 // pred_check
        %p1258 = pneg %p1257
      $region274: #{tpu_custom_call.1} parent=5 // pred_check_branch
        %1260 = sbr.rel (%p1258) target = $region276
      $region275: #{tpu_custom_call.1} parent=5 // pred_region
        %s1261 = ssub.s32 %s17, 1
        // Predicated region
        $region277: #{tpu_custom_call.1} parent=275 // pred_check
          %p1262 = pneg %p38
        $region278: #{tpu_custom_call.1} parent=275 // pred_check_branch
          %1264 = sbr.rel (%p1262) target = $region280
        $region279: #{tpu_custom_call.1} parent=275 // pred_region
          %s1265 = sand.u32 %s29, 1
          %s1266 = scalar_lea.sflag [#allocation7], %s1265
          %s1267 = sand.u32 %s29, 1
          %s1268 = smul.addr %s1267, 8
          %s1269 = scalar_lea.vmem [#allocation6], %s1268
          %1270 = dma.done %s1266, 128
        $region280: #{tpu_custom_call.1} parent=275 // pred_fallthru
          _
      $region276: #{tpu_custom_call.1} parent=5 // pred_fallthru
        _
    $region6: #{tpu_custom_call.1} parent=1 // loop_footer
      %s21 = sadd.s32 1, %s17
    $region7: #{tpu_custom_call.1} parent=1 // loop_footer_branch
      %16 = sbr.rel target = $region3
    $region8: #{tpu_custom_call.1} parent=1 // loop_exit
      _
    %1271 = vsyncpa [#allocation7], 1
    %s1272 = scalar_lea.sflag [#allocation7], 1
    %1273 = vsyncpa %s1272, 1
  %1274 = vsyncmov [#allocation3]
  %s1275 = vpop.sfrf %1274
  %p1276 = scmp.eq.s32.totalorder %s1275, 0
  %p1277 = pneg %p1276
  %1279 = shalt.err (%p1277)
  %s1280 = scalar_lea.sflag [#allocation3], 1
  %1281 = vsyncmov %s1280
  %s1282 = vpop.sfrf %1281
  %p1283 = scmp.eq.s32.totalorder %s1282, 0
  %p1284 = pneg %p1283
  %1286 = shalt.err (%p1284)
  %s1287 = scalar_lea.sflag [#allocation3], 2
  %1288 = vsyncmov %s1287
  %s1289 = vpop.sfrf %1288
  %p1290 = scmp.eq.s32.totalorder %s1289, 0
  %p1291 = pneg %p1290
  %1293 = shalt.err (%p1291)
  %s1294 = scalar_lea.sflag [#allocation3], 3
  %1295 = vsyncmov %s1294
  %s1296 = vpop.sfrf %1295
  %p1297 = scmp.eq.s32.totalorder %s1296, 0
  %p1298 = pneg %p1297
  %1300 = shalt.err (%p1298)
  %s1301 = scalar_lea.sflag [#allocation3], 4
  %1302 = vsyncmov %s1301
  %s1303 = vpop.sfrf %1302
  %p1304 = scmp.eq.s32.totalorder %s1303, 0
  %p1305 = pneg %p1304
  %1307 = shalt.err (%p1305)
  %s1308 = scalar_lea.sflag [#allocation3], 5
  %1309 = vsyncmov %s1308
  %s1310 = vpop.sfrf %1309
  %p1311 = scmp.eq.s32.totalorder %s1310, 0
  %p1312 = pneg %p1311
  %1314 = shalt.err (%p1312)
  %s1315 = scalar_lea.sflag [#allocation3], 6
  %1316 = vsyncmov %s1315
  %s1317 = vpop.sfrf %1316
  %p1318 = scmp.eq.s32.totalorder %s1317, 0
  %p1319 = pneg %p1318
  %1321 = shalt.err (%p1319)
  %s1322 = scalar_lea.sflag [#allocation3], 7
  %1323 = vsyncmov %s1322
  %s1324 = vpop.sfrf %1323
  %p1325 = scmp.eq.s32.totalorder %s1324, 0
  %p1326 = pneg %p1325
  %1328 = shalt.err (%p1326)

</llo_original>
